<compile_context>
chip_gen: v6e
topology: v6e:2x2x1
jax: 0.10.0
libtpu: 0.0.40
codegen_flags: <defaults>
</compile_context>

<pallas_src>
import functools

import jax
import jax.numpy as jnp
from jax.experimental import pallas as pl
from jax.experimental.pallas import tpu as pltpu

_LANE = 128


def _round_up(x, m):
    return ((x + m - 1) // m) * m


def _pad2(a, rows, cols):
    return jnp.pad(a, ((0, rows - a.shape[0]), (0, cols - a.shape[1])))


def _vmem_limit_bytes():
    """Per-generation scoped-VMEM limit: ~96 MiB on 128 MiB parts, 48 MiB on v7x."""
    cap = 64 * 1024 * 1024
    try:
        cap = int(pltpu.get_tpu_info().vmem_capacity_bytes)
    except Exception:
        pass
    return int(min(100 * 1024 * 1024, (cap * 3) // 4))


def _choose_agg_tile(n, f_max_pad, vmem_limit):
    """Square adjacency tile for the aggregation kernel (node dim is padded to it)."""
    target = 1024 if vmem_limit >= 90 * 1024 * 1024 else 512
    n_lane = _round_up(max(n, 1), _LANE)
    tm = min(target, n_lane)

    def footprint(t):
        # double-buffered inputs + output + f32 accumulator (bytes)
        return (2 * (t * t * 2)                      # adjacency tile (bf16)
                + 4 * (t * f_max_pad * 2)            # h_l + x row tile (bf16)
                + 2 * (f_max_pad * f_max_pad * 2)    # resident W_r (bf16)
                + 2 * (t * f_max_pad * 4)            # output tile (<= f32)
                + t * f_max_pad * 4)                 # accumulator scratch

    while tm > _LANE and footprint(tm) > vmem_limit // 2:
        tm //= 2
    # Keep >= 2 row tiles when the graph allows it so both v7x TensorCores get work.
    while tm > _LANE and -(-n_lane // tm) < 2:
        tm //= 2
    return max(_round_up(tm, _LANE), _LANE)


# ---------------------------------------------------------------------------
# Graph preprocessing (plain JAX, O(E) scatter + one bf16 N^2 materialization)
# ---------------------------------------------------------------------------
def build_graph_data(edge_index, n_pad, tile):
    """Edge-count adjacency (bf16), 1/in-degree, and block-CSR tile metadata."""
    src = edge_index[0].astype(jnp.int32)
    dst = edge_index[1].astype(jnp.int32)
    n_blk = n_pad // tile

    # A_cnt[i, j] = #edges (j -> i); integer counts are exact in bf16 up to 256.
    # TODO(synk): guard multigraphs with >256 parallel edges between one (dst, src) pair.
    # TODO(synk): int8 adjacency storage (counts <= 127) to halve the HBM stream on v5e/v6e.
    ones_bf16 = jnp.ones(src.shape, jnp.bfloat16)
    a_cnt = jnp.zeros((n_pad, n_pad), jnp.bfloat16).at[dst, src].add(ones_bf16)

    # In-degree via segment-sum over dst (the dense f32 N^2 matrix never exists).
    deg = jnp.zeros((n_pad,), jnp.float32).at[dst].add(1.0)
    inv_deg = (1.0 / jnp.maximum(deg, 1.0)).reshape(n_pad, 1)

    # Block-CSR metadata: which (tile x tile) adjacency blocks contain edges.
    blk_id = (dst // tile) * n_blk + (src // tile)
    blk_cnt = jnp.zeros((n_blk * n_blk,), jnp.int32).at[blk_id].add(1)
    blk_nz = (blk_cnt > 0).reshape(n_blk, n_blk)
    nnz = blk_nz.sum(axis=1).astype(jnp.int32)                          # (n_blk,)
    col_idx = jnp.broadcast_to(jnp.arange(n_blk, dtype=jnp.int32), (n_blk, n_blk))
    cols = jnp.sort(jnp.where(blk_nz, col_idx, n_blk), axis=1)          # empties last
    cols = jnp.where(cols >= n_blk, 0, cols).astype(jnp.int32)          # keep in range
    return a_cnt, inv_deg, cols.reshape(-1), nnz                        # cols is 1-D SMEM-friendly


# ---------------------------------------------------------------------------
# Kernel 1: projection    h_l = x @ W_l   (bf16 out)
# ---------------------------------------------------------------------------
def _proj_kernel(x_ref, w_ref, o_ref):
    o_ref[...] = jnp.dot(x_ref[...], w_ref[...],
                         preferred_element_type=jnp.float32).astype(o_ref.dtype)


def _project(h, w_l, tm, vmem_limit):
    n_pad, f_in_pad = h.shape
    fp = w_l.shape[1]
    return pl.pallas_call(
        _proj_kernel,
        out_shape=jax.ShapeDtypeStruct((n_pad, fp), jnp.bfloat16),
        grid=(n_pad // tm,),
        in_specs=[pl.BlockSpec((tm, f_in_pad), lambda i: (i, 0)),
                  pl.BlockSpec((f_in_pad, fp), lambda i: (0, 0))],
        out_specs=pl.BlockSpec((tm, fp), lambda i: (i, 0)),
        compiler_params=pltpu.CompilerParams(
            dimension_semantics=("parallel",),
            vmem_limit_bytes=vmem_limit),
    )(h, w_l)


# ---------------------------------------------------------------------------
# Kernel 2: mean aggregation + fused self term
#           out = inv_deg * (A_cnt @ h_l) + x @ W_r + b   (+ ReLU)
# ---------------------------------------------------------------------------
def _agg_kernel(cols_ref, nnz_ref, a_ref, hl_ref, x_ref, wr_ref, b_ref, dinv_ref,
                o_ref, acc_ref, *, relu):
    i = pl.program_id(0)
    k = pl.program_id(1)

    @pl.when(k == 0)
    def _():
        acc_ref[...] = jnp.zeros_like(acc_ref)

    # Only accumulate adjacency blocks that actually contain edges; padded reduction
    # steps re-point the DMA at the previous block (no copy) and skip the MXU here.
    @pl.when(k < nnz_ref[i])
    def _():
        acc_ref[...] += jnp.dot(a_ref[...], hl_ref[...],
                                preferred_element_type=jnp.float32)

    @pl.when(k == pl.num_programs(1) - 1)
    def _():
        self_term = jnp.dot(x_ref[...], wr_ref[...],
                            preferred_element_type=jnp.float32)
        out = acc_ref[...] * dinv_ref[...] + self_term + b_ref[...]
        if relu:
            out = jnp.maximum(out, 0.0)
        o_ref[...] = out.astype(o_ref.dtype)


def _aggregate(cols, nnz, a_cnt, h_l, h, w_r, b, inv_deg, tile, out_dtype,
               relu, vmem_limit):
    n_pad = a_cnt.shape[0]
    fp = h_l.shape[1]
    f_in_pad = h.shape[1]
    n_blk = n_pad // tile

    def _a_map(i, k, cols_ref, nnz_ref):
        # Clamp padded reduction steps to the last nonzero block of this row tile so
        # the block index repeats and the pipeline elides the adjacency / h_l DMA.
        kk = jnp.minimum(k, jnp.maximum(nnz_ref[i] - 1, 0))
        return (i, cols_ref[i * n_blk + kk])

    def _hl_map(i, k, cols_ref, nnz_ref):
        kk = jnp.minimum(k, jnp.maximum(nnz_ref[i] - 1, 0))
        return (cols_ref[i * n_blk + kk], 0)

    kernel = functools.partial(_agg_kernel, relu=relu)
    return pl.pallas_call(
        kernel,
        out_shape=jax.ShapeDtypeStruct((n_pad, fp), out_dtype),
        grid_spec=pltpu.PrefetchScalarGridSpec(
            num_scalar_prefetch=2,                    # cols (1-D) + nnz -> SMEM
            grid=(n_blk, n_blk),
            in_specs=[
                # TODO(synk): pipeline_mode=pl.Buffered(3) on the adjacency stream once
                # skipped steps expose DMA latency.
                pl.BlockSpec((tile, tile), _a_map),                          # A_cnt (bf16)
                pl.BlockSpec((tile, fp), _hl_map),                           # h_l   (bf16)
                pl.BlockSpec((tile, f_in_pad), lambda i, k, c, n: (i, 0)),   # x row (bf16)
                pl.BlockSpec((f_in_pad, fp), lambda i, k, c, n: (0, 0)),     # W_r resident
                pl.BlockSpec((1, fp), lambda i, k, c, n: (0, 0)),            # bias (f32)
                pl.BlockSpec((tile, 1), lambda i, k, c, n: (i, 0)),          # 1/deg (f32)
            ],
            out_specs=pl.BlockSpec((tile, fp), lambda i, k, c, n: (i, 0)),
            scratch_shapes=[pltpu.VMEM((tile, fp), jnp.float32)],
        ),
        compiler_params=pltpu.CompilerParams(
            dimension_semantics=("parallel", "arbitrary"),
            vmem_limit_bytes=vmem_limit),
    )(cols, nnz, a_cnt, h_l, h, w_r, b, inv_deg)


# ---------------------------------------------------------------------------
# Wrapper
# ---------------------------------------------------------------------------
def init_params(key, in_channels, hidden_channels, num_layers, out_channels):
    """Deterministic synthetic parameters matching SAGEConv shapes."""
    params = []
    f_in = in_channels
    for layer in range(num_layers):
        f_out = out_channels if layer == num_layers - 1 else hidden_channels
        key, k1, k2, k3 = jax.random.split(key, 4)
        scale = 1.0 / jnp.sqrt(jnp.float32(f_in))
        w_l = jax.random.normal(k1, (f_in, f_out), jnp.float32) * scale
        w_r = jax.random.normal(k2, (f_in, f_out), jnp.float32) * scale
        b = jax.random.normal(k3, (1, f_out), jnp.float32) * 0.01
        params.append((w_l, w_r, b))
        f_in = f_out
    return params


def sage_for_hetero_forward(x, edge_index, params):
    n, f_in = x.shape
    vmem_limit = _vmem_limit_bytes()

    feat_dims = [f_in] + [w_l.shape[1] for (w_l, _, _) in params]
    f_max_pad = max(_round_up(f, _LANE) for f in feat_dims)

    tile = _choose_agg_tile(n, f_max_pad, vmem_limit)
    n_pad = _round_up(n, tile)

    # Larger row tile for the memory-bound projection (decoupled from the agg tile).
    tm_proj = tile
    while tm_proj * 2 <= min(2048, n_pad) and n_pad % (tm_proj * 2) == 0:
        tm_proj *= 2

    a_cnt, inv_deg, cols, nnz = build_graph_data(edge_index, n_pad, tile)

    f_in_pad = _round_up(f_in, _LANE)
    h = _pad2(x, n_pad, f_in_pad).astype(jnp.bfloat16)     # bf16 inter-layer activations

    num_layers = len(params)
    out_channels = params[-1][0].shape[1]
    for li, (w_l, w_r, b) in enumerate(params):
        last = li == num_layers - 1
        f_out = w_l.shape[1]
        fp = _round_up(f_out, _LANE)
        w_l_p = _pad2(w_l, f_in_pad, fp).astype(jnp.bfloat16)
        w_r_p = _pad2(w_r, f_in_pad, fp).astype(jnp.bfloat16)
        b_p = _pad2(b, 1, fp).astype(jnp.float32)

        h_l = _project(h, w_l_p, tm_proj, vmem_limit)
        h = _aggregate(cols, nnz, a_cnt, h_l, h, w_r_p, b_p, inv_deg, tile,
                       jnp.float32 if last else jnp.bfloat16,
                       relu=not last, vmem_limit=vmem_limit)
        f_in_pad = fp

    return h[:n, :out_channels]


def _reference(x, edge_index, params):
    """Pure-JAX f32 reference of the SAGEConv stack (mean aggregation)."""
    n = x.shape[0]
    adj = jnp.zeros((n, n), jnp.float32).at[edge_index[1], edge_index[0]].add(1.0)
    a_mean = adj / jnp.maximum(adj.sum(axis=1, keepdims=True), 1.0)
    h = x
    for li, (w_l, w_r, b) in enumerate(params):
        h = a_mean @ h @ w_l + b + h @ w_r
        if li < len(params) - 1:
            h = jnp.maximum(h, 0.0)
    return h


if __name__ == "__main__":
    # Small synthetic graph (pads to a 2x2 adjacency-tile grid -> exercises block-CSR
    # index maps, the accumulator reduction and the megacore-parallel row axis).
    num_nodes = 300
    num_edges = 1200
    in_channels = 16
    hidden_channels = 32
    out_channels = 8
    num_layers = 3

    key = jax.random.PRNGKey(0)
    key, kx, ke = jax.random.split(key, 3)
    x = jax.random.normal(kx, (num_nodes, in_channels), jnp.float32)
    edge_index = jax.random.randint(ke, (2, num_edges), 0, num_nodes, jnp.int32)

    params = init_params(key, in_channels, hidden_channels, num_layers, out_channels)

    out = jax.jit(sage_for_hetero_forward)(x, edge_index, params)
    out = jax.block_until_ready(out)
    assert out.shape == (num_nodes, out_channels)

    ref = _reference(x, edge_index, params)
    max_err = float(jnp.max(jnp.abs(out - ref)))
    assert jnp.allclose(out, ref, rtol=1e-1, atol=1e-1), max_err

    print("KERNEL_OK")
</pallas_src>

<mosaic_0001>
module attributes {stable_mosaic.version = 11 : i64} {
  func.func private @main(%arg0: i32) attributes {dimension_semantics = [#tpu.dimension_semantics<core_parallel>], iteration_bounds = array<i64: 2>, tpu.core_type = #tpu.core_type<sc_scalar_subcore>, window_params = []} {
    return
  }
}

module attributes {stable_mosaic.version = 11 : i64} {
  func.func private @main(%arg0: i32) attributes {dimension_semantics = [#tpu.dimension_semantics<core_parallel>], iteration_bounds = array<i64: 2>, tpu.core_type = #tpu.core_type<sc_scalar_subcore>, window_params = []} {
    return
  }
}

module attributes {stable_mosaic.version = 11 : i64} {
  func.func @_proj_kernel(%arg0: i32, %arg1: memref<512x128xbf16, #tpu.memory_space<vmem>>, %arg2: memref<128x128xbf16, #tpu.memory_space<vmem>>, %arg3: memref<512x128xbf16, #tpu.memory_space<vmem>>) attributes {dimension_semantics = [#tpu.dimension_semantics<parallel>], iteration_bounds = array<i64: 1>, scalar_prefetch = 0 : i64, scratch_operands = 0 : i64, tpu.core_type = #tpu.core_type<tc>, window_params = [{transform_indices = @transform_0, window_bounds = array<i64: 512, 128>}, {pipeline_mode = #tpu.pipeline_mode<synchronous>, transform_indices = @transform_1, window_bounds = array<i64: 128, 128>}, {transform_indices = @transform_2, window_bounds = array<i64: 512, 128>}]} {
    %c0 = arith.constant 0 : index
    %c0_0 = arith.constant 0 : index
    %0 = vector.load %arg1[%c0, %c0_0] : memref<512x128xbf16, #tpu.memory_space<vmem>>, vector<512x128xbf16>
    %c0_1 = arith.constant 0 : index
    %c0_2 = arith.constant 0 : index
    %1 = vector.load %arg2[%c0_1, %c0_2] : memref<128x128xbf16, #tpu.memory_space<vmem>>, vector<128x128xbf16>
    %cst = arith.constant dense<0.000000e+00> : vector<512x128xf32>
    %2 = tpu.matmul %0, %1, %cst {dimension_numbers = #tpu.dot_dimension_numbers<[1], [0], [0], [1], [0, 0, 1, 1], [], []>} : vector<512x128xbf16>, vector<128x128xbf16>, vector<512x128xf32> -> vector<512x128xf32>
    %3 = arith.truncf %2 : vector<512x128xf32> to vector<512x128xbf16>
    %c0_3 = arith.constant 0 : index
    %c0_4 = arith.constant 0 : index
    %4 = vector.load %arg3[%c0_3, %c0_4] : memref<512x128xbf16, #tpu.memory_space<vmem>>, vector<512x128xbf16>
    tpu.vector_store %arg3[%c0_3, %c0_4], %3 {strides = array<i32>} : memref<512x128xbf16, #tpu.memory_space<vmem>>, vector<512x128xbf16>,
    return
  }
  func.func @transform_0(%arg0: i32) -> (i32, i32) {
    %c0_i32 = arith.constant 0 : i32
    %c0_i32_0 = arith.constant 0 : i32
    return %arg0, %c0_i32 : i32, i32
  }
  func.func @transform_1(%arg0: i32) -> (i32, i32) {
    %c0_i32 = arith.constant 0 : i32
    %c0_i32_0 = arith.constant 0 : i32
    %c0_i32_1 = arith.constant 0 : i32
    return %c0_i32, %c0_i32_0 : i32, i32
  }
  func.func @transform_2(%arg0: i32) -> (i32, i32) {
    %c0_i32 = arith.constant 0 : i32
    %c0_i32_0 = arith.constant 0 : i32
    return %arg0, %c0_i32 : i32, i32
  }
}

module attributes {stable_mosaic.version = 11 : i64} {
  func.func @_agg_kernel(%arg0: i32, %arg1: i32, %arg2: memref<4xi32, #tpu.memory_space<smem>>, %arg3: memref<2xi32, #tpu.memory_space<smem>>, %arg4: memref<256x256xbf16, #tpu.memory_space<vmem>>, %arg5: memref<256x128xbf16, #tpu.memory_space<vmem>>, %arg6: memref<256x128xbf16, #tpu.memory_space<vmem>>, %arg7: memref<128x128xbf16, #tpu.memory_space<vmem>>, %arg8: memref<1x128xf32, #tpu.memory_space<vmem>>, %arg9: memref<256x1xf32, #tpu.memory_space<vmem>>, %arg10: memref<256x128xbf16, #tpu.memory_space<vmem>>, %arg11: memref<256x128xf32, #tpu.memory_space<vmem>>) attributes {dimension_semantics = [#tpu.dimension_semantics<parallel>, #tpu.dimension_semantics<arbitrary>], iteration_bounds = array<i64: 2, 2>, scalar_prefetch = 2 : i64, scratch_operands = 1 : i64, tpu.core_type = #tpu.core_type<tc>, window_params = [{transform_indices = @transform_0, window_bounds = array<i64: 256, 256>}, {transform_indices = @transform_1, window_bounds = array<i64: 256, 128>}, {transform_indices = @transform_2, window_bounds = array<i64: 256, 128>}, {pipeline_mode = #tpu.pipeline_mode<synchronous>, transform_indices = @transform_3, window_bounds = array<i64: 128, 128>}, {pipeline_mode = #tpu.pipeline_mode<synchronous>, transform_indices = @transform_4, window_bounds = array<i64: 1, 128>}, {transform_indices = @transform_5, window_bounds = array<i64: 256, 1>}, {transform_indices = @transform_6, window_bounds = array<i64: 256, 128>}]} {
    %c0_i32 = arith.constant 0 : i32
    %0 = arith.cmpi eq, %arg1, %c0_i32 : i32
    %1 = arith.extui %0 : i1 to i32
    %c0_i32_0 = arith.constant 0 : i32
    %2 = arith.cmpi ne, %1, %c0_i32_0 : i32
    scf.if %2 {
      %cst = arith.constant 0.000000e+00 : f32
      %11 = vector.broadcast %cst : f32 to vector<256x128xf32>
      %c0 = arith.constant 0 : index
      %c0_3 = arith.constant 0 : index
      %12 = vector.load %arg11[%c0, %c0_3] : memref<256x128xf32, #tpu.memory_space<vmem>>, vector<256x128xf32>
      tpu.vector_store %arg11[%c0, %c0_3], %11 {strides = array<i32>} : memref<256x128xf32, #tpu.memory_space<vmem>>, vector<256x128xf32>,
    } else {
    }
    %3 = arith.index_cast %arg0 : i32 to index
    %4 = memref.load %arg3[%3] : memref<2xi32, #tpu.memory_space<smem>>
    %5 = arith.cmpi slt, %arg1, %4 : i32
    %6 = arith.extui %5 : i1 to i32
    %c0_i32_1 = arith.constant 0 : i32
    %7 = arith.cmpi ne, %6, %c0_i32_1 : i32
    scf.if %7 {
      %c0 = arith.constant 0 : index
      %c0_3 = arith.constant 0 : index
      %11 = vector.load %arg11[%c0, %c0_3] : memref<256x128xf32, #tpu.memory_space<vmem>>, vector<256x128xf32>
      %c0_4 = arith.constant 0 : index
      %c0_5 = arith.constant 0 : index
      %12 = vector.load %arg4[%c0_4, %c0_5] : memref<256x256xbf16, #tpu.memory_space<vmem>>, vector<256x256xbf16>
      %c0_6 = arith.constant 0 : index
      %c0_7 = arith.constant 0 : index
      %13 = vector.load %arg5[%c0_6, %c0_7] : memref<256x128xbf16, #tpu.memory_space<vmem>>, vector<256x128xbf16>
      %cst = arith.constant dense<0.000000e+00> : vector<256x128xf32>
      %14 = tpu.matmul %12, %13, %cst {dimension_numbers = #tpu.dot_dimension_numbers<[1], [0], [0], [1], [0, 0, 1, 1], [], []>} : vector<256x256xbf16>, vector<256x128xbf16>, vector<256x128xf32> -> vector<256x128xf32>
      %15 = arith.addf %11, %14 : vector<256x128xf32>
      %c0_8 = arith.constant 0 : index
      %c0_9 = arith.constant 0 : index
      %16 = vector.load %arg11[%c0_8, %c0_9] : memref<256x128xf32, #tpu.memory_space<vmem>>, vector<256x128xf32>
      tpu.vector_store %arg11[%c0_8, %c0_9], %15 {strides = array<i32>} : memref<256x128xf32, #tpu.memory_space<vmem>>, vector<256x128xf32>,
    } else {
    }
    %c1_i32 = arith.constant 1 : i32
    %8 = arith.cmpi eq, %arg1, %c1_i32 : i32
    %9 = arith.extui %8 : i1 to i32
    %c0_i32_2 = arith.constant 0 : i32
    %10 = arith.cmpi ne, %9, %c0_i32_2 : i32
    scf.if %10 {
      %c0 = arith.constant 0 : index
      %c0_3 = arith.constant 0 : index
      %11 = vector.load %arg6[%c0, %c0_3] : memref<256x128xbf16, #tpu.memory_space<vmem>>, vector<256x128xbf16>
      %c0_4 = arith.constant 0 : index
      %c0_5 = arith.constant 0 : index
      %12 = vector.load %arg7[%c0_4, %c0_5] : memref<128x128xbf16, #tpu.memory_space<vmem>>, vector<128x128xbf16>
      %cst = arith.constant dense<0.000000e+00> : vector<256x128xf32>
      %13 = tpu.matmul %11, %12, %cst {dimension_numbers = #tpu.dot_dimension_numbers<[1], [0], [0], [1], [0, 0, 1, 1], [], []>} : vector<256x128xbf16>, vector<128x128xbf16>, vector<256x128xf32> -> vector<256x128xf32>
      %c0_6 = arith.constant 0 : index
      %c0_7 = arith.constant 0 : index
      %14 = vector.load %arg11[%c0_6, %c0_7] : memref<256x128xf32, #tpu.memory_space<vmem>>, vector<256x128xf32>
      %c0_8 = arith.constant 0 : index
      %c0_9 = arith.constant 0 : index
      %15 = vector.load %arg9[%c0_8, %c0_9] : memref<256x1xf32, #tpu.memory_space<vmem>>, vector<256x1xf32>
      %16 = vector.broadcast %15 : vector<256x1xf32> to vector<256x128xf32>
      %17 = arith.mulf %14, %16 : vector<256x128xf32>
      %18 = arith.addf %17, %13 : vector<256x128xf32>
      %c0_10 = arith.constant 0 : index
      %c0_11 = arith.constant 0 : index
      %19 = vector.load %arg8[%c0_10, %c0_11] : memref<1x128xf32, #tpu.memory_space<vmem>>, vector<1x128xf32>
      %20 = vector.broadcast %19 : vector<1x128xf32> to vector<256x128xf32>
      %21 = arith.addf %18, %20 : vector<256x128xf32>
      %cst_12 = arith.constant 0.000000e+00 : f32
      %22 = vector.broadcast %cst_12 : f32 to vector<256x128xf32>
      %23 = arith.maximumf %21, %22 : vector<256x128xf32>
      %24 = arith.truncf %23 : vector<256x128xf32> to vector<256x128xbf16>
      %c0_13 = arith.constant 0 : index
      %c0_14 = arith.constant 0 : index
      %25 = vector.load %arg10[%c0_13, %c0_14] : memref<256x128xbf16, #tpu.memory_space<vmem>>, vector<256x128xbf16>
      tpu.vector_store %arg10[%c0_13, %c0_14], %24 {strides = array<i32>} : memref<256x128xbf16, #tpu.memory_space<vmem>>, vector<256x128xbf16>,
    } else {
    }
    return
  }
  func.func @transform_0(%arg0: i32, %arg1: i32, %arg2: memref<4xi32, #tpu.memory_space<smem>>, %arg3: memref<2xi32, #tpu.memory_space<smem>>) -> (i32, i32) {
    %0 = arith.index_cast %arg0 : i32 to index
    %1 = memref.load %arg3[%0] : memref<2xi32, #tpu.memory_space<smem>>
    %c1_i32 = arith.constant 1 : i32
    %2 = arith.subi %1, %c1_i32 : i32
    %c0_i32 = arith.constant 0 : i32
    %3 = arith.maxsi %2, %c0_i32 : i32
    %4 = arith.minsi %arg1, %3 : i32
    %c2_i32 = arith.constant 2 : i32
    %5 = arith.muli %arg0, %c2_i32 : i32
    %6 = arith.addi %5, %4 : i32
    %7 = arith.index_cast %6 : i32 to index
    %8 = memref.load %arg2[%7] : memref<4xi32, #tpu.memory_space<smem>>
    %c0_i32_0 = arith.constant 0 : i32
    return %arg0, %8 : i32, i32
  }
  func.func @transform_1(%arg0: i32, %arg1: i32, %arg2: memref<4xi32, #tpu.memory_space<smem>>, %arg3: memref<2xi32, #tpu.memory_space<smem>>) -> (i32, i32) {
    %0 = arith.index_cast %arg0 : i32 to index
    %1 = memref.load %arg3[%0] : memref<2xi32, #tpu.memory_space<smem>>
    %c1_i32 = arith.constant 1 : i32
    %2 = arith.subi %1, %c1_i32 : i32
    %c0_i32 = arith.constant 0 : i32
    %3 = arith.maxsi %2, %c0_i32 : i32
    %4 = arith.minsi %arg1, %3 : i32
    %c2_i32 = arith.constant 2 : i32
    %5 = arith.muli %arg0, %c2_i32 : i32
    %6 = arith.addi %5, %4 : i32
    %7 = arith.index_cast %6 : i32 to index
    %8 = memref.load %arg2[%7] : memref<4xi32, #tpu.memory_space<smem>>
    %c0_i32_0 = arith.constant 0 : i32
    %c0_i32_1 = arith.constant 0 : i32
    return %8, %c0_i32_0 : i32, i32
  }
  func.func @transform_2(%arg0: i32, %arg1: i32, %arg2: memref<4xi32, #tpu.memory_space<smem>>, %arg3: memref<2xi32, #tpu.memory_space<smem>>) -> (i32, i32) {
    %c0_i32 = arith.constant 0 : i32
    %c0_i32_0 = arith.constant 0 : i32
    return %arg0, %c0_i32 : i32, i32
  }
  func.func @transform_3(%arg0: i32, %arg1: i32, %arg2: memref<4xi32, #tpu.memory_space<smem>>, %arg3: memref<2xi32, #tpu.memory_space<smem>>) -> (i32, i32) {
    %c0_i32 = arith.constant 0 : i32
    %c0_i32_0 = arith.constant 0 : i32
    %c0_i32_1 = arith.constant 0 : i32
    return %c0_i32, %c0_i32_0 : i32, i32
  }
  func.func @transform_4(%arg0: i32, %arg1: i32, %arg2: memref<4xi32, #tpu.memory_space<smem>>, %arg3: memref<2xi32, #tpu.memory_space<smem>>) -> (i32, i32) {
    %c0_i32 = arith.constant 0 : i32
    %c0_i32_0 = arith.constant 0 : i32
    %c0_i32_1 = arith.constant 0 : i32
    return %c0_i32, %c0_i32_0 : i32, i32
  }
  func.func @transform_5(%arg0: i32, %arg1: i32, %arg2: memref<4xi32, #tpu.memory_space<smem>>, %arg3: memref<2xi32, #tpu.memory_space<smem>>) -> (i32, i32) {
    %c0_i32 = arith.constant 0 : i32
    %c0_i32_0 = arith.constant 0 : i32
    return %arg0, %c0_i32 : i32, i32
  }
  func.func @transform_6(%arg0: i32, %arg1: i32, %arg2: memref<4xi32, #tpu.memory_space<smem>>, %arg3: memref<2xi32, #tpu.memory_space<smem>>) -> (i32, i32) {
    %c0_i32 = arith.constant 0 : i32
    %c0_i32_0 = arith.constant 0 : i32
    return %arg0, %c0_i32 : i32, i32
  }
}

module attributes {stable_mosaic.version = 11 : i64} {
  func.func @_agg_kernel(%arg0: i32, %arg1: i32, %arg2: memref<4xi32, #tpu.memory_space<smem>>, %arg3: memref<2xi32, #tpu.memory_space<smem>>, %arg4: memref<256x256xbf16, #tpu.memory_space<vmem>>, %arg5: memref<256x128xbf16, #tpu.memory_space<vmem>>, %arg6: memref<256x128xbf16, #tpu.memory_space<vmem>>, %arg7: memref<128x128xbf16, #tpu.memory_space<vmem>>, %arg8: memref<1x128xf32, #tpu.memory_space<vmem>>, %arg9: memref<256x1xf32, #tpu.memory_space<vmem>>, %arg10: memref<256x128xf32, #tpu.memory_space<vmem>>, %arg11: memref<256x128xf32, #tpu.memory_space<vmem>>) attributes {dimension_semantics = [#tpu.dimension_semantics<parallel>, #tpu.dimension_semantics<arbitrary>], iteration_bounds = array<i64: 2, 2>, scalar_prefetch = 2 : i64, scratch_operands = 1 : i64, tpu.core_type = #tpu.core_type<tc>, window_params = [{transform_indices = @transform_0, window_bounds = array<i64: 256, 256>}, {transform_indices = @transform_1, window_bounds = array<i64: 256, 128>}, {transform_indices = @transform_2, window_bounds = array<i64: 256, 128>}, {pipeline_mode = #tpu.pipeline_mode<synchronous>, transform_indices = @transform_3, window_bounds = array<i64: 128, 128>}, {pipeline_mode = #tpu.pipeline_mode<synchronous>, transform_indices = @transform_4, window_bounds = array<i64: 1, 128>}, {transform_indices = @transform_5, window_bounds = array<i64: 256, 1>}, {transform_indices = @transform_6, window_bounds = array<i64: 256, 128>}]} {
    %c0_i32 = arith.constant 0 : i32
    %0 = arith.cmpi eq, %arg1, %c0_i32 : i32
    %1 = arith.extui %0 : i1 to i32
    %c0_i32_0 = arith.constant 0 : i32
    %2 = arith.cmpi ne, %1, %c0_i32_0 : i32
    scf.if %2 {
      %cst = arith.constant 0.000000e+00 : f32
      %11 = vector.broadcast %cst : f32 to vector<256x128xf32>
      %c0 = arith.constant 0 : index
      %c0_3 = arith.constant 0 : index
      %12 = vector.load %arg11[%c0, %c0_3] : memref<256x128xf32, #tpu.memory_space<vmem>>, vector<256x128xf32>
      tpu.vector_store %arg11[%c0, %c0_3], %11 {strides = array<i32>} : memref<256x128xf32, #tpu.memory_space<vmem>>, vector<256x128xf32>,
    } else {
    }
    %3 = arith.index_cast %arg0 : i32 to index
    %4 = memref.load %arg3[%3] : memref<2xi32, #tpu.memory_space<smem>>
    %5 = arith.cmpi slt, %arg1, %4 : i32
    %6 = arith.extui %5 : i1 to i32
    %c0_i32_1 = arith.constant 0 : i32
    %7 = arith.cmpi ne, %6, %c0_i32_1 : i32
    scf.if %7 {
      %c0 = arith.constant 0 : index
      %c0_3 = arith.constant 0 : index
      %11 = vector.load %arg11[%c0, %c0_3] : memref<256x128xf32, #tpu.memory_space<vmem>>, vector<256x128xf32>
      %c0_4 = arith.constant 0 : index
      %c0_5 = arith.constant 0 : index
      %12 = vector.load %arg4[%c0_4, %c0_5] : memref<256x256xbf16, #tpu.memory_space<vmem>>, vector<256x256xbf16>
      %c0_6 = arith.constant 0 : index
      %c0_7 = arith.constant 0 : index
      %13 = vector.load %arg5[%c0_6, %c0_7] : memref<256x128xbf16, #tpu.memory_space<vmem>>, vector<256x128xbf16>
      %cst = arith.constant dense<0.000000e+00> : vector<256x128xf32>
      %14 = tpu.matmul %12, %13, %cst {dimension_numbers = #tpu.dot_dimension_numbers<[1], [0], [0], [1], [0, 0, 1, 1], [], []>} : vector<256x256xbf16>, vector<256x128xbf16>, vector<256x128xf32> -> vector<256x128xf32>
      %15 = arith.addf %11, %14 : vector<256x128xf32>
      %c0_8 = arith.constant 0 : index
      %c0_9 = arith.constant 0 : index
      %16 = vector.load %arg11[%c0_8, %c0_9] : memref<256x128xf32, #tpu.memory_space<vmem>>, vector<256x128xf32>
      tpu.vector_store %arg11[%c0_8, %c0_9], %15 {strides = array<i32>} : memref<256x128xf32, #tpu.memory_space<vmem>>, vector<256x128xf32>,
    } else {
    }
    %c1_i32 = arith.constant 1 : i32
    %8 = arith.cmpi eq, %arg1, %c1_i32 : i32
    %9 = arith.extui %8 : i1 to i32
    %c0_i32_2 = arith.constant 0 : i32
    %10 = arith.cmpi ne, %9, %c0_i32_2 : i32
    scf.if %10 {
      %c0 = arith.constant 0 : index
      %c0_3 = arith.constant 0 : index
      %11 = vector.load %arg6[%c0, %c0_3] : memref<256x128xbf16, #tpu.memory_space<vmem>>, vector<256x128xbf16>
      %c0_4 = arith.constant 0 : index
      %c0_5 = arith.constant 0 : index
      %12 = vector.load %arg7[%c0_4, %c0_5] : memref<128x128xbf16, #tpu.memory_space<vmem>>, vector<128x128xbf16>
      %cst = arith.constant dense<0.000000e+00> : vector<256x128xf32>
      %13 = tpu.matmul %11, %12, %cst {dimension_numbers = #tpu.dot_dimension_numbers<[1], [0], [0], [1], [0, 0, 1, 1], [], []>} : vector<256x128xbf16>, vector<128x128xbf16>, vector<256x128xf32> -> vector<256x128xf32>
      %c0_6 = arith.constant 0 : index
      %c0_7 = arith.constant 0 : index
      %14 = vector.load %arg11[%c0_6, %c0_7] : memref<256x128xf32, #tpu.memory_space<vmem>>, vector<256x128xf32>
      %c0_8 = arith.constant 0 : index
      %c0_9 = arith.constant 0 : index
      %15 = vector.load %arg9[%c0_8, %c0_9] : memref<256x1xf32, #tpu.memory_space<vmem>>, vector<256x1xf32>
      %16 = vector.broadcast %15 : vector<256x1xf32> to vector<256x128xf32>
      %17 = arith.mulf %14, %16 : vector<256x128xf32>
      %18 = arith.addf %17, %13 : vector<256x128xf32>
      %c0_10 = arith.constant 0 : index
      %c0_11 = arith.constant 0 : index
      %19 = vector.load %arg8[%c0_10, %c0_11] : memref<1x128xf32, #tpu.memory_space<vmem>>, vector<1x128xf32>
      %20 = vector.broadcast %19 : vector<1x128xf32> to vector<256x128xf32>
      %21 = arith.addf %18, %20 : vector<256x128xf32>
      %c0_12 = arith.constant 0 : index
      %c0_13 = arith.constant 0 : index
      %22 = vector.load %arg10[%c0_12, %c0_13] : memref<256x128xf32, #tpu.memory_space<vmem>>, vector<256x128xf32>
      tpu.vector_store %arg10[%c0_12, %c0_13], %21 {strides = array<i32>} : memref<256x128xf32, #tpu.memory_space<vmem>>, vector<256x128xf32>,
    } else {
    }
    return
  }
  func.func @transform_0(%arg0: i32, %arg1: i32, %arg2: memref<4xi32, #tpu.memory_space<smem>>, %arg3: memref<2xi32, #tpu.memory_space<smem>>) -> (i32, i32) {
    %0 = arith.index_cast %arg0 : i32 to index
    %1 = memref.load %arg3[%0] : memref<2xi32, #tpu.memory_space<smem>>
    %c1_i32 = arith.constant 1 : i32
    %2 = arith.subi %1, %c1_i32 : i32
    %c0_i32 = arith.constant 0 : i32
    %3 = arith.maxsi %2, %c0_i32 : i32
    %4 = arith.minsi %arg1, %3 : i32
    %c2_i32 = arith.constant 2 : i32
    %5 = arith.muli %arg0, %c2_i32 : i32
    %6 = arith.addi %5, %4 : i32
    %7 = arith.index_cast %6 : i32 to index
    %8 = memref.load %arg2[%7] : memref<4xi32, #tpu.memory_space<smem>>
    %c0_i32_0 = arith.constant 0 : i32
    return %arg0, %8 : i32, i32
  }
  func.func @transform_1(%arg0: i32, %arg1: i32, %arg2: memref<4xi32, #tpu.memory_space<smem>>, %arg3: memref<2xi32, #tpu.memory_space<smem>>) -> (i32, i32) {
    %0 = arith.index_cast %arg0 : i32 to index
    %1 = memref.load %arg3[%0] : memref<2xi32, #tpu.memory_space<smem>>
    %c1_i32 = arith.constant 1 : i32
    %2 = arith.subi %1, %c1_i32 : i32
    %c0_i32 = arith.constant 0 : i32
    %3 = arith.maxsi %2, %c0_i32 : i32
    %4 = arith.minsi %arg1, %3 : i32
    %c2_i32 = arith.constant 2 : i32
    %5 = arith.muli %arg0, %c2_i32 : i32
    %6 = arith.addi %5, %4 : i32
    %7 = arith.index_cast %6 : i32 to index
    %8 = memref.load %arg2[%7] : memref<4xi32, #tpu.memory_space<smem>>
    %c0_i32_0 = arith.constant 0 : i32
    %c0_i32_1 = arith.constant 0 : i32
    return %8, %c0_i32_0 : i32, i32
  }
  func.func @transform_2(%arg0: i32, %arg1: i32, %arg2: memref<4xi32, #tpu.memory_space<smem>>, %arg3: memref<2xi32, #tpu.memory_space<smem>>) -> (i32, i32) {
    %c0_i32 = arith.constant 0 : i32
    %c0_i32_0 = arith.constant 0 : i32
    return %arg0, %c0_i32 : i32, i32
  }
  func.func @transform_3(%arg0: i32, %arg1: i32, %arg2: memref<4xi32, #tpu.memory_space<smem>>, %arg3: memref<2xi32, #tpu.memory_space<smem>>) -> (i32, i32) {
    %c0_i32 = arith.constant 0 : i32
    %c0_i32_0 = arith.constant 0 : i32
    %c0_i32_1 = arith.constant 0 : i32
    return %c0_i32, %c0_i32_0 : i32, i32
  }
  func.func @transform_4(%arg0: i32, %arg1: i32, %arg2: memref<4xi32, #tpu.memory_space<smem>>, %arg3: memref<2xi32, #tpu.memory_space<smem>>) -> (i32, i32) {
    %c0_i32 = arith.constant 0 : i32
    %c0_i32_0 = arith.constant 0 : i32
    %c0_i32_1 = arith.constant 0 : i32
    return %c0_i32, %c0_i32_0 : i32, i32
  }
  func.func @transform_5(%arg0: i32, %arg1: i32, %arg2: memref<4xi32, #tpu.memory_space<smem>>, %arg3: memref<2xi32, #tpu.memory_space<smem>>) -> (i32, i32) {
    %c0_i32 = arith.constant 0 : i32
    %c0_i32_0 = arith.constant 0 : i32
    return %arg0, %c0_i32 : i32, i32
  }
  func.func @transform_6(%arg0: i32, %arg1: i32, %arg2: memref<4xi32, #tpu.memory_space<smem>>, %arg3: memref<2xi32, #tpu.memory_space<smem>>) -> (i32, i32) {
    %c0_i32 = arith.constant 0 : i32
    %c0_i32_0 = arith.constant 0 : i32
    return %arg0, %c0_i32 : i32, i32
  }
}

</mosaic_0001>

<llo_original>
// kernel: sage_for_hetero_forward.6
$region0: #{sage_for_hetero_forward.6}
  #allocation0 [shape = 'u32[]', space=smem, size = 0x4, offset = 0x4, fixed_abs, tag = 'smem constant byte address 0x4 - core index']
  #allocation1 [shape = 'u32[144,128]{1,0:T(1,128)}', space=vmem, size = 0x12000, scoped, tag = 'internal scratch']
  %s0 = inlined_call_operand.vmem [shape: bf16[512,128], index: 0, kind: input, shape index: {}]
  %s1 = inlined_call_operand.vmem [shape: bf16[128,128], index: 1, kind: input, shape index: {}]
  %s2 = inlined_call_operand.vmem [shape: bf16[512,128], index: 2, kind: output, shape index: {}]
  %s3 = sld [smem:[#allocation0]]
  $region18: #{sage_for_hetero_forward.6} parent=0
    _
  %s5 = ssub.s32 1, %s3
  %s6 = scalar_select 0, %s5, %s3
  // Predicated region
  $region2: #{sage_for_hetero_forward.6} parent=0 // pred_check
    _
  $region3: #{sage_for_hetero_forward.6} parent=0 // pred_check_branch
    %8 = sbr.rel (0) target = $region5
  $region4: #{sage_for_hetero_forward.6} parent=0 // pred_region
    _
  $region5: #{sage_for_hetero_forward.6} parent=0 // pred_fallthru
    _
  // Predicated region
  $region6: #{sage_for_hetero_forward.6} parent=0 // pred_check
    _
  $region7: #{sage_for_hetero_forward.6} parent=0 // pred_check_branch
    %10 = sbr.rel (0) target = $region9
  $region8: #{sage_for_hetero_forward.6} parent=0 // pred_region
    _
  $region9: #{sage_for_hetero_forward.6} parent=0 // pred_fallthru
    _
  %v12 = vld [vmem:[%s0] sm:$0xf]
  %v13 = vld [vmem:[%s0 + $0x4] sm:$0xf]
  %v14 = vld [vmem:[%s0 + $0x8] sm:$0xf]
  %v15 = vld [vmem:[%s0 + $0xc] sm:$0xf]
  %v16 = vld [vmem:[%s0 + $0x10] sm:$0xf]
  %v17 = vld [vmem:[%s0 + $0x14] sm:$0xf]
  %v18 = vld [vmem:[%s0 + $0x18] sm:$0xf]
  %v19 = vld [vmem:[%s0 + $0x1c] sm:$0xf]
  %v20 = vld [vmem:[%s0 + $0x20] sm:$0xf]
  %v21 = vld [vmem:[%s0 + $0x24] sm:$0xf]
  %v22 = vld [vmem:[%s0 + $0x28] sm:$0xf]
  %v23 = vld [vmem:[%s0 + $0x2c] sm:$0xf]
  %v24 = vld [vmem:[%s0 + $0x30] sm:$0xf]
  %v25 = vld [vmem:[%s0 + $0x34] sm:$0xf]
  %v26 = vld [vmem:[%s0 + $0x38] sm:$0xf]
  %v27 = vld [vmem:[%s0 + $0x3c] sm:$0xf]
  %v28 = vld [vmem:[%s0 + $0x40] sm:$0xf]
  %v29 = vld [vmem:[%s0 + $0x44] sm:$0xf]
  %v30 = vld [vmem:[%s0 + $0x48] sm:$0xf]
  %v31 = vld [vmem:[%s0 + $0x4c] sm:$0xf]
  %v32 = vld [vmem:[%s0 + $0x50] sm:$0xf]
  %v33 = vld [vmem:[%s0 + $0x54] sm:$0xf]
  %v34 = vld [vmem:[%s0 + $0x58] sm:$0xf]
  %v35 = vld [vmem:[%s0 + $0x5c] sm:$0xf]
  %v36 = vld [vmem:[%s0 + $0x60] sm:$0xf]
  %v37 = vld [vmem:[%s0 + $0x64] sm:$0xf]
  %v38 = vld [vmem:[%s0 + $0x68] sm:$0xf]
  %v39 = vld [vmem:[%s0 + $0x6c] sm:$0xf]
  %v40 = vld [vmem:[%s0 + $0x70] sm:$0xf]
  %v41 = vld [vmem:[%s0 + $0x74] sm:$0xf]
  %v42 = vld [vmem:[%s0 + $0x78] sm:$0xf]
  %v43 = vld [vmem:[%s0 + $0x7c] sm:$0xf]
  %v44 = vld [vmem:[%s0 + $0x80] sm:$0xf]
  %v45 = vld [vmem:[%s0 + $0x84] sm:$0xf]
  %v46 = vld [vmem:[%s0 + $0x88] sm:$0xf]
  %v47 = vld [vmem:[%s0 + $0x8c] sm:$0xf]
  %v48 = vld [vmem:[%s0 + $0x90] sm:$0xf]
  %v49 = vld [vmem:[%s0 + $0x94] sm:$0xf]
  %v50 = vld [vmem:[%s0 + $0x98] sm:$0xf]
  %v51 = vld [vmem:[%s0 + $0x9c] sm:$0xf]
  %v52 = vld [vmem:[%s0 + $0xa0] sm:$0xf]
  %v53 = vld [vmem:[%s0 + $0xa4] sm:$0xf]
  %v54 = vld [vmem:[%s0 + $0xa8] sm:$0xf]
  %v55 = vld [vmem:[%s0 + $0xac] sm:$0xf]
  %v56 = vld [vmem:[%s0 + $0xb0] sm:$0xf]
  %v57 = vld [vmem:[%s0 + $0xb4] sm:$0xf]
  %v58 = vld [vmem:[%s0 + $0xb8] sm:$0xf]
  %v59 = vld [vmem:[%s0 + $0xbc] sm:$0xf]
  %v60 = vld [vmem:[%s0 + $0xc0] sm:$0xf]
  %v61 = vld [vmem:[%s0 + $0xc4] sm:$0xf]
  %v62 = vld [vmem:[%s0 + $0xc8] sm:$0xf]
  %v63 = vld [vmem:[%s0 + $0xcc] sm:$0xf]
  %v64 = vld [vmem:[%s0 + $0xd0] sm:$0xf]
  %v65 = vld [vmem:[%s0 + $0xd4] sm:$0xf]
  %v66 = vld [vmem:[%s0 + $0xd8] sm:$0xf]
  %v67 = vld [vmem:[%s0 + $0xdc] sm:$0xf]
  %v68 = vld [vmem:[%s0 + $0xe0] sm:$0xf]
  %v69 = vld [vmem:[%s0 + $0xe4] sm:$0xf]
  %v70 = vld [vmem:[%s0 + $0xe8] sm:$0xf]
  %v71 = vld [vmem:[%s0 + $0xec] sm:$0xf]
  %v72 = vld [vmem:[%s0 + $0xf0] sm:$0xf]
  %v73 = vld [vmem:[%s0 + $0xf4] sm:$0xf]
  %v74 = vld [vmem:[%s0 + $0xf8] sm:$0xf]
  %v75 = vld [vmem:[%s0 + $0xfc] sm:$0xf]
  %v76 = vld [vmem:[%s1] sm:$0xf]
  %v77 = vld [vmem:[%s1 + $0x4] sm:$0xf]
  %v78 = vld [vmem:[%s1 + $0x8] sm:$0xf]
  %v79 = vld [vmem:[%s1 + $0xc] sm:$0xf]
  %v80 = vld [vmem:[%s1 + $0x10] sm:$0xf]
  %v81 = vld [vmem:[%s1 + $0x14] sm:$0xf]
  %v82 = vld [vmem:[%s1 + $0x18] sm:$0xf]
  %v83 = vld [vmem:[%s1 + $0x1c] sm:$0xf]
  %v84 = vld [vmem:[%s1 + $0x20] sm:$0xf]
  %v85 = vld [vmem:[%s1 + $0x24] sm:$0xf]
  %v86 = vld [vmem:[%s1 + $0x28] sm:$0xf]
  %v87 = vld [vmem:[%s1 + $0x2c] sm:$0xf]
  %v88 = vld [vmem:[%s1 + $0x30] sm:$0xf]
  %v89 = vld [vmem:[%s1 + $0x34] sm:$0xf]
  %v90 = vld [vmem:[%s1 + $0x38] sm:$0xf]
  %v91 = vld [vmem:[%s1 + $0x3c] sm:$0xf]
  %v156 = vunpack.c.l.b16 %v12
  %v157 = vunpack.c.l.b16 %v13
  %v158 = vunpack.c.l.b16 %v14
  %v159 = vunpack.c.l.b16 %v15
  %v160 = vunpack.c.l.b16 %v16
  %v161 = vunpack.c.l.b16 %v17
  %v162 = vunpack.c.l.b16 %v18
  %v163 = vunpack.c.l.b16 %v19
  %v164 = vunpack.c.l.b16 %v20
  %v165 = vunpack.c.l.b16 %v21
  %v166 = vunpack.c.l.b16 %v22
  %v167 = vunpack.c.l.b16 %v23
  %v168 = vunpack.c.l.b16 %v24
  %v169 = vunpack.c.l.b16 %v25
  %v170 = vunpack.c.l.b16 %v26
  %v171 = vunpack.c.l.b16 %v27
  %v172 = vunpack.c.l.b16 %v28
  %v173 = vunpack.c.l.b16 %v29
  %v174 = vunpack.c.l.b16 %v30
  %v175 = vunpack.c.l.b16 %v31
  %v176 = vunpack.c.l.b16 %v32
  %v177 = vunpack.c.l.b16 %v33
  %v178 = vunpack.c.l.b16 %v34
  %v179 = vunpack.c.l.b16 %v35
  %v180 = vunpack.c.l.b16 %v36
  %v181 = vunpack.c.l.b16 %v37
  %v182 = vunpack.c.l.b16 %v38
  %v183 = vunpack.c.l.b16 %v39
  %v184 = vunpack.c.l.b16 %v40
  %v185 = vunpack.c.l.b16 %v41
  %v186 = vunpack.c.l.b16 %v42
  %v187 = vunpack.c.l.b16 %v43
  %v188 = vunpack.c.l.b16 %v44
  %v189 = vunpack.c.l.b16 %v45
  %v190 = vunpack.c.l.b16 %v46
  %v191 = vunpack.c.l.b16 %v47
  %v192 = vunpack.c.l.b16 %v48
  %v193 = vunpack.c.l.b16 %v49
  %v194 = vunpack.c.l.b16 %v50
  %v195 = vunpack.c.l.b16 %v51
  %v196 = vunpack.c.l.b16 %v52
  %v197 = vunpack.c.l.b16 %v53
  %v198 = vunpack.c.l.b16 %v54
  %v199 = vunpack.c.l.b16 %v55
  %v200 = vunpack.c.l.b16 %v56
  %v201 = vunpack.c.l.b16 %v57
  %v202 = vunpack.c.l.b16 %v58
  %v203 = vunpack.c.l.b16 %v59
  %v204 = vunpack.c.l.b16 %v60
  %v205 = vunpack.c.l.b16 %v61
  %v206 = vunpack.c.l.b16 %v62
  %v207 = vunpack.c.l.b16 %v63
  %v208 = vunpack.c.l.b16 %v64
  %v209 = vunpack.c.l.b16 %v65
  %v210 = vunpack.c.l.b16 %v66
  %v211 = vunpack.c.l.b16 %v67
  %v212 = vunpack.c.l.b16 %v68
  %v213 = vunpack.c.l.b16 %v69
  %v214 = vunpack.c.l.b16 %v70
  %v215 = vunpack.c.l.b16 %v71
  %v216 = vunpack.c.l.b16 %v72
  %v217 = vunpack.c.l.b16 %v73
  %v218 = vunpack.c.l.b16 %v74
  %v219 = vunpack.c.l.b16 %v75
  %v220 = vpack.c.b16 %v157, %v156
  %v221 = vpack.c.b16 %v159, %v158
  %v222 = vpack.c.b16 %v161, %v160
  %v223 = vpack.c.b16 %v163, %v162
  %v224 = vpack.c.b16 %v165, %v164
  %v225 = vpack.c.b16 %v167, %v166
  %v226 = vpack.c.b16 %v169, %v168
  %v227 = vpack.c.b16 %v171, %v170
  %v228 = vpack.c.b16 %v173, %v172
  %v229 = vpack.c.b16 %v175, %v174
  %v230 = vpack.c.b16 %v177, %v176
  %v231 = vpack.c.b16 %v179, %v178
  %v232 = vpack.c.b16 %v181, %v180
  %v233 = vpack.c.b16 %v183, %v182
  %v234 = vpack.c.b16 %v185, %v184
  %v235 = vpack.c.b16 %v187, %v186
  %v236 = vpack.c.b16 %v189, %v188
  %v237 = vpack.c.b16 %v191, %v190
  %v238 = vpack.c.b16 %v193, %v192
  %v239 = vpack.c.b16 %v195, %v194
  %v240 = vpack.c.b16 %v197, %v196
  %v241 = vpack.c.b16 %v199, %v198
  %v242 = vpack.c.b16 %v201, %v200
  %v243 = vpack.c.b16 %v203, %v202
  %v244 = vpack.c.b16 %v205, %v204
  %v245 = vpack.c.b16 %v207, %v206
  %v246 = vpack.c.b16 %v209, %v208
  %v247 = vpack.c.b16 %v211, %v210
  %v248 = vpack.c.b16 %v213, %v212
  %v249 = vpack.c.b16 %v215, %v214
  %v250 = vpack.c.b16 %v217, %v216
  %v251 = vpack.c.b16 %v219, %v218
  %v300 = vunpack.c.l.b16 %v76
  %v301 = vunpack.c.l.b16 %v77
  %v302 = vunpack.c.l.b16 %v78
  %v303 = vunpack.c.l.b16 %v79
  %v304 = vunpack.c.l.b16 %v80
  %v305 = vunpack.c.l.b16 %v81
  %v306 = vunpack.c.l.b16 %v82
  %v307 = vunpack.c.l.b16 %v83
  %v308 = vunpack.c.l.b16 %v84
  %v309 = vunpack.c.l.b16 %v85
  %v310 = vunpack.c.l.b16 %v86
  %v311 = vunpack.c.l.b16 %v87
  %v312 = vunpack.c.l.b16 %v88
  %v313 = vunpack.c.l.b16 %v89
  %v314 = vunpack.c.l.b16 %v90
  %v315 = vunpack.c.l.b16 %v91
  %v316 = vpack.c.b16 %v301, %v300
  %v317 = vpack.c.b16 %v303, %v302
  %v318 = vpack.c.b16 %v305, %v304
  %v319 = vpack.c.b16 %v307, %v306
  %v320 = vpack.c.b16 %v309, %v308
  %v321 = vpack.c.b16 %v311, %v310
  %v322 = vpack.c.b16 %v313, %v312
  %v323 = vpack.c.b16 %v315, %v314
  %332 = vmatprep.subr.bf16.mxu0 0
  %333 = vmatpush1.bf16.msra.mxu0 %v323
  %334 = vmatprep.subr.bf16.mxu0 0
  %335 = vmatpush1.bf16.msra.mxu0 %v322
  %336 = vmatprep.subr.bf16.mxu0 0
  %337 = vmatpush1.bf16.msra.mxu0 %v321
  %338 = vmatprep.subr.bf16.mxu0 0
  %339 = vmatpush1.bf16.msra.mxu0 %v320
  %340 = vmatprep.subr.bf16.mxu0 0
  %341 = vmatpush1.bf16.msra.mxu0 %v319
  %342 = vmatprep.subr.bf16.mxu0 0
  %343 = vmatpush1.bf16.msra.mxu0 %v318
  %344 = vmatprep.subr.bf16.mxu0 0
  %345 = vmatpush1.bf16.msra.mxu0 %v317
  %346 = vmatprep.subr.bf16.mxu0 0
  %347 = vmatpush1.bf16.msra.mxu0 %v316
  %348 = vmatprep.subr.bf16.mxu0 0
  %349 = vmatpush2.bf16.msra.mxu0 0
  %350 = vmatprep.subr.bf16.mxu0 0
  %351 = vmatpush2.bf16.msra.mxu0 0
  %352 = vmatprep.subr.bf16.mxu0 0
  %353 = vmatpush2.bf16.msra.mxu0 0
  %354 = vmatprep.subr.bf16.mxu0 0
  %355 = vmatpush2.bf16.msra.mxu0 0
  %356 = vmatprep.subr.bf16.mxu0 0
  %357 = vmatpush2.bf16.msra.mxu0 0
  %358 = vmatprep.subr.bf16.mxu0 0
  %359 = vmatpush2.bf16.msra.mxu0 0
  %360 = vmatprep.subr.bf16.mxu0 0
  %361 = vmatpush2.bf16.msra.mxu0 0
  %362 = vmatprep.subr.bf16.mxu0 0
  %363 = vmatpush2.bf16.msra.mxu0 0
  %364 = vmatprep.mubr.bf16.mxu0 0
  %365 = vmatmul.mubr.bf16.gmra.mxu0 %v220
  %v366 = vpop.f32.mrf.mxu0
  %v367 = vadd.f32 0.0, %v366
  %v368 = vpop.f32.mrf.mxu0
  %v369 = vpop.f32.mrf.mxu0
  %v370 = vadd.f32 0.0, %v369
  %v371 = vpop.f32.mrf.mxu0
  %372 = vmatprep.mubr.bf16.mxu0 0
  %373 = vmatmul.mubr.bf16.gmra.mxu0 %v221
  %v374 = vpop.f32.mrf.mxu0
  %v375 = vadd.f32 0.0, %v374
  %v376 = vpop.f32.mrf.mxu0
  %v377 = vpop.f32.mrf.mxu0
  %v378 = vadd.f32 0.0, %v377
  %v379 = vpop.f32.mrf.mxu0
  %380 = vmatprep.mubr.bf16.mxu0 0
  %381 = vmatmul.mubr.bf16.gmra.mxu0 %v222
  %v382 = vpop.f32.mrf.mxu0
  %v383 = vadd.f32 0.0, %v382
  %v384 = vpop.f32.mrf.mxu0
  %v385 = vpop.f32.mrf.mxu0
  %v386 = vadd.f32 0.0, %v385
  %v387 = vpop.f32.mrf.mxu0
  %388 = vmatprep.mubr.bf16.mxu0 0
  %389 = vmatmul.mubr.bf16.gmra.mxu0 %v223
  %v390 = vpop.f32.mrf.mxu0
  %v391 = vadd.f32 0.0, %v390
  %v392 = vpop.f32.mrf.mxu0
  %v393 = vpop.f32.mrf.mxu0
  %v394 = vadd.f32 0.0, %v393
  %v395 = vpop.f32.mrf.mxu0
  %396 = vmatprep.mubr.bf16.mxu0 0
  %397 = vmatmul.mubr.bf16.gmra.mxu0 %v224
  %v398 = vpop.f32.mrf.mxu0
  %v399 = vadd.f32 0.0, %v398
  %v400 = vpop.f32.mrf.mxu0
  %v401 = vpop.f32.mrf.mxu0
  %v402 = vadd.f32 0.0, %v401
  %v403 = vpop.f32.mrf.mxu0
  %404 = vmatprep.mubr.bf16.mxu0 0
  %405 = vmatmul.mubr.bf16.gmra.mxu0 %v225
  %v406 = vpop.f32.mrf.mxu0
  %v407 = vadd.f32 0.0, %v406
  %v408 = vpop.f32.mrf.mxu0
  %v409 = vpop.f32.mrf.mxu0
  %v410 = vadd.f32 0.0, %v409
  %v411 = vpop.f32.mrf.mxu0
  %412 = vmatprep.mubr.bf16.mxu0 0
  %413 = vmatmul.mubr.bf16.gmra.mxu0 %v226
  %v414 = vpop.f32.mrf.mxu0
  %v415 = vadd.f32 0.0, %v414
  %v416 = vpop.f32.mrf.mxu0
  %v417 = vpop.f32.mrf.mxu0
  %v418 = vadd.f32 0.0, %v417
  %v419 = vpop.f32.mrf.mxu0
  %420 = vmatprep.mubr.bf16.mxu0 0
  %421 = vmatmul.mubr.bf16.gmra.mxu0 %v227
  %v422 = vpop.f32.mrf.mxu0
  %v423 = vadd.f32 0.0, %v422
  %v424 = vpop.f32.mrf.mxu0
  %v425 = vpop.f32.mrf.mxu0
  %v426 = vadd.f32 0.0, %v425
  %v427 = vpop.f32.mrf.mxu0
  %428 = vmatprep.mubr.bf16.mxu0 0
  %429 = vmatmul.mubr.bf16.gmra.mxu0 %v228
  %v430 = vpop.f32.mrf.mxu0
  %v431 = vadd.f32 0.0, %v430
  %v432 = vpop.f32.mrf.mxu0
  %v433 = vpop.f32.mrf.mxu0
  %v434 = vadd.f32 0.0, %v433
  %v435 = vpop.f32.mrf.mxu0
  %436 = vmatprep.mubr.bf16.mxu0 0
  %437 = vmatmul.mubr.bf16.gmra.mxu0 %v229
  %v438 = vpop.f32.mrf.mxu0
  %v439 = vadd.f32 0.0, %v438
  %v440 = vpop.f32.mrf.mxu0
  %v441 = vpop.f32.mrf.mxu0
  %v442 = vadd.f32 0.0, %v441
  %v443 = vpop.f32.mrf.mxu0
  %444 = vmatprep.mubr.bf16.mxu0 0
  %445 = vmatmul.mubr.bf16.gmra.mxu0 %v230
  %v446 = vpop.f32.mrf.mxu0
  %v447 = vadd.f32 0.0, %v446
  %v448 = vpop.f32.mrf.mxu0
  %v449 = vpop.f32.mrf.mxu0
  %v450 = vadd.f32 0.0, %v449
  %v451 = vpop.f32.mrf.mxu0
  %452 = vmatprep.mubr.bf16.mxu0 0
  %453 = vmatmul.mubr.bf16.gmra.mxu0 %v231
  %v454 = vpop.f32.mrf.mxu0
  %v455 = vadd.f32 0.0, %v454
  %v456 = vpop.f32.mrf.mxu0
  %v457 = vpop.f32.mrf.mxu0
  %v458 = vadd.f32 0.0, %v457
  %v459 = vpop.f32.mrf.mxu0
  %460 = vmatprep.mubr.bf16.mxu0 0
  %461 = vmatmul.mubr.bf16.gmra.mxu0 %v232
  %v462 = vpop.f32.mrf.mxu0
  %v463 = vadd.f32 0.0, %v462
  %v464 = vpop.f32.mrf.mxu0
  %v465 = vpop.f32.mrf.mxu0
  %v466 = vadd.f32 0.0, %v465
  %v467 = vpop.f32.mrf.mxu0
  %468 = vmatprep.mubr.bf16.mxu0 0
  %469 = vmatmul.mubr.bf16.gmra.mxu0 %v233
  %v470 = vpop.f32.mrf.mxu0
  %v471 = vadd.f32 0.0, %v470
  %v472 = vpop.f32.mrf.mxu0
  %v473 = vpop.f32.mrf.mxu0
  %v474 = vadd.f32 0.0, %v473
  %v475 = vpop.f32.mrf.mxu0
  %476 = vmatprep.mubr.bf16.mxu0 0
  %477 = vmatmul.mubr.bf16.gmra.mxu0 %v234
  %v478 = vpop.f32.mrf.mxu0
  %v479 = vadd.f32 0.0, %v478
  %v480 = vpop.f32.mrf.mxu0
  %v481 = vpop.f32.mrf.mxu0
  %v482 = vadd.f32 0.0, %v481
  %v483 = vpop.f32.mrf.mxu0
  %484 = vmatprep.mubr.bf16.mxu0 0
  %485 = vmatmul.mubr.bf16.gmra.mxu0 %v235
  %v486 = vpop.f32.mrf.mxu0
  %v487 = vadd.f32 0.0, %v486
  %v488 = vpop.f32.mrf.mxu0
  %v489 = vpop.f32.mrf.mxu0
  %v490 = vadd.f32 0.0, %v489
  %v491 = vpop.f32.mrf.mxu0
  %492 = vmatprep.mubr.bf16.mxu0 0
  %493 = vmatmul.mubr.bf16.gmra.mxu0 %v236
  %v494 = vpop.f32.mrf.mxu0
  %v495 = vadd.f32 0.0, %v494
  %v496 = vpop.f32.mrf.mxu0
  %v497 = vpop.f32.mrf.mxu0
  %v498 = vadd.f32 0.0, %v497
  %v499 = vpop.f32.mrf.mxu0
  %500 = vmatprep.mubr.bf16.mxu0 0
  %501 = vmatmul.mubr.bf16.gmra.mxu0 %v237
  %v502 = vpop.f32.mrf.mxu0
  %v503 = vadd.f32 0.0, %v502
  %v504 = vpop.f32.mrf.mxu0
  %v505 = vpop.f32.mrf.mxu0
  %v506 = vadd.f32 0.0, %v505
  %v507 = vpop.f32.mrf.mxu0
  %508 = vmatprep.mubr.bf16.mxu0 0
  %509 = vmatmul.mubr.bf16.gmra.mxu0 %v238
  %v510 = vpop.f32.mrf.mxu0
  %v511 = vadd.f32 0.0, %v510
  %v512 = vpop.f32.mrf.mxu0
  %v513 = vpop.f32.mrf.mxu0
  %v514 = vadd.f32 0.0, %v513
  %v515 = vpop.f32.mrf.mxu0
  %516 = vmatprep.mubr.bf16.mxu0 0
  %517 = vmatmul.mubr.bf16.gmra.mxu0 %v239
  %v518 = vpop.f32.mrf.mxu0
  %v519 = vadd.f32 0.0, %v518
  %v520 = vpop.f32.mrf.mxu0
  %v521 = vpop.f32.mrf.mxu0
  %v522 = vadd.f32 0.0, %v521
  %v523 = vpop.f32.mrf.mxu0
  %524 = vmatprep.mubr.bf16.mxu0 0
  %525 = vmatmul.mubr.bf16.gmra.mxu0 %v240
  %v526 = vpop.f32.mrf.mxu0
  %v527 = vadd.f32 0.0, %v526
  %v528 = vpop.f32.mrf.mxu0
  %v529 = vpop.f32.mrf.mxu0
  %v530 = vadd.f32 0.0, %v529
  %v531 = vpop.f32.mrf.mxu0
  %532 = vmatprep.mubr.bf16.mxu0 0
  %533 = vmatmul.mubr.bf16.gmra.mxu0 %v241
  %v534 = vpop.f32.mrf.mxu0
  %v535 = vadd.f32 0.0, %v534
  %v536 = vpop.f32.mrf.mxu0
  %v537 = vpop.f32.mrf.mxu0
  %v538 = vadd.f32 0.0, %v537
  %v539 = vpop.f32.mrf.mxu0
  %540 = vmatprep.mubr.bf16.mxu0 0
  %541 = vmatmul.mubr.bf16.gmra.mxu0 %v242
  %v542 = vpop.f32.mrf.mxu0
  %v543 = vadd.f32 0.0, %v542
  %v544 = vpop.f32.mrf.mxu0
  %v545 = vpop.f32.mrf.mxu0
  %v546 = vadd.f32 0.0, %v545
  %v547 = vpop.f32.mrf.mxu0
  %548 = vmatprep.mubr.bf16.mxu0 0
  %549 = vmatmul.mubr.bf16.gmra.mxu0 %v243
  %v550 = vpop.f32.mrf.mxu0
  %v551 = vadd.f32 0.0, %v550
  %v552 = vpop.f32.mrf.mxu0
  %v553 = vpop.f32.mrf.mxu0
  %v554 = vadd.f32 0.0, %v553
  %v555 = vpop.f32.mrf.mxu0
  %556 = vmatprep.mubr.bf16.mxu0 0
  %557 = vmatmul.mubr.bf16.gmra.mxu0 %v244
  %v558 = vpop.f32.mrf.mxu0
  %v559 = vadd.f32 0.0, %v558
  %v560 = vpop.f32.mrf.mxu0
  %v561 = vpop.f32.mrf.mxu0
  %v562 = vadd.f32 0.0, %v561
  %v563 = vpop.f32.mrf.mxu0
  %564 = vmatprep.mubr.bf16.mxu0 0
  %565 = vmatmul.mubr.bf16.gmra.mxu0 %v245
  %v566 = vpop.f32.mrf.mxu0
  %v567 = vadd.f32 0.0, %v566
  %v568 = vpop.f32.mrf.mxu0
  %v569 = vpop.f32.mrf.mxu0
  %v570 = vadd.f32 0.0, %v569
  %v571 = vpop.f32.mrf.mxu0
  %572 = vmatprep.mubr.bf16.mxu0 0
  %573 = vmatmul.mubr.bf16.gmra.mxu0 %v246
  %v574 = vpop.f32.mrf.mxu0
  %v575 = vadd.f32 0.0, %v574
  %v576 = vpop.f32.mrf.mxu0
  %v577 = vpop.f32.mrf.mxu0
  %v578 = vadd.f32 0.0, %v577
  %v579 = vpop.f32.mrf.mxu0
  %580 = vmatprep.mubr.bf16.mxu0 0
  %581 = vmatmul.mubr.bf16.gmra.mxu0 %v247
  %v582 = vpop.f32.mrf.mxu0
  %v583 = vadd.f32 0.0, %v582
  %v584 = vpop.f32.mrf.mxu0
  %v585 = vpop.f32.mrf.mxu0
  %v586 = vadd.f32 0.0, %v585
  %v587 = vpop.f32.mrf.mxu0
  %588 = vmatprep.mubr.bf16.mxu0 0
  %589 = vmatmul.mubr.bf16.gmra.mxu0 %v248
  %v590 = vpop.f32.mrf.mxu0
  %v591 = vadd.f32 0.0, %v590
  %v592 = vpop.f32.mrf.mxu0
  %v593 = vpop.f32.mrf.mxu0
  %v594 = vadd.f32 0.0, %v593
  %v595 = vpop.f32.mrf.mxu0
  %596 = vmatprep.mubr.bf16.mxu0 0
  %597 = vmatmul.mubr.bf16.gmra.mxu0 %v249
  %v598 = vpop.f32.mrf.mxu0
  %v599 = vadd.f32 0.0, %v598
  %v600 = vpop.f32.mrf.mxu0
  %v601 = vpop.f32.mrf.mxu0
  %v602 = vadd.f32 0.0, %v601
  %v603 = vpop.f32.mrf.mxu0
  %604 = vmatprep.mubr.bf16.mxu0 0
  %605 = vmatmul.mubr.bf16.gmra.mxu0 %v250
  %v606 = vpop.f32.mrf.mxu0
  %v607 = vadd.f32 0.0, %v606
  %v608 = vpop.f32.mrf.mxu0
  %v609 = vpop.f32.mrf.mxu0
  %v610 = vadd.f32 0.0, %v609
  %v611 = vpop.f32.mrf.mxu0
  %612 = vmatprep.mubr.bf16.mxu0 0
  %613 = vmatmul.mubr.bf16.gmra.mxu0 %v251
  %v614 = vpop.f32.mrf.mxu0
  %v615 = vadd.f32 0.0, %v614
  %v616 = vpop.f32.mrf.mxu0
  %v617 = vpop.f32.mrf.mxu0
  %v618 = vadd.f32 0.0, %v617
  %v619 = vpop.f32.mrf.mxu0
  %620 = vdwg.mxu0
  %v621 = vpack.c.bf16 %v370, %v367
  %v622 = vpack.c.bf16 %v378, %v375
  %v623 = vpack.c.bf16 %v386, %v383
  %v624 = vpack.c.bf16 %v394, %v391
  %v625 = vpack.c.bf16 %v402, %v399
  %v626 = vpack.c.bf16 %v410, %v407
  %v627 = vpack.c.bf16 %v418, %v415
  %v628 = vpack.c.bf16 %v426, %v423
  %v629 = vpack.c.bf16 %v434, %v431
  %v630 = vpack.c.bf16 %v442, %v439
  %v631 = vpack.c.bf16 %v450, %v447
  %v632 = vpack.c.bf16 %v458, %v455
  %v633 = vpack.c.bf16 %v466, %v463
  %v634 = vpack.c.bf16 %v474, %v471
  %v635 = vpack.c.bf16 %v482, %v479
  %v636 = vpack.c.bf16 %v490, %v487
  %v637 = vpack.c.bf16 %v498, %v495
  %v638 = vpack.c.bf16 %v506, %v503
  %v639 = vpack.c.bf16 %v514, %v511
  %v640 = vpack.c.bf16 %v522, %v519
  %v641 = vpack.c.bf16 %v530, %v527
  %v642 = vpack.c.bf16 %v538, %v535
  %v643 = vpack.c.bf16 %v546, %v543
  %v644 = vpack.c.bf16 %v554, %v551
  %v645 = vpack.c.bf16 %v562, %v559
  %v646 = vpack.c.bf16 %v570, %v567
  %v647 = vpack.c.bf16 %v578, %v575
  %v648 = vpack.c.bf16 %v586, %v583
  %v649 = vpack.c.bf16 %v594, %v591
  %v650 = vpack.c.bf16 %v602, %v599
  %v651 = vpack.c.bf16 %v610, %v607
  %v652 = vpack.c.bf16 %v618, %v615
  %v685 = vunpack.c.l.b16 %v621
  %v686 = vunpack.c.h.b16 %v621
  %v687 = vunpack.c.l.b16 %v622
  %v688 = vunpack.c.h.b16 %v622
  %v689 = vunpack.c.l.b16 %v623
  %v690 = vunpack.c.h.b16 %v623
  %v691 = vunpack.c.l.b16 %v624
  %v692 = vunpack.c.h.b16 %v624
  %v693 = vunpack.c.l.b16 %v625
  %v694 = vunpack.c.h.b16 %v625
  %v695 = vunpack.c.l.b16 %v626
  %v696 = vunpack.c.h.b16 %v626
  %v697 = vunpack.c.l.b16 %v627
  %v698 = vunpack.c.h.b16 %v627
  %v699 = vunpack.c.l.b16 %v628
  %v700 = vunpack.c.h.b16 %v628
  %v701 = vunpack.c.l.b16 %v629
  %v702 = vunpack.c.h.b16 %v629
  %v703 = vunpack.c.l.b16 %v630
  %v704 = vunpack.c.h.b16 %v630
  %v705 = vunpack.c.l.b16 %v631
  %v706 = vunpack.c.h.b16 %v631
  %v707 = vunpack.c.l.b16 %v632
  %v708 = vunpack.c.h.b16 %v632
  %v709 = vunpack.c.l.b16 %v633
  %v710 = vunpack.c.h.b16 %v633
  %v711 = vunpack.c.l.b16 %v634
  %v712 = vunpack.c.h.b16 %v634
  %v713 = vunpack.c.l.b16 %v635
  %v714 = vunpack.c.h.b16 %v635
  %v715 = vunpack.c.l.b16 %v636
  %v716 = vunpack.c.h.b16 %v636
  %v717 = vunpack.c.l.b16 %v637
  %v718 = vunpack.c.h.b16 %v637
  %v719 = vunpack.c.l.b16 %v638
  %v720 = vunpack.c.h.b16 %v638
  %v721 = vunpack.c.l.b16 %v639
  %v722 = vunpack.c.h.b16 %v639
  %v723 = vunpack.c.l.b16 %v640
  %v724 = vunpack.c.h.b16 %v640
  %v725 = vunpack.c.l.b16 %v641
  %v726 = vunpack.c.h.b16 %v641
  %v727 = vunpack.c.l.b16 %v642
  %v728 = vunpack.c.h.b16 %v642
  %v729 = vunpack.c.l.b16 %v643
  %v730 = vunpack.c.h.b16 %v643
  %v731 = vunpack.c.l.b16 %v644
  %v732 = vunpack.c.h.b16 %v644
  %v733 = vunpack.c.l.b16 %v645
  %v734 = vunpack.c.h.b16 %v645
  %v735 = vunpack.c.l.b16 %v646
  %v736 = vunpack.c.h.b16 %v646
  %v737 = vunpack.c.l.b16 %v647
  %v738 = vunpack.c.h.b16 %v647
  %v739 = vunpack.c.l.b16 %v648
  %v740 = vunpack.c.h.b16 %v648
  %v741 = vunpack.c.l.b16 %v649
  %v742 = vunpack.c.h.b16 %v649
  %v743 = vunpack.c.l.b16 %v650
  %v744 = vunpack.c.h.b16 %v650
  %v745 = vunpack.c.l.b16 %v651
  %v746 = vunpack.c.h.b16 %v651
  %v747 = vunpack.c.l.b16 %v652
  %v748 = vunpack.c.h.b16 %v652
  %v749 = vpack.c.b16 %v685, %v685
  %v750 = vpack.c.b16 %v686, %v686
  %v751 = vpack.c.b16 %v687, %v687
  %v752 = vpack.c.b16 %v688, %v688
  %v753 = vpack.c.b16 %v689, %v689
  %v754 = vpack.c.b16 %v690, %v690
  %v755 = vpack.c.b16 %v691, %v691
  %v756 = vpack.c.b16 %v692, %v692
  %v757 = vpack.c.b16 %v693, %v693
  %v758 = vpack.c.b16 %v694, %v694
  %v759 = vpack.c.b16 %v695, %v695
  %v760 = vpack.c.b16 %v696, %v696
  %v761 = vpack.c.b16 %v697, %v697
  %v762 = vpack.c.b16 %v698, %v698
  %v763 = vpack.c.b16 %v699, %v699
  %v764 = vpack.c.b16 %v700, %v700
  %v765 = vpack.c.b16 %v701, %v701
  %v766 = vpack.c.b16 %v702, %v702
  %v767 = vpack.c.b16 %v703, %v703
  %v768 = vpack.c.b16 %v704, %v704
  %v769 = vpack.c.b16 %v705, %v705
  %v770 = vpack.c.b16 %v706, %v706
  %v771 = vpack.c.b16 %v707, %v707
  %v772 = vpack.c.b16 %v708, %v708
  %v773 = vpack.c.b16 %v709, %v709
  %v774 = vpack.c.b16 %v710, %v710
  %v775 = vpack.c.b16 %v711, %v711
  %v776 = vpack.c.b16 %v712, %v712
  %v777 = vpack.c.b16 %v713, %v713
  %v778 = vpack.c.b16 %v714, %v714
  %v779 = vpack.c.b16 %v715, %v715
  %v780 = vpack.c.b16 %v716, %v716
  %v781 = vpack.c.b16 %v717, %v717
  %v782 = vpack.c.b16 %v718, %v718
  %v783 = vpack.c.b16 %v719, %v719
  %v784 = vpack.c.b16 %v720, %v720
  %v785 = vpack.c.b16 %v721, %v721
  %v786 = vpack.c.b16 %v722, %v722
  %v787 = vpack.c.b16 %v723, %v723
  %v788 = vpack.c.b16 %v724, %v724
  %v789 = vpack.c.b16 %v725, %v725
  %v790 = vpack.c.b16 %v726, %v726
  %v791 = vpack.c.b16 %v727, %v727
  %v792 = vpack.c.b16 %v728, %v728
  %v793 = vpack.c.b16 %v729, %v729
  %v794 = vpack.c.b16 %v730, %v730
  %v795 = vpack.c.b16 %v731, %v731
  %v796 = vpack.c.b16 %v732, %v732
  %v797 = vpack.c.b16 %v733, %v733
  %v798 = vpack.c.b16 %v734, %v734
  %v799 = vpack.c.b16 %v735, %v735
  %v800 = vpack.c.b16 %v736, %v736
  %v801 = vpack.c.b16 %v737, %v737
  %v802 = vpack.c.b16 %v738, %v738
  %v803 = vpack.c.b16 %v739, %v739
  %v804 = vpack.c.b16 %v740, %v740
  %v805 = vpack.c.b16 %v741, %v741
  %v806 = vpack.c.b16 %v742, %v742
  %v807 = vpack.c.b16 %v743, %v743
  %v808 = vpack.c.b16 %v744, %v744
  %v809 = vpack.c.b16 %v745, %v745
  %v810 = vpack.c.b16 %v746, %v746
  %v811 = vpack.c.b16 %v747, %v747
  %v812 = vpack.c.b16 %v748, %v748
  %877 = vst [vmem:[%s2] sm:$0xf] %v749
  %878 = vst [vmem:[%s2 + $0x4] sm:$0xf] %v750
  %879 = vst [vmem:[%s2 + $0x8] sm:$0xf] %v751
  %880 = vst [vmem:[%s2 + $0xc] sm:$0xf] %v752
  %881 = vst [vmem:[%s2 + $0x10] sm:$0xf] %v753
  %882 = vst [vmem:[%s2 + $0x14] sm:$0xf] %v754
  %883 = vst [vmem:[%s2 + $0x18] sm:$0xf] %v755
  %884 = vst [vmem:[%s2 + $0x1c] sm:$0xf] %v756
  %885 = vst [vmem:[%s2 + $0x20] sm:$0xf] %v757
  %886 = vst [vmem:[%s2 + $0x24] sm:$0xf] %v758
  %887 = vst [vmem:[%s2 + $0x28] sm:$0xf] %v759
  %888 = vst [vmem:[%s2 + $0x2c] sm:$0xf] %v760
  %889 = vst [vmem:[%s2 + $0x30] sm:$0xf] %v761
  %890 = vst [vmem:[%s2 + $0x34] sm:$0xf] %v762
  %891 = vst [vmem:[%s2 + $0x38] sm:$0xf] %v763
  %892 = vst [vmem:[%s2 + $0x3c] sm:$0xf] %v764
  %893 = vst [vmem:[%s2 + $0x40] sm:$0xf] %v765
  %894 = vst [vmem:[%s2 + $0x44] sm:$0xf] %v766
  %895 = vst [vmem:[%s2 + $0x48] sm:$0xf] %v767
  %896 = vst [vmem:[%s2 + $0x4c] sm:$0xf] %v768
  %897 = vst [vmem:[%s2 + $0x50] sm:$0xf] %v769
  %898 = vst [vmem:[%s2 + $0x54] sm:$0xf] %v770
  %899 = vst [vmem:[%s2 + $0x58] sm:$0xf] %v771
  %900 = vst [vmem:[%s2 + $0x5c] sm:$0xf] %v772
  %901 = vst [vmem:[%s2 + $0x60] sm:$0xf] %v773
  %902 = vst [vmem:[%s2 + $0x64] sm:$0xf] %v774
  %903 = vst [vmem:[%s2 + $0x68] sm:$0xf] %v775
  %904 = vst [vmem:[%s2 + $0x6c] sm:$0xf] %v776
  %905 = vst [vmem:[%s2 + $0x70] sm:$0xf] %v777
  %906 = vst [vmem:[%s2 + $0x74] sm:$0xf] %v778
  %907 = vst [vmem:[%s2 + $0x78] sm:$0xf] %v779
  %908 = vst [vmem:[%s2 + $0x7c] sm:$0xf] %v780
  %909 = vst [vmem:[%s2 + $0x80] sm:$0xf] %v781
  %910 = vst [vmem:[%s2 + $0x84] sm:$0xf] %v782
  %911 = vst [vmem:[%s2 + $0x88] sm:$0xf] %v783
  %912 = vst [vmem:[%s2 + $0x8c] sm:$0xf] %v784
  %913 = vst [vmem:[%s2 + $0x90] sm:$0xf] %v785
  %914 = vst [vmem:[%s2 + $0x94] sm:$0xf] %v786
  %915 = vst [vmem:[%s2 + $0x98] sm:$0xf] %v787
  %916 = vst [vmem:[%s2 + $0x9c] sm:$0xf] %v788
  %917 = vst [vmem:[%s2 + $0xa0] sm:$0xf] %v789
  %918 = vst [vmem:[%s2 + $0xa4] sm:$0xf] %v790
  %919 = vst [vmem:[%s2 + $0xa8] sm:$0xf] %v791
  %920 = vst [vmem:[%s2 + $0xac] sm:$0xf] %v792
  %921 = vst [vmem:[%s2 + $0xb0] sm:$0xf] %v793
  %922 = vst [vmem:[%s2 + $0xb4] sm:$0xf] %v794
  %923 = vst [vmem:[%s2 + $0xb8] sm:$0xf] %v795
  %924 = vst [vmem:[%s2 + $0xbc] sm:$0xf] %v796
  %925 = vst [vmem:[%s2 + $0xc0] sm:$0xf] %v797
  %926 = vst [vmem:[%s2 + $0xc4] sm:$0xf] %v798
  %927 = vst [vmem:[%s2 + $0xc8] sm:$0xf] %v799
  %928 = vst [vmem:[%s2 + $0xcc] sm:$0xf] %v800
  %929 = vst [vmem:[%s2 + $0xd0] sm:$0xf] %v801
  %930 = vst [vmem:[%s2 + $0xd4] sm:$0xf] %v802
  %931 = vst [vmem:[%s2 + $0xd8] sm:$0xf] %v803
  %932 = vst [vmem:[%s2 + $0xdc] sm:$0xf] %v804
  %933 = vst [vmem:[%s2 + $0xe0] sm:$0xf] %v805
  %934 = vst [vmem:[%s2 + $0xe4] sm:$0xf] %v806
  %935 = vst [vmem:[%s2 + $0xe8] sm:$0xf] %v807
  %936 = vst [vmem:[%s2 + $0xec] sm:$0xf] %v808
  %937 = vst [vmem:[%s2 + $0xf0] sm:$0xf] %v809
  %938 = vst [vmem:[%s2 + $0xf4] sm:$0xf] %v810
  %939 = vst [vmem:[%s2 + $0xf8] sm:$0xf] %v811
  %940 = vst [vmem:[%s2 + $0xfc] sm:$0xf] %v812
  // Predicated region
  $region10: #{sage_for_hetero_forward.6} parent=0 // pred_check
    _
  $region11: #{sage_for_hetero_forward.6} parent=0 // pred_check_branch
    %942 = sbr.rel (0) target = $region13
  $region12: #{sage_for_hetero_forward.6} parent=0 // pred_region
    _
  $region13: #{sage_for_hetero_forward.6} parent=0 // pred_fallthru
    _
  // Predicated region
  $region14: #{sage_for_hetero_forward.6} parent=0 // pred_check
    _
  $region15: #{sage_for_hetero_forward.6} parent=0 // pred_check_branch
    %944 = sbr.rel (0) target = $region17
  $region16: #{sage_for_hetero_forward.6} parent=0 // pred_region
    _
  $region17: #{sage_for_hetero_forward.6} parent=0 // pred_fallthru
    _

// kernel: sage_for_hetero_forward.11
$region0: #{sage_for_hetero_forward.11}
  #allocation0 [shape = 'u32[]', space=smem, size = 0x4, offset = 0x4, fixed_abs, tag = 'smem constant byte address 0x4 - core index']
  #allocation1 [shape = 'u32[144,128]{1,0:T(1,128)}', space=vmem, size = 0x12000, scoped, tag = 'internal scratch']
  #allocation2 [shape = 'f32[256,128]{1,0:T(8,128)}', space=vmem, size = 0x20000, scoped, tag = 'scratch operand']
  #allocation3 [shape = 's32[1]{0}', space=sflag, size = 0x4, scoped, tag = 'scoped memory for sage_for_hetero_forward.11']
  #allocation4 [shape = 'u8[512]{0}', space=smem, size = 0x200, scoped, tag = 'prefetched SMEM operand 0']
  #allocation5 [shape = 'u8[512]{0}', space=smem, size = 0x200, scoped, tag = 'prefetched SMEM operand 1']
  %s0 = inlined_call_operand.vmem [shape: s32[4], index: 0, kind: input, shape index: {}]
  %s1 = inlined_call_operand.vmem [shape: s32[2], index: 1, kind: input, shape index: {}]
  %s2 = inlined_call_operand.vmem [shape: bf16[512,512], index: 2, kind: input, shape index: {}]
  %s3 = inlined_call_operand.vmem [shape: bf16[512,128], index: 3, kind: input, shape index: {}]
  %s4 = inlined_call_operand.vmem [shape: bf16[512,128], index: 4, kind: input, shape index: {}]
  %s5 = inlined_call_operand.vmem [shape: bf16[128,128], index: 5, kind: input, shape index: {}]
  %s6 = inlined_call_operand.vmem [shape: f32[1,128], index: 6, kind: input, shape index: {}]
  %s7 = inlined_call_operand.vmem [shape: f32[512,1], index: 7, kind: input, shape index: {}]
  %s8 = inlined_call_operand.vmem [shape: f32[512,128], index: 8, kind: output, shape index: {}]
  %s9 = sld [smem:[#allocation0]]
  $region107: #{sage_for_hetero_forward.11} parent=0
    _
  %s11 = ssub.s32 1, %s9
  %s12 = scalar_select 0, %s11, %s9
  %s13 = sshll.u32 %s0, 4
  %s14 = int_to_ptr.vmem [resolvable:$true] %s13
  %16 = dma.vmem_to_smem %s14, 16, [#allocation4], [#allocation3]
  %s17 = sshll.u32 %s1, 4
  %s18 = int_to_ptr.vmem [resolvable:$true] %s17
  %20 = dma.vmem_to_smem %s18, 16, [#allocation5], [#allocation3]
  %21 = dma.done [#allocation3], 32
  %22 = sfence
  $region1: #{sage_for_hetero_forward.11} parent=0
    #allocation6 [shape = 'u8[262144]{0}', space=vmem, size = 0x40000, scoped, tag = 'input window, operand 2']
    loop: start=0, step=1, limit=6
    $region2: #{sage_for_hetero_forward.11} parent=1 // loop_pre_header
      _
    $region3: #{sage_for_hetero_forward.11} parent=1 // loop_header
      %s24 = sphi 0, %s28
      %p25 = scmp.ge.s32.totalorder %s24, 6
      %s31 = sphi 0, %s43
      %s32 = sphi 0, %s39
      %s33 = sphi 0, %s31
      %s34 = sphi 0, %s32
      %s35 = sphi 0, %s33
      %s36 = sphi 0, %s34
      %s66 = sphi 0, %s68
      %s69 = sphi 0, %s66
      %s70 = sphi 0, %s69
      %s86 = sphi 0, %s70
      %s110 = sphi 0, %s112
      %s113 = sphi 0, %s110
      %s114 = sphi 0, %s113
      %s130 = sphi 0, %s114
      %s136 = sphi 0, %s138
      %s139 = sphi 0, %s136
      %s140 = sphi 0, %s139
      %s156 = sphi 0, %s140
      %s160 = sphi 0, %s160
      %s162 = sphi 0, %s160
      %s163 = sphi 0, %s162
      %s177 = sphi 0, %s163
      %s181 = sphi 0, %s181
      %s183 = sphi 0, %s181
      %s184 = sphi 0, %s183
      %s198 = sphi 0, %s184
      %s204 = sphi 0, %s206
      %s207 = sphi 0, %s204
      %s208 = sphi 0, %s207
      %s224 = sphi 0, %s208
      %s230 = sphi 0, %s232
      %s233 = sphi 0, %s230
      %s234 = sphi 0, %s233
      %s250 = sphi 0, %s234
    $region4: #{sage_for_hetero_forward.11} parent=1 // loop_header_branch
      %27 = sbr.rel (%p25) target = $region8
    $region5: #{sage_for_hetero_forward.11} parent=1 // loop_body
      %s29 = ssub.s32 %s24, 1
      %s30 = ssub.s32 %s24, 2
      %s37 = sadd.s32 1, %s32
      %p38 = scmp.ge.s32.totalorder %s37, 2
      %s39 = scalar_select %p38, 0, %s37
      %s40 = sadd.s32 1, %s31
      %s41 = scalar_select %p38, %s40, %s31
      %p42 = scmp.ge.s32.totalorder %s41, 2
      %s43 = scalar_select %p42, 0, %s41
      %s44 = sld [smem:[#allocation5 + %s31]]
      %s45 = ssub.s32 %s44, 1
      %p46 = scmp.gt.s32.totalorder %s45, 0
      %s47 = scalar_select %p46, %s45, 0
      %p48 = scmp.lt.s32.totalorder %s32, %s47
      %s49 = scalar_select %p48, %s32, %s47
      %s50 = smul.u32 %s31, 2
      %s51 = sadd.s32 %s50, %s49
      %s52 = sld [smem:[#allocation4 + %s51]]
      %s53 = sld [smem:[#allocation5 + %s43]]
      %s54 = ssub.s32 %s53, 1
      %p55 = scmp.gt.s32.totalorder %s54, 0
      %s56 = scalar_select %p55, %s54, 0
      %p57 = scmp.lt.s32.totalorder %s39, %s56
      %s58 = scalar_select %p57, %s39, %s56
      %s59 = smul.u32 %s43, 2
      %s60 = sadd.s32 %s59, %s58
      %s61 = sld [smem:[#allocation4 + %s60]]
      %s62 = ssub.s32 %s31, %s43
      %s63 = ssub.s32 %s52, %s61
      %s64 = sor.u32 %s62, %s63
      %p65 = scmp.eq.s32.totalorder %s64, 0
      %s67 = sadd.s32 %s66, 1
      %s68 = scalar_select %p65, %s66, %s67
      %p71 = pneg %p65
      %p72 = scmp.eq.s32.totalorder %s24, 3
      %p73 = por %p71, %p72
      %p74 = scmp.ne.s32.totalorder %s66, %s69
      %p75 = scmp.eq.s32.totalorder %s24, 0
      %p76 = por %p74, %p75
      %p77 = scmp.ne.s32.totalorder %s66, %s69
      %p78 = scmp.eq.s32.totalorder %s29, 3
      %p79 = por %p77, %p78
      %p80 = scmp.ne.s32.totalorder %s69, %s70
      %p81 = scmp.eq.s32.totalorder %s29, 0
      %p82 = por %p80, %p81
      %p83 = scmp.ne.s32.totalorder %s69, %s70
      %p84 = scmp.eq.s32.totalorder %s30, 3
      %p85 = por %p83, %p84
      %p87 = scmp.ne.s32.totalorder %s70, %s86
      %p88 = scmp.eq.s32.totalorder %s30, 0
      %p89 = por %p87, %p88
      %s90 = sld [smem:[#allocation5 + %s31]]
      %s91 = ssub.s32 %s90, 1
      %p92 = scmp.gt.s32.totalorder %s91, 0
      %s93 = scalar_select %p92, %s91, 0
      %p94 = scmp.lt.s32.totalorder %s32, %s93
      %s95 = scalar_select %p94, %s32, %s93
      %s96 = smul.u32 %s31, 2
      %s97 = sadd.s32 %s96, %s95
      %s98 = sld [smem:[#allocation4 + %s97]]
      %s99 = sld [smem:[#allocation5 + %s43]]
      %s100 = ssub.s32 %s99, 1
      %p101 = scmp.gt.s32.totalorder %s100, 0
      %s102 = scalar_select %p101, %s100, 0
      %p103 = scmp.lt.s32.totalorder %s39, %s102
      %s104 = scalar_select %p103, %s39, %s102
      %s105 = smul.u32 %s43, 2
      %s106 = sadd.s32 %s105, %s104
      %s107 = sld [smem:[#allocation4 + %s106]]
      %s108 = ssub.s32 %s98, %s107
      %p109 = scmp.eq.s32.totalorder %s108, 0
      %s111 = sadd.s32 %s110, 1
      %s112 = scalar_select %p109, %s110, %s111
      %p115 = pneg %p109
      %p116 = scmp.eq.s32.totalorder %s24, 3
      %p117 = por %p115, %p116
      %p118 = scmp.ne.s32.totalorder %s110, %s113
      %p119 = scmp.eq.s32.totalorder %s24, 0
      %p120 = por %p118, %p119
      %p121 = scmp.ne.s32.totalorder %s110, %s113
      %p122 = scmp.eq.s32.totalorder %s29, 3
      %p123 = por %p121, %p122
      %p124 = scmp.ne.s32.totalorder %s113, %s114
      %p125 = scmp.eq.s32.totalorder %s29, 0
      %p126 = por %p124, %p125
      %p127 = scmp.ne.s32.totalorder %s113, %s114
      %p128 = scmp.eq.s32.totalorder %s30, 3
      %p129 = por %p127, %p128
      %p131 = scmp.ne.s32.totalorder %s114, %s130
      %p132 = scmp.eq.s32.totalorder %s30, 0
      %p133 = por %p131, %p132
      %s134 = ssub.s32 %s31, %s43
      %p135 = scmp.eq.s32.totalorder %s134, 0
      %s137 = sadd.s32 %s136, 1
      %s138 = scalar_select %p135, %s136, %s137
      %p141 = pneg %p135
      %p142 = scmp.eq.s32.totalorder %s24, 3
      %p143 = por %p141, %p142
      %p144 = scmp.ne.s32.totalorder %s136, %s139
      %p145 = scmp.eq.s32.totalorder %s24, 0
      %p146 = por %p144, %p145
      %p147 = scmp.ne.s32.totalorder %s136, %s139
      %p148 = scmp.eq.s32.totalorder %s29, 3
      %p149 = por %p147, %p148
      %p150 = scmp.ne.s32.totalorder %s139, %s140
      %p151 = scmp.eq.s32.totalorder %s29, 0
      %p152 = por %p150, %p151
      %p153 = scmp.ne.s32.totalorder %s139, %s140
      %p154 = scmp.eq.s32.totalorder %s30, 3
      %p155 = por %p153, %p154
      %p157 = scmp.ne.s32.totalorder %s140, %s156
      %p158 = scmp.eq.s32.totalorder %s30, 0
      %p159 = por %p157, %p158
      %s161 = sadd.s32 %s160, 1
      %p164 = scmp.eq.s32.totalorder %s24, 3
      %p165 = scmp.ne.s32.totalorder %s160, %s162
      %p166 = scmp.eq.s32.totalorder %s24, 0
      %p167 = por %p165, %p166
      %p168 = scmp.ne.s32.totalorder %s160, %s162
      %p169 = scmp.eq.s32.totalorder %s29, 3
      %p170 = por %p168, %p169
      %p171 = scmp.ne.s32.totalorder %s162, %s163
      %p172 = scmp.eq.s32.totalorder %s29, 0
      %p173 = por %p171, %p172
      %p174 = scmp.ne.s32.totalorder %s162, %s163
      %p175 = scmp.eq.s32.totalorder %s30, 3
      %p176 = por %p174, %p175
      %p178 = scmp.ne.s32.totalorder %s163, %s177
      %p179 = scmp.eq.s32.totalorder %s30, 0
      %p180 = por %p178, %p179
      %s182 = sadd.s32 %s181, 1
      %p185 = scmp.eq.s32.totalorder %s24, 3
      %p186 = scmp.ne.s32.totalorder %s181, %s183
      %p187 = scmp.eq.s32.totalorder %s24, 0
      %p188 = por %p186, %p187
      %p189 = scmp.ne.s32.totalorder %s181, %s183
      %p190 = scmp.eq.s32.totalorder %s29, 3
      %p191 = por %p189, %p190
      %p192 = scmp.ne.s32.totalorder %s183, %s184
      %p193 = scmp.eq.s32.totalorder %s29, 0
      %p194 = por %p192, %p193
      %p195 = scmp.ne.s32.totalorder %s183, %s184
      %p196 = scmp.eq.s32.totalorder %s30, 3
      %p197 = por %p195, %p196
      %p199 = scmp.ne.s32.totalorder %s184, %s198
      %p200 = scmp.eq.s32.totalorder %s30, 0
      %p201 = por %p199, %p200
      %s202 = ssub.s32 %s31, %s43
      %p203 = scmp.eq.s32.totalorder %s202, 0
      %s205 = sadd.s32 %s204, 1
      %s206 = scalar_select %p203, %s204, %s205
      %p209 = pneg %p203
      %p210 = scmp.eq.s32.totalorder %s24, 3
      %p211 = por %p209, %p210
      %p212 = scmp.ne.s32.totalorder %s204, %s207
      %p213 = scmp.eq.s32.totalorder %s24, 0
      %p214 = por %p212, %p213
      %p215 = scmp.ne.s32.totalorder %s204, %s207
      %p216 = scmp.eq.s32.totalorder %s29, 3
      %p217 = por %p215, %p216
      %p218 = scmp.ne.s32.totalorder %s207, %s208
      %p219 = scmp.eq.s32.totalorder %s29, 0
      %p220 = por %p218, %p219
      %p221 = scmp.ne.s32.totalorder %s207, %s208
      %p222 = scmp.eq.s32.totalorder %s30, 3
      %p223 = por %p221, %p222
      %p225 = scmp.ne.s32.totalorder %s208, %s224
      %p226 = scmp.eq.s32.totalorder %s30, 0
      %p227 = por %p225, %p226
      %s228 = ssub.s32 %s31, %s43
      %p229 = scmp.eq.s32.totalorder %s228, 0
      %s231 = sadd.s32 %s230, 1
      %s232 = scalar_select %p229, %s230, %s231
      %p235 = pneg %p229
      %p236 = scmp.eq.s32.totalorder %s24, 3
      %p237 = por %p235, %p236
      %p238 = scmp.ne.s32.totalorder %s230, %s233
      %p239 = scmp.eq.s32.totalorder %s24, 0
      %p240 = por %p238, %p239
      %p241 = scmp.ne.s32.totalorder %s230, %s233
      %p242 = scmp.eq.s32.totalorder %s29, 3
      %p243 = por %p241, %p242
      %p244 = scmp.ne.s32.totalorder %s233, %s234
      %p245 = scmp.eq.s32.totalorder %s29, 0
      %p246 = por %p244, %p245
      %p247 = scmp.ne.s32.totalorder %s233, %s234
      %p248 = scmp.eq.s32.totalorder %s30, 3
      %p249 = por %p247, %p248
      %p251 = scmp.ne.s32.totalorder %s234, %s250
      %p252 = scmp.eq.s32.totalorder %s30, 0
      %p253 = por %p251, %p252
      %p254 = scmp.le.s32.totalorder 1, %s24
      %p255 = scmp.lt.s32.totalorder %s24, 5
      %p256 = pnand %p254, %p255
      %p257 = pneg %p256
      // Predicated region
      $region9: #{sage_for_hetero_forward.11} parent=5 // pred_check
        _
      $region10: #{sage_for_hetero_forward.11} parent=5 // pred_check_branch
        %259 = sbr.rel (%p256) target = $region12
      $region11: #{sage_for_hetero_forward.11} parent=5 // pred_region
        %s260 = ssub.s32 %s24, 1
        // Predicated region
        $region13: #{sage_for_hetero_forward.11} parent=11 // pred_check
          %p261 = pneg %p173
        $region14: #{sage_for_hetero_forward.11} parent=11 // pred_check_branch
          %263 = sbr.rel (%p261) target = $region16
        $region15: #{sage_for_hetero_forward.11} parent=11 // pred_region
          _
        $region16: #{sage_for_hetero_forward.11} parent=11 // pred_fallthru
          _
        // Predicated region
        $region17: #{sage_for_hetero_forward.11} parent=11 // pred_check
          %p264 = pneg %p194
        $region18: #{sage_for_hetero_forward.11} parent=11 // pred_check_branch
          %266 = sbr.rel (%p264) target = $region20
        $region19: #{sage_for_hetero_forward.11} parent=11 // pred_region
          _
        $region20: #{sage_for_hetero_forward.11} parent=11 // pred_fallthru
          _
      $region12: #{sage_for_hetero_forward.11} parent=5 // pred_fallthru
        _
      %p267 = scmp.lt.s32.totalorder %s24, 4
      // Predicated region
      $region21: #{sage_for_hetero_forward.11} parent=5 // pred_check
        %p268 = pneg %p267
      $region22: #{sage_for_hetero_forward.11} parent=5 // pred_check_branch
        %270 = sbr.rel (%p268) target = $region24
      $region23: #{sage_for_hetero_forward.11} parent=5 // pred_region
        // Predicated region
        $region25: #{sage_for_hetero_forward.11} parent=23 // pred_check
          %p271 = pneg %p76
        $region26: #{sage_for_hetero_forward.11} parent=23 // pred_check_branch
          %273 = sbr.rel (%p271) target = $region28
        $region27: #{sage_for_hetero_forward.11} parent=23 // pred_region
          %s274 = sand.u32 %s66, 1
          %s275 = sand.u32 %s66, 1
          %s276 = smul.addr %s275, 256
          %s277 = scalar_lea.vmem [#allocation6], %s276
          %s278 = sld [smem:[#allocation5 + %s31]]
          %s279 = ssub.s32 %s278, 1
          %p280 = scmp.gt.s32.totalorder %s279, 0
          %s281 = scalar_select %p280, %s279, 0
          %p282 = scmp.lt.s32.totalorder %s32, %s281
          %s283 = scalar_select %p282, %s32, %s281
          %s284 = smul.u32 %s31, 2
          %s285 = sadd.s32 %s284, %s283
          %s286 = sld [smem:[#allocation4 + %s285]]
          %s287 = smul.u32 32, %s31
          %s288 = smul.u32 2, %s286
          %s289 = smul.addr %s287, 4
          %s290 = sadd.s32 %s288, %s289
          %s291 = smul.addr %s290, 4
          %s292 = scalar_lea.vmem %s2, %s291
          // Predicated region
          $region29: #{sage_for_hetero_forward.11} parent=27 // pred_check
            _
          $region30: #{sage_for_hetero_forward.11} parent=27 // pred_check_branch
            %294 = sbr.rel (0) target = $region32
          $region31: #{sage_for_hetero_forward.11} parent=27 // pred_region
            // Predicated region
            $region33: #{sage_for_hetero_forward.11} parent=31 // pred_check
              _
            $region34: #{sage_for_hetero_forward.11} parent=31 // pred_check_branch
              %296 = sbr.rel (0) target = $region36
            $region35: #{sage_for_hetero_forward.11} parent=31 // pred_region
              // Predicated region
              $region48: #{sage_for_hetero_forward.11} parent=35 // pred_check
                _
              $region49: #{sage_for_hetero_forward.11} parent=35 // pred_check_branch
                %374 = sbr.rel (0) target = $region51
              $region50: #{sage_for_hetero_forward.11} parent=35 // pred_region
                loop: start=0, step=1, limit=1
                $region52: #{sage_for_hetero_forward.11} parent=50 // loop_pre_header
                  _
                $region53: #{sage_for_hetero_forward.11} parent=50 // loop_header
                  %s376 = sphi 0, %s380
                  %p377 = scmp.ge.s32.totalorder %s376, 1
                  %s381 = sphi %s292, %s292
                  %s382 = sphi %s277, %s277
                $region54: #{sage_for_hetero_forward.11} parent=50 // loop_header_branch
                  %379 = sbr.rel (%p377) target = $region58
                $region55: #{sage_for_hetero_forward.11} parent=50 // loop_body
                  %v383 = vld [vmem:[%s381] sm:$0xff]
                  %384 = vst [vmem:[%s382] sm:$0xff] %v383
                  %v385 = vld [vmem:[%s381 + $0x10] sm:$0xff]
                  %386 = vst [vmem:[%s382 + $0x8] sm:$0xff] %v385
                  %v387 = vld [vmem:[%s381 + $0x20] sm:$0xff]
                  %388 = vst [vmem:[%s382 + $0x10] sm:$0xff] %v387
                  %v389 = vld [vmem:[%s381 + $0x30] sm:$0xff]
                  %390 = vst [vmem:[%s382 + $0x18] sm:$0xff] %v389
                  %v391 = vld [vmem:[%s381 + $0x40] sm:$0xff]
                  %392 = vst [vmem:[%s382 + $0x20] sm:$0xff] %v391
                  %v393 = vld [vmem:[%s381 + $0x50] sm:$0xff]
                  %394 = vst [vmem:[%s382 + $0x28] sm:$0xff] %v393
                  %v395 = vld [vmem:[%s381 + $0x60] sm:$0xff]
                  %396 = vst [vmem:[%s382 + $0x30] sm:$0xff] %v395
                  %v397 = vld [vmem:[%s381 + $0x70] sm:$0xff]
                  %398 = vst [vmem:[%s382 + $0x38] sm:$0xff] %v397
                  %v399 = vld [vmem:[%s381 + $0x80] sm:$0xff]
                  %400 = vst [vmem:[%s382 + $0x40] sm:$0xff] %v399
                  %v401 = vld [vmem:[%s381 + $0x90] sm:$0xff]
                  %402 = vst [vmem:[%s382 + $0x48] sm:$0xff] %v401
                  %v403 = vld [vmem:[%s381 + $0xa0] sm:$0xff]
                  %404 = vst [vmem:[%s382 + $0x50] sm:$0xff] %v403
                  %v405 = vld [vmem:[%s381 + $0xb0] sm:$0xff]
                  %406 = vst [vmem:[%s382 + $0x58] sm:$0xff] %v405
                  %v407 = vld [vmem:[%s381 + $0xc0] sm:$0xff]
                  %408 = vst [vmem:[%s382 + $0x60] sm:$0xff] %v407
                  %v409 = vld [vmem:[%s381 + $0xd0] sm:$0xff]
                  %410 = vst [vmem:[%s382 + $0x68] sm:$0xff] %v409
                  %v411 = vld [vmem:[%s381 + $0xe0] sm:$0xff]
                  %412 = vst [vmem:[%s382 + $0x70] sm:$0xff] %v411
                  %v413 = vld [vmem:[%s381 + $0xf0] sm:$0xff]
                  %414 = vst [vmem:[%s382 + $0x78] sm:$0xff] %v413
                  %v415 = vld [vmem:[%s381 + $0x100] sm:$0xff]
                  %416 = vst [vmem:[%s382 + $0x80] sm:$0xff] %v415
                  %v417 = vld [vmem:[%s381 + $0x110] sm:$0xff]
                  %418 = vst [vmem:[%s382 + $0x88] sm:$0xff] %v417
                  %v419 = vld [vmem:[%s381 + $0x120] sm:$0xff]
                  %420 = vst [vmem:[%s382 + $0x90] sm:$0xff] %v419
                  %v421 = vld [vmem:[%s381 + $0x130] sm:$0xff]
                  %422 = vst [vmem:[%s382 + $0x98] sm:$0xff] %v421
                  %v423 = vld [vmem:[%s381 + $0x140] sm:$0xff]
                  %424 = vst [vmem:[%s382 + $0xa0] sm:$0xff] %v423
                  %v425 = vld [vmem:[%s381 + $0x150] sm:$0xff]
                  %426 = vst [vmem:[%s382 + $0xa8] sm:$0xff] %v425
                  %v427 = vld [vmem:[%s381 + $0x160] sm:$0xff]
                  %428 = vst [vmem:[%s382 + $0xb0] sm:$0xff] %v427
                  %v429 = vld [vmem:[%s381 + $0x170] sm:$0xff]
                  %430 = vst [vmem:[%s382 + $0xb8] sm:$0xff] %v429
                  %v431 = vld [vmem:[%s381 + $0x180] sm:$0xff]
                  %432 = vst [vmem:[%s382 + $0xc0] sm:$0xff] %v431
                  %v433 = vld [vmem:[%s381 + $0x190] sm:$0xff]
                  %434 = vst [vmem:[%s382 + $0xc8] sm:$0xff] %v433
                  %v435 = vld [vmem:[%s381 + $0x1a0] sm:$0xff]
                  %436 = vst [vmem:[%s382 + $0xd0] sm:$0xff] %v435
                  %v437 = vld [vmem:[%s381 + $0x1b0] sm:$0xff]
                  %438 = vst [vmem:[%s382 + $0xd8] sm:$0xff] %v437
                  %v439 = vld [vmem:[%s381 + $0x1c0] sm:$0xff]
                  %440 = vst [vmem:[%s382 + $0xe0] sm:$0xff] %v439
                  %v441 = vld [vmem:[%s381 + $0x1d0] sm:$0xff]
                  %442 = vst [vmem:[%s382 + $0xe8] sm:$0xff] %v441
                  %v443 = vld [vmem:[%s381 + $0x1e0] sm:$0xff]
                  %444 = vst [vmem:[%s382 + $0xf0] sm:$0xff] %v443
                  %v445 = vld [vmem:[%s381 + $0x1f0] sm:$0xff]
                  %446 = vst [vmem:[%s382 + $0xf8] sm:$0xff] %v445
                $region56: #{sage_for_hetero_forward.11} parent=50 // loop_footer
                  %s380 = sadd.s32 1, %s376
                $region57: #{sage_for_hetero_forward.11} parent=50 // loop_footer_branch
                  %375 = sbr.rel target = $region53
                $region58: #{sage_for_hetero_forward.11} parent=50 // loop_exit
                  _
              $region51: #{sage_for_hetero_forward.11} parent=35 // pred_fallthru
                _
              // Predicated region
              $region59: #{sage_for_hetero_forward.11} parent=35 // pred_check
                _
              $region60: #{sage_for_hetero_forward.11} parent=35 // pred_check_branch
                %448 = sbr.rel target = $region62
              $region61: #{sage_for_hetero_forward.11} parent=35 // pred_region
                _
              $region62: #{sage_for_hetero_forward.11} parent=35 // pred_fallthru
                _
            $region36: #{sage_for_hetero_forward.11} parent=31 // pred_fallthru
              _
            // Predicated region
            $region37: #{sage_for_hetero_forward.11} parent=31 // pred_check
              _
            $region38: #{sage_for_hetero_forward.11} parent=31 // pred_check_branch
              %298 = sbr.rel target = $region40
            $region39: #{sage_for_hetero_forward.11} parent=31 // pred_region
              %s300 = ssub.s32 256, 1
              loop: start=0, step=1, limit=1
              $region41: #{sage_for_hetero_forward.11} parent=39 // loop_pre_header
                _
              $region42: #{sage_for_hetero_forward.11} parent=39 // loop_header
                %s302 = sphi 0, %s306
                %p303 = scmp.ge.s32.totalorder %s302, 1
                %s307 = sphi %s292, %s292
                %s308 = sphi %s277, %s277
              $region43: #{sage_for_hetero_forward.11} parent=39 // loop_header_branch
                %305 = sbr.rel (%p303) target = $region47
              $region44: #{sage_for_hetero_forward.11} parent=39 // loop_body
                %v309 = vld [vmem:[%s307] sm:%s300]
                %310 = vst [vmem:[%s308] sm:%s300] %v309
                %v311 = vld [vmem:[%s307 + $0x10] sm:%s300]
                %312 = vst [vmem:[%s308 + $0x8] sm:%s300] %v311
                %v313 = vld [vmem:[%s307 + $0x20] sm:%s300]
                %314 = vst [vmem:[%s308 + $0x10] sm:%s300] %v313
                %v315 = vld [vmem:[%s307 + $0x30] sm:%s300]
                %316 = vst [vmem:[%s308 + $0x18] sm:%s300] %v315
                %v317 = vld [vmem:[%s307 + $0x40] sm:%s300]
                %318 = vst [vmem:[%s308 + $0x20] sm:%s300] %v317
                %v319 = vld [vmem:[%s307 + $0x50] sm:%s300]
                %320 = vst [vmem:[%s308 + $0x28] sm:%s300] %v319
                %v321 = vld [vmem:[%s307 + $0x60] sm:%s300]
                %322 = vst [vmem:[%s308 + $0x30] sm:%s300] %v321
                %v323 = vld [vmem:[%s307 + $0x70] sm:%s300]
                %324 = vst [vmem:[%s308 + $0x38] sm:%s300] %v323
                %v325 = vld [vmem:[%s307 + $0x80] sm:%s300]
                %326 = vst [vmem:[%s308 + $0x40] sm:%s300] %v325
                %v327 = vld [vmem:[%s307 + $0x90] sm:%s300]
                %328 = vst [vmem:[%s308 + $0x48] sm:%s300] %v327
                %v329 = vld [vmem:[%s307 + $0xa0] sm:%s300]
                %330 = vst [vmem:[%s308 + $0x50] sm:%s300] %v329
                %v331 = vld [vmem:[%s307 + $0xb0] sm:%s300]
                %332 = vst [vmem:[%s308 + $0x58] sm:%s300] %v331
                %v333 = vld [vmem:[%s307 + $0xc0] sm:%s300]
                %334 = vst [vmem:[%s308 + $0x60] sm:%s300] %v333
                %v335 = vld [vmem:[%s307 + $0xd0] sm:%s300]
                %336 = vst [vmem:[%s308 + $0x68] sm:%s300] %v335
                %v337 = vld [vmem:[%s307 + $0xe0] sm:%s300]
                %338 = vst [vmem:[%s308 + $0x70] sm:%s300] %v337
                %v339 = vld [vmem:[%s307 + $0xf0] sm:%s300]
                %340 = vst [vmem:[%s308 + $0x78] sm:%s300] %v339
                %v341 = vld [vmem:[%s307 + $0x100] sm:%s300]
                %342 = vst [vmem:[%s308 + $0x80] sm:%s300] %v341
                %v343 = vld [vmem:[%s307 + $0x110] sm:%s300]
                %344 = vst [vmem:[%s308 + $0x88] sm:%s300] %v343
                %v345 = vld [vmem:[%s307 + $0x120] sm:%s300]
                %346 = vst [vmem:[%s308 + $0x90] sm:%s300] %v345
                %v347 = vld [vmem:[%s307 + $0x130] sm:%s300]
                %348 = vst [vmem:[%s308 + $0x98] sm:%s300] %v347
                %v349 = vld [vmem:[%s307 + $0x140] sm:%s300]
                %350 = vst [vmem:[%s308 + $0xa0] sm:%s300] %v349
                %v351 = vld [vmem:[%s307 + $0x150] sm:%s300]
                %352 = vst [vmem:[%s308 + $0xa8] sm:%s300] %v351
                %v353 = vld [vmem:[%s307 + $0x160] sm:%s300]
                %354 = vst [vmem:[%s308 + $0xb0] sm:%s300] %v353
                %v355 = vld [vmem:[%s307 + $0x170] sm:%s300]
                %356 = vst [vmem:[%s308 + $0xb8] sm:%s300] %v355
                %v357 = vld [vmem:[%s307 + $0x180] sm:%s300]
                %358 = vst [vmem:[%s308 + $0xc0] sm:%s300] %v357
                %v359 = vld [vmem:[%s307 + $0x190] sm:%s300]
                %360 = vst [vmem:[%s308 + $0xc8] sm:%s300] %v359
                %v361 = vld [vmem:[%s307 + $0x1a0] sm:%s300]
                %362 = vst [vmem:[%s308 + $0xd0] sm:%s300] %v361
                %v363 = vld [vmem:[%s307 + $0x1b0] sm:%s300]
                %364 = vst [vmem:[%s308 + $0xd8] sm:%s300] %v363
                %v365 = vld [vmem:[%s307 + $0x1c0] sm:%s300]
                %366 = vst [vmem:[%s308 + $0xe0] sm:%s300] %v365
                %v367 = vld [vmem:[%s307 + $0x1d0] sm:%s300]
                %368 = vst [vmem:[%s308 + $0xe8] sm:%s300] %v367
                %v369 = vld [vmem:[%s307 + $0x1e0] sm:%s300]
                %370 = vst [vmem:[%s308 + $0xf0] sm:%s300] %v369
                %v371 = vld [vmem:[%s307 + $0x1f0] sm:%s300]
                %372 = vst [vmem:[%s308 + $0xf8] sm:%s300] %v371
              $region45: #{sage_for_hetero_forward.11} parent=39 // loop_footer
                %s306 = sadd.s32 1, %s302
              $region46: #{sage_for_hetero_forward.11} parent=39 // loop_footer_branch
                %301 = sbr.rel target = $region42
              $region47: #{sage_for_hetero_forward.11} parent=39 // loop_exit
                _
            $region40: #{sage_for_hetero_forward.11} parent=31 // pred_fallthru
              _
          $region32: #{sage_for_hetero_forward.11} parent=27 // pred_fallthru
            _
          %449 = vnop
        $region28: #{sage_for_hetero_forward.11} parent=23 // pred_fallthru
          _
        // Predicated region
        $region63: #{sage_for_hetero_forward.11} parent=23 // pred_check
          %p450 = pneg %p120
        $region64: #{sage_for_hetero_forward.11} parent=23 // pred_check_branch
          %452 = sbr.rel (%p450) target = $region66
        $region65: #{sage_for_hetero_forward.11} parent=23 // pred_region
          %s453 = sld [smem:[#allocation5 + %s31]]
          %s454 = ssub.s32 %s453, 1
          %p455 = scmp.gt.s32.totalorder %s454, 0
          %s456 = scalar_select %p455, %s454, 0
          %p457 = scmp.lt.s32.totalorder %s32, %s456
          %s458 = scalar_select %p457, %s32, %s456
          %s459 = smul.u32 %s31, 2
          %s460 = sadd.s32 %s459, %s458
          %s461 = sld [smem:[#allocation4 + %s460]]
          %s462 = smul.u32 32, %s461
          %p463 = scmp.lt.s32.totalorder %s462, 63
          %s464 = scalar_select %p463, %s462, 63
          %s465 = smul.addr %s464, 4
          %s466 = scalar_lea.vmem %s3, %s465
          %s467 = sld [smem:[#allocation5 + %s31]]
          %s468 = ssub.s32 %s467, 1
          %p469 = scmp.gt.s32.totalorder %s468, 0
          %s470 = scalar_select %p469, %s468, 0
          %p471 = scmp.lt.s32.totalorder %s32, %s470
          %s472 = scalar_select %p471, %s32, %s470
          %s473 = smul.u32 %s31, 2
          %s474 = sadd.s32 %s473, %s472
          %s475 = sld [smem:[#allocation4 + %s474]]
          %s476 = smul.u32 32, %s475
        $region66: #{sage_for_hetero_forward.11} parent=23 // pred_fallthru
          _
        // Predicated region
        $region67: #{sage_for_hetero_forward.11} parent=23 // pred_check
          %p477 = pneg %p146
        $region68: #{sage_for_hetero_forward.11} parent=23 // pred_check_branch
          %479 = sbr.rel (%p477) target = $region70
        $region69: #{sage_for_hetero_forward.11} parent=23 // pred_region
          %s480 = smul.u32 32, %s31
          %p481 = scmp.lt.s32.totalorder %s480, 63
          %s482 = scalar_select %p481, %s480, 63
          %s483 = smul.addr %s482, 4
          %s484 = scalar_lea.vmem %s4, %s483
          %s485 = smul.u32 32, %s31
        $region70: #{sage_for_hetero_forward.11} parent=23 // pred_fallthru
          _
        // Predicated region
        $region71: #{sage_for_hetero_forward.11} parent=23 // pred_check
          %p486 = pneg %p214
        $region72: #{sage_for_hetero_forward.11} parent=23 // pred_check_branch
          %488 = sbr.rel (%p486) target = $region74
        $region73: #{sage_for_hetero_forward.11} parent=23 // pred_region
          %s489 = smul.u32 32, %s31
          %p490 = scmp.lt.s32.totalorder %s489, 63
          %s491 = scalar_select %p490, %s489, 63
          %s492 = smul.addr %s491, 8
          %s493 = scalar_lea.vmem %s7, %s492
          %s494 = smul.u32 32, %s31
        $region74: #{sage_for_hetero_forward.11} parent=23 // pred_fallthru
          _
      $region24: #{sage_for_hetero_forward.11} parent=5 // pred_fallthru
        _
      %p495 = scmp.le.s32.totalorder 1, %s24
      %p496 = scmp.lt.s32.totalorder %s24, 5
      %p497 = pnand %p495, %p496
      %p498 = pneg %p497
      // Predicated region
      $region75: #{sage_for_hetero_forward.11} parent=5 // pred_check
        _
      $region76: #{sage_for_hetero_forward.11} parent=5 // pred_check_branch
        %500 = sbr.rel (%p497) target = $region78
      $region77: #{sage_for_hetero_forward.11} parent=5 // pred_region
        %s501 = ssub.s32 %s24, 1
        %s502 = sand.u32 %s69, 1
        %s503 = sand.u32 %s69, 1
        %s504 = smul.addr %s503, 256
        %s505 = scalar_lea.vmem [#allocation6], %s504
        // Predicated region
        $region79: #{sage_for_hetero_forward.11} parent=77 // pred_check
          %p506 = pneg %p82
        $region80: #{sage_for_hetero_forward.11} parent=77 // pred_check_branch
          %508 = sbr.rel (%p506) target = $region82
        $region81: #{sage_for_hetero_forward.11} parent=77 // pred_region
          _
        $region82: #{sage_for_hetero_forward.11} parent=77 // pred_fallthru
          _
        %s509 = sand.u32 %s69, 1
        %s510 = sand.u32 %s69, 1
        %s511 = smul.addr %s510, 256
        %s512 = scalar_lea.vmem [#allocation6], %s511
        %p513 = pneg %p82
        %p514 = pneg %p79
        %s515 = sld [smem:[#allocation5 + %s33]]
        %s516 = ssub.s32 %s515, 1
        %p517 = scmp.gt.s32.totalorder %s516, 0
        %s518 = scalar_select %p517, %s516, 0
        %p519 = scmp.lt.s32.totalorder %s34, %s518
        %s520 = scalar_select %p519, %s34, %s518
        %s521 = smul.u32 %s33, 2
        %s522 = sadd.s32 %s521, %s520
        %s523 = sld [smem:[#allocation4 + %s522]]
        %s524 = smul.u32 32, %s523
        %p525 = scmp.lt.s32.totalorder %s524, 63
        %s526 = scalar_select %p525, %s524, 63
        %s527 = smul.addr %s526, 4
        %s528 = scalar_lea.vmem %s3, %s527
        %p529 = pneg %p126
        %p530 = pneg %p123
        %s531 = smul.u32 32, %s33
        %p532 = scmp.lt.s32.totalorder %s531, 63
        %s533 = scalar_select %p532, %s531, 63
        %s534 = smul.addr %s533, 4
        %s535 = scalar_lea.vmem %s4, %s534
        %p536 = pneg %p152
        %p537 = pneg %p149
        %p538 = pneg %p173
        %p539 = pneg %p170
        %p540 = pneg %p194
        %p541 = pneg %p191
        %s542 = smul.u32 32, %s33
        %p543 = scmp.lt.s32.totalorder %s542, 63
        %s544 = scalar_select %p543, %s542, 63
        %s545 = smul.addr %s544, 8
        %s546 = scalar_lea.vmem %s7, %s545
        %p547 = pneg %p220
        %p548 = pneg %p217
        %p549 = pneg %p246
        %p550 = pneg %p243
        %s551 = smul.u32 32, %s33
        %p552 = scmp.lt.s32.totalorder %s551, 63
        %s553 = scalar_select %p552, %s551, 63
        %s554 = smul.addr %s553, 8
        %s555 = scalar_lea.vmem %s8, %s554
        %s556 = sld [smem:[#allocation5 + %s33]]
        %s557 = ssub.s32 %s556, 1
        %p558 = scmp.gt.s32.totalorder %s557, 0
        %s559 = scalar_select %p558, %s557, 0
        %p560 = scmp.lt.s32.totalorder %s34, %s559
        %s561 = scalar_select %p560, %s34, %s559
        %s562 = smul.u32 %s33, 2
        %s563 = sadd.s32 %s562, %s561
        %s564 = sld [smem:[#allocation4 + %s563]]
        %s565 = smul.u32 32, %s33
        %s566 = smul.u32 2, %s564
        %s567 = sld [smem:[#allocation5 + %s33]]
        %s568 = ssub.s32 %s567, 1
        %p569 = scmp.gt.s32.totalorder %s568, 0
        %s570 = scalar_select %p569, %s568, 0
        %p571 = scmp.lt.s32.totalorder %s34, %s570
        %s572 = scalar_select %p571, %s34, %s570
        %s573 = smul.u32 %s33, 2
        %s574 = sadd.s32 %s573, %s572
        %s575 = sld [smem:[#allocation4 + %s574]]
        %s576 = smul.u32 32, %s575
        %p577 = scmp.lt.s32.totalorder %s576, 63
        %s578 = scalar_select %p577, %s576, 63
        %s579 = smul.addr %s578, 4
        %s580 = scalar_lea.vmem %s3, %s579
        %s581 = sld [smem:[#allocation5 + %s33]]
        %s582 = ssub.s32 %s581, 1
        %p583 = scmp.gt.s32.totalorder %s582, 0
        %s584 = scalar_select %p583, %s582, 0
        %p585 = scmp.lt.s32.totalorder %s34, %s584
        %s586 = scalar_select %p585, %s34, %s584
        %s587 = smul.u32 %s33, 2
        %s588 = sadd.s32 %s587, %s586
        %s589 = sld [smem:[#allocation4 + %s588]]
        %s590 = smul.u32 32, %s589
        %s591 = smul.u32 32, %s33
        %p592 = scmp.lt.s32.totalorder %s591, 63
        %s593 = scalar_select %p592, %s591, 63
        %s594 = smul.addr %s593, 4
        %s595 = scalar_lea.vmem %s4, %s594
        %s596 = smul.u32 32, %s33
        %s597 = smul.u32 32, %s33
        %p598 = scmp.lt.s32.totalorder %s597, 63
        %s599 = scalar_select %p598, %s597, 63
        %s600 = smul.addr %s599, 8
        %s601 = scalar_lea.vmem %s7, %s600
        %s602 = smul.u32 32, %s33
        %s603 = smul.u32 32, %s33
        %p604 = scmp.lt.s32.totalorder %s603, 63
        %s605 = scalar_select %p604, %s603, 63
        %s606 = smul.addr %s605, 8
        %s607 = scalar_lea.vmem %s8, %s606
        %s608 = smul.u32 32, %s33
        %p610 = scmp.eq.s32.totalorder %s34, 0
        // Predicated region
        $region83: #{sage_for_hetero_forward.11} parent=77 // pred_check
          %p611 = pneg %p610
        $region84: #{sage_for_hetero_forward.11} parent=77 // pred_check_branch
          %613 = sbr.rel (%p611) target = $region86
        $region85: #{sage_for_hetero_forward.11} parent=77 // pred_region
          %614 = vst [vmem:[#allocation2] sm:$0xff] 0.0
          %615 = vst [vmem:[#allocation2 + $0x8] sm:$0xff] 0.0
          %616 = vst [vmem:[#allocation2 + $0x10] sm:$0xff] 0.0
          %617 = vst [vmem:[#allocation2 + $0x18] sm:$0xff] 0.0
          %618 = vst [vmem:[#allocation2 + $0x20] sm:$0xff] 0.0
          %619 = vst [vmem:[#allocation2 + $0x28] sm:$0xff] 0.0
          %620 = vst [vmem:[#allocation2 + $0x30] sm:$0xff] 0.0
          %621 = vst [vmem:[#allocation2 + $0x38] sm:$0xff] 0.0
          %622 = vst [vmem:[#allocation2 + $0x40] sm:$0xff] 0.0
          %623 = vst [vmem:[#allocation2 + $0x48] sm:$0xff] 0.0
          %624 = vst [vmem:[#allocation2 + $0x50] sm:$0xff] 0.0
          %625 = vst [vmem:[#allocation2 + $0x58] sm:$0xff] 0.0
          %626 = vst [vmem:[#allocation2 + $0x60] sm:$0xff] 0.0
          %627 = vst [vmem:[#allocation2 + $0x68] sm:$0xff] 0.0
          %628 = vst [vmem:[#allocation2 + $0x70] sm:$0xff] 0.0
          %629 = vst [vmem:[#allocation2 + $0x78] sm:$0xff] 0.0
          %630 = vst [vmem:[#allocation2 + $0x80] sm:$0xff] 0.0
          %631 = vst [vmem:[#allocation2 + $0x88] sm:$0xff] 0.0
          %632 = vst [vmem:[#allocation2 + $0x90] sm:$0xff] 0.0
          %633 = vst [vmem:[#allocation2 + $0x98] sm:$0xff] 0.0
          %634 = vst [vmem:[#allocation2 + $0xa0] sm:$0xff] 0.0
          %635 = vst [vmem:[#allocation2 + $0xa8] sm:$0xff] 0.0
          %636 = vst [vmem:[#allocation2 + $0xb0] sm:$0xff] 0.0
          %637 = vst [vmem:[#allocation2 + $0xb8] sm:$0xff] 0.0
          %638 = vst [vmem:[#allocation2 + $0xc0] sm:$0xff] 0.0
          %639 = vst [vmem:[#allocation2 + $0xc8] sm:$0xff] 0.0
          %640 = vst [vmem:[#allocation2 + $0xd0] sm:$0xff] 0.0
          %641 = vst [vmem:[#allocation2 + $0xd8] sm:$0xff] 0.0
          %642 = vst [vmem:[#allocation2 + $0xe0] sm:$0xff] 0.0
          %643 = vst [vmem:[#allocation2 + $0xe8] sm:$0xff] 0.0
          %644 = vst [vmem:[#allocation2 + $0xf0] sm:$0xff] 0.0
          %645 = vst [vmem:[#allocation2 + $0xf8] sm:$0xff] 0.0
        $region86: #{sage_for_hetero_forward.11} parent=77 // pred_fallthru
          _
        %s646 = sld [smem:[#allocation5 + %s33]]
        %p647 = scmp.lt.s32.totalorder %s34, %s646
        // Predicated region
        $region87: #{sage_for_hetero_forward.11} parent=77 // pred_check
          %p648 = pneg %p647
        $region88: #{sage_for_hetero_forward.11} parent=77 // pred_check_branch
          %650 = sbr.rel (%p648) target = $region90
        $region89: #{sage_for_hetero_forward.11} parent=77 // pred_region
          %v651 = vld [vmem:[#allocation2] sm:$0xff]
          %v652 = vld [vmem:[#allocation2 + $0x8] sm:$0xff]
          %v653 = vld [vmem:[#allocation2 + $0x10] sm:$0xff]
          %v654 = vld [vmem:[#allocation2 + $0x18] sm:$0xff]
          %v655 = vld [vmem:[#allocation2 + $0x20] sm:$0xff]
          %v656 = vld [vmem:[#allocation2 + $0x28] sm:$0xff]
          %v657 = vld [vmem:[#allocation2 + $0x30] sm:$0xff]
          %v658 = vld [vmem:[#allocation2 + $0x38] sm:$0xff]
          %v659 = vld [vmem:[#allocation2 + $0x40] sm:$0xff]
          %v660 = vld [vmem:[#allocation2 + $0x48] sm:$0xff]
          %v661 = vld [vmem:[#allocation2 + $0x50] sm:$0xff]
          %v662 = vld [vmem:[#allocation2 + $0x58] sm:$0xff]
          %v663 = vld [vmem:[#allocation2 + $0x60] sm:$0xff]
          %v664 = vld [vmem:[#allocation2 + $0x68] sm:$0xff]
          %v665 = vld [vmem:[#allocation2 + $0x70] sm:$0xff]
          %v666 = vld [vmem:[#allocation2 + $0x78] sm:$0xff]
          %v667 = vld [vmem:[#allocation2 + $0x80] sm:$0xff]
          %v668 = vld [vmem:[#allocation2 + $0x88] sm:$0xff]
          %v669 = vld [vmem:[#allocation2 + $0x90] sm:$0xff]
          %v670 = vld [vmem:[#allocation2 + $0x98] sm:$0xff]
          %v671 = vld [vmem:[#allocation2 + $0xa0] sm:$0xff]
          %v672 = vld [vmem:[#allocation2 + $0xa8] sm:$0xff]
          %v673 = vld [vmem:[#allocation2 + $0xb0] sm:$0xff]
          %v674 = vld [vmem:[#allocation2 + $0xb8] sm:$0xff]
          %v675 = vld [vmem:[#allocation2 + $0xc0] sm:$0xff]
          %v676 = vld [vmem:[#allocation2 + $0xc8] sm:$0xff]
          %v677 = vld [vmem:[#allocation2 + $0xd0] sm:$0xff]
          %v678 = vld [vmem:[#allocation2 + $0xd8] sm:$0xff]
          %v679 = vld [vmem:[#allocation2 + $0xe0] sm:$0xff]
          %v680 = vld [vmem:[#allocation2 + $0xe8] sm:$0xff]
          %v681 = vld [vmem:[#allocation2 + $0xf0] sm:$0xff]
          %v682 = vld [vmem:[#allocation2 + $0xf8] sm:$0xff]
          %v683 = vld [vmem:[%s505] sm:$0xff]
          %v684 = vld [vmem:[%s505 + $0x8] sm:$0xff]
          %v685 = vld [vmem:[%s505 + $0x10] sm:$0xff]
          %v686 = vld [vmem:[%s505 + $0x18] sm:$0xff]
          %v687 = vld [vmem:[%s505 + $0x20] sm:$0xff]
          %v688 = vld [vmem:[%s505 + $0x28] sm:$0xff]
          %v689 = vld [vmem:[%s505 + $0x30] sm:$0xff]
          %v690 = vld [vmem:[%s505 + $0x38] sm:$0xff]
          %v691 = vld [vmem:[%s505 + $0x40] sm:$0xff]
          %v692 = vld [vmem:[%s505 + $0x48] sm:$0xff]
          %v693 = vld [vmem:[%s505 + $0x50] sm:$0xff]
          %v694 = vld [vmem:[%s505 + $0x58] sm:$0xff]
          %v695 = vld [vmem:[%s505 + $0x60] sm:$0xff]
          %v696 = vld [vmem:[%s505 + $0x68] sm:$0xff]
          %v697 = vld [vmem:[%s505 + $0x70] sm:$0xff]
          %v698 = vld [vmem:[%s505 + $0x78] sm:$0xff]
          %v699 = vld [vmem:[%s505 + $0x80] sm:$0xff]
          %v700 = vld [vmem:[%s505 + $0x88] sm:$0xff]
          %v701 = vld [vmem:[%s505 + $0x90] sm:$0xff]
          %v702 = vld [vmem:[%s505 + $0x98] sm:$0xff]
          %v703 = vld [vmem:[%s505 + $0xa0] sm:$0xff]
          %v704 = vld [vmem:[%s505 + $0xa8] sm:$0xff]
          %v705 = vld [vmem:[%s505 + $0xb0] sm:$0xff]
          %v706 = vld [vmem:[%s505 + $0xb8] sm:$0xff]
          %v707 = vld [vmem:[%s505 + $0xc0] sm:$0xff]
          %v708 = vld [vmem:[%s505 + $0xc8] sm:$0xff]
          %v709 = vld [vmem:[%s505 + $0xd0] sm:$0xff]
          %v710 = vld [vmem:[%s505 + $0xd8] sm:$0xff]
          %v711 = vld [vmem:[%s505 + $0xe0] sm:$0xff]
          %v712 = vld [vmem:[%s505 + $0xe8] sm:$0xff]
          %v713 = vld [vmem:[%s505 + $0xf0] sm:$0xff]
          %v714 = vld [vmem:[%s505 + $0xf8] sm:$0xff]
          %v715 = vld [vmem:[%s580] sm:$0xf]
          %v716 = vld [vmem:[%s580 + $0x4] sm:$0xf]
          %v717 = vld [vmem:[%s580 + $0x8] sm:$0xf]
          %v718 = vld [vmem:[%s580 + $0xc] sm:$0xf]
          %v719 = vld [vmem:[%s580 + $0x10] sm:$0xf]
          %v720 = vld [vmem:[%s580 + $0x14] sm:$0xf]
          %v721 = vld [vmem:[%s580 + $0x18] sm:$0xf]
          %v722 = vld [vmem:[%s580 + $0x1c] sm:$0xf]
          %v723 = vld [vmem:[%s580 + $0x20] sm:$0xf]
          %v724 = vld [vmem:[%s580 + $0x24] sm:$0xf]
          %v725 = vld [vmem:[%s580 + $0x28] sm:$0xf]
          %v726 = vld [vmem:[%s580 + $0x2c] sm:$0xf]
          %v727 = vld [vmem:[%s580 + $0x30] sm:$0xf]
          %v728 = vld [vmem:[%s580 + $0x34] sm:$0xf]
          %v729 = vld [vmem:[%s580 + $0x38] sm:$0xf]
          %v730 = vld [vmem:[%s580 + $0x3c] sm:$0xf]
          %v731 = vld [vmem:[%s580 + $0x40] sm:$0xf]
          %v732 = vld [vmem:[%s580 + $0x44] sm:$0xf]
          %v733 = vld [vmem:[%s580 + $0x48] sm:$0xf]
          %v734 = vld [vmem:[%s580 + $0x4c] sm:$0xf]
          %v735 = vld [vmem:[%s580 + $0x50] sm:$0xf]
          %v736 = vld [vmem:[%s580 + $0x54] sm:$0xf]
          %v737 = vld [vmem:[%s580 + $0x58] sm:$0xf]
          %v738 = vld [vmem:[%s580 + $0x5c] sm:$0xf]
          %v739 = vld [vmem:[%s580 + $0x60] sm:$0xf]
          %v740 = vld [vmem:[%s580 + $0x64] sm:$0xf]
          %v741 = vld [vmem:[%s580 + $0x68] sm:$0xf]
          %v742 = vld [vmem:[%s580 + $0x6c] sm:$0xf]
          %v743 = vld [vmem:[%s580 + $0x70] sm:$0xf]
          %v744 = vld [vmem:[%s580 + $0x74] sm:$0xf]
          %v745 = vld [vmem:[%s580 + $0x78] sm:$0xf]
          %v746 = vld [vmem:[%s580 + $0x7c] sm:$0xf]
          %v779 = vunpack.c.l.b16 %v683
          %v780 = vunpack.c.h.b16 %v683
          %v781 = vunpack.c.l.b16 %v684
          %v782 = vunpack.c.h.b16 %v684
          %v783 = vunpack.c.l.b16 %v685
          %v784 = vunpack.c.h.b16 %v685
          %v785 = vunpack.c.l.b16 %v686
          %v786 = vunpack.c.h.b16 %v686
          %v787 = vunpack.c.l.b16 %v687
          %v788 = vunpack.c.h.b16 %v687
          %v789 = vunpack.c.l.b16 %v688
          %v790 = vunpack.c.h.b16 %v688
          %v791 = vunpack.c.l.b16 %v689
          %v792 = vunpack.c.h.b16 %v689
          %v793 = vunpack.c.l.b16 %v690
          %v794 = vunpack.c.h.b16 %v690
          %v795 = vunpack.c.l.b16 %v691
          %v796 = vunpack.c.h.b16 %v691
          %v797 = vunpack.c.l.b16 %v692
          %v798 = vunpack.c.h.b16 %v692
          %v799 = vunpack.c.l.b16 %v693
          %v800 = vunpack.c.h.b16 %v693
          %v801 = vunpack.c.l.b16 %v694
          %v802 = vunpack.c.h.b16 %v694
          %v803 = vunpack.c.l.b16 %v695
          %v804 = vunpack.c.h.b16 %v695
          %v805 = vunpack.c.l.b16 %v696
          %v806 = vunpack.c.h.b16 %v696
          %v807 = vunpack.c.l.b16 %v697
          %v808 = vunpack.c.h.b16 %v697
          %v809 = vunpack.c.l.b16 %v698
          %v810 = vunpack.c.h.b16 %v698
          %v811 = vunpack.c.l.b16 %v699
          %v812 = vunpack.c.h.b16 %v699
          %v813 = vunpack.c.l.b16 %v700
          %v814 = vunpack.c.h.b16 %v700
          %v815 = vunpack.c.l.b16 %v701
          %v816 = vunpack.c.h.b16 %v701
          %v817 = vunpack.c.l.b16 %v702
          %v818 = vunpack.c.h.b16 %v702
          %v819 = vunpack.c.l.b16 %v703
          %v820 = vunpack.c.h.b16 %v703
          %v821 = vunpack.c.l.b16 %v704
          %v822 = vunpack.c.h.b16 %v704
          %v823 = vunpack.c.l.b16 %v705
          %v824 = vunpack.c.h.b16 %v705
          %v825 = vunpack.c.l.b16 %v706
          %v826 = vunpack.c.h.b16 %v706
          %v827 = vunpack.c.l.b16 %v707
          %v828 = vunpack.c.h.b16 %v707
          %v829 = vunpack.c.l.b16 %v708
          %v830 = vunpack.c.h.b16 %v708
          %v831 = vunpack.c.l.b16 %v709
          %v832 = vunpack.c.h.b16 %v709
          %v833 = vunpack.c.l.b16 %v710
          %v834 = vunpack.c.h.b16 %v710
          %v835 = vunpack.c.l.b16 %v711
          %v836 = vunpack.c.h.b16 %v711
          %v837 = vunpack.c.l.b16 %v712
          %v838 = vunpack.c.h.b16 %v712
          %v839 = vunpack.c.l.b16 %v713
          %v840 = vunpack.c.h.b16 %v713
          %v841 = vunpack.c.l.b16 %v714
          %v842 = vunpack.c.h.b16 %v714
          %v843 = vpack.c.b16 %v781, %v779
          %v844 = vpack.c.b16 %v782, %v780
          %v845 = vpack.c.b16 %v785, %v783
          %v846 = vpack.c.b16 %v786, %v784
          %v847 = vpack.c.b16 %v789, %v787
          %v848 = vpack.c.b16 %v790, %v788
          %v849 = vpack.c.b16 %v793, %v791
          %v850 = vpack.c.b16 %v794, %v792
          %v851 = vpack.c.b16 %v797, %v795
          %v852 = vpack.c.b16 %v798, %v796
          %v853 = vpack.c.b16 %v801, %v799
          %v854 = vpack.c.b16 %v802, %v800
          %v855 = vpack.c.b16 %v805, %v803
          %v856 = vpack.c.b16 %v806, %v804
          %v857 = vpack.c.b16 %v809, %v807
          %v858 = vpack.c.b16 %v810, %v808
          %v859 = vpack.c.b16 %v813, %v811
          %v860 = vpack.c.b16 %v814, %v812
          %v861 = vpack.c.b16 %v817, %v815
          %v862 = vpack.c.b16 %v818, %v816
          %v863 = vpack.c.b16 %v821, %v819
          %v864 = vpack.c.b16 %v822, %v820
          %v865 = vpack.c.b16 %v825, %v823
          %v866 = vpack.c.b16 %v826, %v824
          %v867 = vpack.c.b16 %v829, %v827
          %v868 = vpack.c.b16 %v830, %v828
          %v869 = vpack.c.b16 %v833, %v831
          %v870 = vpack.c.b16 %v834, %v832
          %v871 = vpack.c.b16 %v837, %v835
          %v872 = vpack.c.b16 %v838, %v836
          %v873 = vpack.c.b16 %v841, %v839
          %v874 = vpack.c.b16 %v842, %v840
          %v939 = vunpack.c.l.b16 %v715
          %v940 = vunpack.c.l.b16 %v716
          %v941 = vunpack.c.l.b16 %v717
          %v942 = vunpack.c.l.b16 %v718
          %v943 = vunpack.c.l.b16 %v719
          %v944 = vunpack.c.l.b16 %v720
          %v945 = vunpack.c.l.b16 %v721
          %v946 = vunpack.c.l.b16 %v722
          %v947 = vunpack.c.l.b16 %v723
          %v948 = vunpack.c.l.b16 %v724
          %v949 = vunpack.c.l.b16 %v725
          %v950 = vunpack.c.l.b16 %v726
          %v951 = vunpack.c.l.b16 %v727
          %v952 = vunpack.c.l.b16 %v728
          %v953 = vunpack.c.l.b16 %v729
          %v954 = vunpack.c.l.b16 %v730
          %v955 = vunpack.c.l.b16 %v731
          %v956 = vunpack.c.l.b16 %v732
          %v957 = vunpack.c.l.b16 %v733
          %v958 = vunpack.c.l.b16 %v734
          %v959 = vunpack.c.l.b16 %v735
          %v960 = vunpack.c.l.b16 %v736
          %v961 = vunpack.c.l.b16 %v737
          %v962 = vunpack.c.l.b16 %v738
          %v963 = vunpack.c.l.b16 %v739
          %v964 = vunpack.c.l.b16 %v740
          %v965 = vunpack.c.l.b16 %v741
          %v966 = vunpack.c.l.b16 %v742
          %v967 = vunpack.c.l.b16 %v743
          %v968 = vunpack.c.l.b16 %v744
          %v969 = vunpack.c.l.b16 %v745
          %v970 = vunpack.c.l.b16 %v746
          %v971 = vpack.c.b16 %v940, %v939
          %v972 = vpack.c.b16 %v942, %v941
          %v973 = vpack.c.b16 %v944, %v943
          %v974 = vpack.c.b16 %v946, %v945
          %v975 = vpack.c.b16 %v948, %v947
          %v976 = vpack.c.b16 %v950, %v949
          %v977 = vpack.c.b16 %v952, %v951
          %v978 = vpack.c.b16 %v954, %v953
          %v979 = vpack.c.b16 %v956, %v955
          %v980 = vpack.c.b16 %v958, %v957
          %v981 = vpack.c.b16 %v960, %v959
          %v982 = vpack.c.b16 %v962, %v961
          %v983 = vpack.c.b16 %v964, %v963
          %v984 = vpack.c.b16 %v966, %v965
          %v985 = vpack.c.b16 %v968, %v967
          %v986 = vpack.c.b16 %v970, %v969
          %1003 = vmatprep.subr.bf16.mxu0 0
          %1004 = vmatpush1.bf16.msra.mxu0 %v978
          %1005 = vmatprep.subr.bf16.mxu0 0
          %1006 = vmatpush1.bf16.msra.mxu0 %v977
          %1007 = vmatprep.subr.bf16.mxu0 0
          %1008 = vmatpush1.bf16.msra.mxu0 %v976
          %1009 = vmatprep.subr.bf16.mxu0 0
          %1010 = vmatpush1.bf16.msra.mxu0 %v975
          %1011 = vmatprep.subr.bf16.mxu0 0
          %1012 = vmatpush1.bf16.msra.mxu0 %v974
          %1013 = vmatprep.subr.bf16.mxu0 0
          %1014 = vmatpush1.bf16.msra.mxu0 %v973
          %1015 = vmatprep.subr.bf16.mxu0 0
          %1016 = vmatpush1.bf16.msra.mxu0 %v972
          %1017 = vmatprep.subr.bf16.mxu0 0
          %1018 = vmatpush1.bf16.msra.mxu0 %v971
          %1019 = vmatprep.subr.bf16.mxu0 0
          %1020 = vmatpush2.bf16.msra.mxu0 %v986
          %1021 = vmatprep.subr.bf16.mxu0 0
          %1022 = vmatpush2.bf16.msra.mxu0 %v985
          %1023 = vmatprep.subr.bf16.mxu0 0
          %1024 = vmatpush2.bf16.msra.mxu0 %v984
          %1025 = vmatprep.subr.bf16.mxu0 0
          %1026 = vmatpush2.bf16.msra.mxu0 %v983
          %1027 = vmatprep.subr.bf16.mxu0 0
          %1028 = vmatpush2.bf16.msra.mxu0 %v982
          %1029 = vmatprep.subr.bf16.mxu0 0
          %1030 = vmatpush2.bf16.msra.mxu0 %v981
          %1031 = vmatprep.subr.bf16.mxu0 0
          %1032 = vmatpush2.bf16.msra.mxu0 %v980
          %1033 = vmatprep.subr.bf16.mxu0 0
          %1034 = vmatpush2.bf16.msra.mxu0 %v979
          %1035 = vmatprep.mubr.bf16.mxu0 %v844
          %1036 = vmatmul.mubr.bf16.gmra.mxu0 %v843
          %v1037 = vpop.f32.mrf.mxu0
          %v1038 = vadd.f32 0.0, %v1037
          %v1039 = vpop.f32.mrf.mxu0
          %v1040 = vpop.f32.mrf.mxu0
          %v1041 = vadd.f32 0.0, %v1040
          %v1042 = vpop.f32.mrf.mxu0
          %1043 = vmatprep.mubr.bf16.mxu0 %v846
          %1044 = vmatmul.mubr.bf16.gmra.mxu0 %v845
          %v1045 = vpop.f32.mrf.mxu0
          %v1046 = vadd.f32 0.0, %v1045
          %v1047 = vpop.f32.mrf.mxu0
          %v1048 = vpop.f32.mrf.mxu0
          %v1049 = vadd.f32 0.0, %v1048
          %v1050 = vpop.f32.mrf.mxu0
          %1051 = vmatprep.mubr.bf16.mxu0 %v848
          %1052 = vmatmul.mubr.bf16.gmra.mxu0 %v847
          %v1053 = vpop.f32.mrf.mxu0
          %v1054 = vadd.f32 0.0, %v1053
          %v1055 = vpop.f32.mrf.mxu0
          %v1056 = vpop.f32.mrf.mxu0
          %v1057 = vadd.f32 0.0, %v1056
          %v1058 = vpop.f32.mrf.mxu0
          %1059 = vmatprep.mubr.bf16.mxu0 %v850
          %1060 = vmatmul.mubr.bf16.gmra.mxu0 %v849
          %v1061 = vpop.f32.mrf.mxu0
          %v1062 = vadd.f32 0.0, %v1061
          %v1063 = vpop.f32.mrf.mxu0
          %v1064 = vpop.f32.mrf.mxu0
          %v1065 = vadd.f32 0.0, %v1064
          %v1066 = vpop.f32.mrf.mxu0
          %1067 = vmatprep.mubr.bf16.mxu0 %v852
          %1068 = vmatmul.mubr.bf16.gmra.mxu0 %v851
          %v1069 = vpop.f32.mrf.mxu0
          %v1070 = vadd.f32 0.0, %v1069
          %v1071 = vpop.f32.mrf.mxu0
          %v1072 = vpop.f32.mrf.mxu0
          %v1073 = vadd.f32 0.0, %v1072
          %v1074 = vpop.f32.mrf.mxu0
          %1075 = vmatprep.mubr.bf16.mxu0 %v854
          %1076 = vmatmul.mubr.bf16.gmra.mxu0 %v853
          %v1077 = vpop.f32.mrf.mxu0
          %v1078 = vadd.f32 0.0, %v1077
          %v1079 = vpop.f32.mrf.mxu0
          %v1080 = vpop.f32.mrf.mxu0
          %v1081 = vadd.f32 0.0, %v1080
          %v1082 = vpop.f32.mrf.mxu0
          %1083 = vmatprep.mubr.bf16.mxu0 %v856
          %1084 = vmatmul.mubr.bf16.gmra.mxu0 %v855
          %v1085 = vpop.f32.mrf.mxu0
          %v1086 = vadd.f32 0.0, %v1085
          %v1087 = vpop.f32.mrf.mxu0
          %v1088 = vpop.f32.mrf.mxu0
          %v1089 = vadd.f32 0.0, %v1088
          %v1090 = vpop.f32.mrf.mxu0
          %1091 = vmatprep.mubr.bf16.mxu0 %v858
          %1092 = vmatmul.mubr.bf16.gmra.mxu0 %v857
          %v1093 = vpop.f32.mrf.mxu0
          %v1094 = vadd.f32 0.0, %v1093
          %v1095 = vpop.f32.mrf.mxu0
          %v1096 = vpop.f32.mrf.mxu0
          %v1097 = vadd.f32 0.0, %v1096
          %v1098 = vpop.f32.mrf.mxu0
          %1099 = vmatprep.mubr.bf16.mxu0 %v860
          %1100 = vmatmul.mubr.bf16.gmra.mxu0 %v859
          %v1101 = vpop.f32.mrf.mxu0
          %v1102 = vadd.f32 0.0, %v1101
          %v1103 = vpop.f32.mrf.mxu0
          %v1104 = vpop.f32.mrf.mxu0
          %v1105 = vadd.f32 0.0, %v1104
          %v1106 = vpop.f32.mrf.mxu0
          %1107 = vmatprep.mubr.bf16.mxu0 %v862
          %1108 = vmatmul.mubr.bf16.gmra.mxu0 %v861
          %v1109 = vpop.f32.mrf.mxu0
          %v1110 = vadd.f32 0.0, %v1109
          %v1111 = vpop.f32.mrf.mxu0
          %v1112 = vpop.f32.mrf.mxu0
          %v1113 = vadd.f32 0.0, %v1112
          %v1114 = vpop.f32.mrf.mxu0
          %1115 = vmatprep.mubr.bf16.mxu0 %v864
          %1116 = vmatmul.mubr.bf16.gmra.mxu0 %v863
          %v1117 = vpop.f32.mrf.mxu0
          %v1118 = vadd.f32 0.0, %v1117
          %v1119 = vpop.f32.mrf.mxu0
          %v1120 = vpop.f32.mrf.mxu0
          %v1121 = vadd.f32 0.0, %v1120
          %v1122 = vpop.f32.mrf.mxu0
          %1123 = vmatprep.mubr.bf16.mxu0 %v866
          %1124 = vmatmul.mubr.bf16.gmra.mxu0 %v865
          %v1125 = vpop.f32.mrf.mxu0
          %v1126 = vadd.f32 0.0, %v1125
          %v1127 = vpop.f32.mrf.mxu0
          %v1128 = vpop.f32.mrf.mxu0
          %v1129 = vadd.f32 0.0, %v1128
          %v1130 = vpop.f32.mrf.mxu0
          %1131 = vmatprep.mubr.bf16.mxu0 %v868
          %1132 = vmatmul.mubr.bf16.gmra.mxu0 %v867
          %v1133 = vpop.f32.mrf.mxu0
          %v1134 = vadd.f32 0.0, %v1133
          %v1135 = vpop.f32.mrf.mxu0
          %v1136 = vpop.f32.mrf.mxu0
          %v1137 = vadd.f32 0.0, %v1136
          %v1138 = vpop.f32.mrf.mxu0
          %1139 = vmatprep.mubr.bf16.mxu0 %v870
          %1140 = vmatmul.mubr.bf16.gmra.mxu0 %v869
          %v1141 = vpop.f32.mrf.mxu0
          %v1142 = vadd.f32 0.0, %v1141
          %v1143 = vpop.f32.mrf.mxu0
          %v1144 = vpop.f32.mrf.mxu0
          %v1145 = vadd.f32 0.0, %v1144
          %v1146 = vpop.f32.mrf.mxu0
          %1147 = vmatprep.mubr.bf16.mxu0 %v872
          %1148 = vmatmul.mubr.bf16.gmra.mxu0 %v871
          %v1149 = vpop.f32.mrf.mxu0
          %v1150 = vadd.f32 0.0, %v1149
          %v1151 = vpop.f32.mrf.mxu0
          %v1152 = vpop.f32.mrf.mxu0
          %v1153 = vadd.f32 0.0, %v1152
          %v1154 = vpop.f32.mrf.mxu0
          %1155 = vmatprep.mubr.bf16.mxu0 %v874
          %1156 = vmatmul.mubr.bf16.gmra.mxu0 %v873
          %v1157 = vpop.f32.mrf.mxu0
          %v1158 = vadd.f32 0.0, %v1157
          %v1159 = vpop.f32.mrf.mxu0
          %v1160 = vpop.f32.mrf.mxu0
          %v1161 = vadd.f32 0.0, %v1160
          %v1162 = vpop.f32.mrf.mxu0
          %1163 = vdwg.mxu0
          %v1164 = vadd.f32 %v651, %v1038
          %v1165 = vadd.f32 %v652, %v1041
          %v1166 = vadd.f32 %v653, %v1046
          %v1167 = vadd.f32 %v654, %v1049
          %v1168 = vadd.f32 %v655, %v1054
          %v1169 = vadd.f32 %v656, %v1057
          %v1170 = vadd.f32 %v657, %v1062
          %v1171 = vadd.f32 %v658, %v1065
          %v1172 = vadd.f32 %v659, %v1070
          %v1173 = vadd.f32 %v660, %v1073
          %v1174 = vadd.f32 %v661, %v1078
          %v1175 = vadd.f32 %v662, %v1081
          %v1176 = vadd.f32 %v663, %v1086
          %v1177 = vadd.f32 %v664, %v1089
          %v1178 = vadd.f32 %v665, %v1094
          %v1179 = vadd.f32 %v666, %v1097
          %v1180 = vadd.f32 %v667, %v1102
          %v1181 = vadd.f32 %v668, %v1105
          %v1182 = vadd.f32 %v669, %v1110
          %v1183 = vadd.f32 %v670, %v1113
          %v1184 = vadd.f32 %v671, %v1118
          %v1185 = vadd.f32 %v672, %v1121
          %v1186 = vadd.f32 %v673, %v1126
          %v1187 = vadd.f32 %v674, %v1129
          %v1188 = vadd.f32 %v675, %v1134
          %v1189 = vadd.f32 %v676, %v1137
          %v1190 = vadd.f32 %v677, %v1142
          %v1191 = vadd.f32 %v678, %v1145
          %v1192 = vadd.f32 %v679, %v1150
          %v1193 = vadd.f32 %v680, %v1153
          %v1194 = vadd.f32 %v681, %v1158
          %v1195 = vadd.f32 %v682, %v1161
          %1196 = vst [vmem:[#allocation2] sm:$0xff] %v1164
          %1197 = vst [vmem:[#allocation2 + $0x8] sm:$0xff] %v1165
          %1198 = vst [vmem:[#allocation2 + $0x10] sm:$0xff] %v1166
          %1199 = vst [vmem:[#allocation2 + $0x18] sm:$0xff] %v1167
          %1200 = vst [vmem:[#allocation2 + $0x20] sm:$0xff] %v1168
          %1201 = vst [vmem:[#allocation2 + $0x28] sm:$0xff] %v1169
          %1202 = vst [vmem:[#allocation2 + $0x30] sm:$0xff] %v1170
          %1203 = vst [vmem:[#allocation2 + $0x38] sm:$0xff] %v1171
          %1204 = vst [vmem:[#allocation2 + $0x40] sm:$0xff] %v1172
          %1205 = vst [vmem:[#allocation2 + $0x48] sm:$0xff] %v1173
          %1206 = vst [vmem:[#allocation2 + $0x50] sm:$0xff] %v1174
          %1207 = vst [vmem:[#allocation2 + $0x58] sm:$0xff] %v1175
          %1208 = vst [vmem:[#allocation2 + $0x60] sm:$0xff] %v1176
          %1209 = vst [vmem:[#allocation2 + $0x68] sm:$0xff] %v1177
          %1210 = vst [vmem:[#allocation2 + $0x70] sm:$0xff] %v1178
          %1211 = vst [vmem:[#allocation2 + $0x78] sm:$0xff] %v1179
          %1212 = vst [vmem:[#allocation2 + $0x80] sm:$0xff] %v1180
          %1213 = vst [vmem:[#allocation2 + $0x88] sm:$0xff] %v1181
          %1214 = vst [vmem:[#allocation2 + $0x90] sm:$0xff] %v1182
          %1215 = vst [vmem:[#allocation2 + $0x98] sm:$0xff] %v1183
          %1216 = vst [vmem:[#allocation2 + $0xa0] sm:$0xff] %v1184
          %1217 = vst [vmem:[#allocation2 + $0xa8] sm:$0xff] %v1185
          %1218 = vst [vmem:[#allocation2 + $0xb0] sm:$0xff] %v1186
          %1219 = vst [vmem:[#allocation2 + $0xb8] sm:$0xff] %v1187
          %1220 = vst [vmem:[#allocation2 + $0xc0] sm:$0xff] %v1188
          %1221 = vst [vmem:[#allocation2 + $0xc8] sm:$0xff] %v1189
          %1222 = vst [vmem:[#allocation2 + $0xd0] sm:$0xff] %v1190
          %1223 = vst [vmem:[#allocation2 + $0xd8] sm:$0xff] %v1191
          %1224 = vst [vmem:[#allocation2 + $0xe0] sm:$0xff] %v1192
          %1225 = vst [vmem:[#allocation2 + $0xe8] sm:$0xff] %v1193
          %1226 = vst [vmem:[#allocation2 + $0xf0] sm:$0xff] %v1194
          %1227 = vst [vmem:[#allocation2 + $0xf8] sm:$0xff] %v1195
        $region90: #{sage_for_hetero_forward.11} parent=77 // pred_fallthru
          _
        %p1228 = scmp.eq.s32.totalorder %s34, 1
        // Predicated region
        $region91: #{sage_for_hetero_forward.11} parent=77 // pred_check
          %p1229 = pneg %p1228
        $region92: #{sage_for_hetero_forward.11} parent=77 // pred_check_branch
          %1231 = sbr.rel (%p1229) target = $region94
        $region93: #{sage_for_hetero_forward.11} parent=77 // pred_region
          %v1232 = vld [vmem:[%s595] sm:$0xf]
          %v1233 = vld [vmem:[%s595 + $0x4] sm:$0xf]
          %v1234 = vld [vmem:[%s595 + $0x8] sm:$0xf]
          %v1235 = vld [vmem:[%s595 + $0xc] sm:$0xf]
          %v1236 = vld [vmem:[%s595 + $0x10] sm:$0xf]
          %v1237 = vld [vmem:[%s595 + $0x14] sm:$0xf]
          %v1238 = vld [vmem:[%s595 + $0x18] sm:$0xf]
          %v1239 = vld [vmem:[%s595 + $0x1c] sm:$0xf]
          %v1240 = vld [vmem:[%s595 + $0x20] sm:$0xf]
          %v1241 = vld [vmem:[%s595 + $0x24] sm:$0xf]
          %v1242 = vld [vmem:[%s595 + $0x28] sm:$0xf]
          %v1243 = vld [vmem:[%s595 + $0x2c] sm:$0xf]
          %v1244 = vld [vmem:[%s595 + $0x30] sm:$0xf]
          %v1245 = vld [vmem:[%s595 + $0x34] sm:$0xf]
          %v1246 = vld [vmem:[%s595 + $0x38] sm:$0xf]
          %v1247 = vld [vmem:[%s595 + $0x3c] sm:$0xf]
          %v1248 = vld [vmem:[%s595 + $0x40] sm:$0xf]
          %v1249 = vld [vmem:[%s595 + $0x44] sm:$0xf]
          %v1250 = vld [vmem:[%s595 + $0x48] sm:$0xf]
          %v1251 = vld [vmem:[%s595 + $0x4c] sm:$0xf]
          %v1252 = vld [vmem:[%s595 + $0x50] sm:$0xf]
          %v1253 = vld [vmem:[%s595 + $0x54] sm:$0xf]
          %v1254 = vld [vmem:[%s595 + $0x58] sm:$0xf]
          %v1255 = vld [vmem:[%s595 + $0x5c] sm:$0xf]
          %v1256 = vld [vmem:[%s595 + $0x60] sm:$0xf]
          %v1257 = vld [vmem:[%s595 + $0x64] sm:$0xf]
          %v1258 = vld [vmem:[%s595 + $0x68] sm:$0xf]
          %v1259 = vld [vmem:[%s595 + $0x6c] sm:$0xf]
          %v1260 = vld [vmem:[%s595 + $0x70] sm:$0xf]
          %v1261 = vld [vmem:[%s595 + $0x74] sm:$0xf]
          %v1262 = vld [vmem:[%s595 + $0x78] sm:$0xf]
          %v1263 = vld [vmem:[%s595 + $0x7c] sm:$0xf]
          %v1264 = vld [vmem:[%s5] sm:$0xf]
          %v1265 = vld [vmem:[%s5 + $0x4] sm:$0xf]
          %v1266 = vld [vmem:[%s5 + $0x8] sm:$0xf]
          %v1267 = vld [vmem:[%s5 + $0xc] sm:$0xf]
          %v1268 = vld [vmem:[%s5 + $0x10] sm:$0xf]
          %v1269 = vld [vmem:[%s5 + $0x14] sm:$0xf]
          %v1270 = vld [vmem:[%s5 + $0x18] sm:$0xf]
          %v1271 = vld [vmem:[%s5 + $0x1c] sm:$0xf]
          %v1272 = vld [vmem:[%s5 + $0x20] sm:$0xf]
          %v1273 = vld [vmem:[%s5 + $0x24] sm:$0xf]
          %v1274 = vld [vmem:[%s5 + $0x28] sm:$0xf]
          %v1275 = vld [vmem:[%s5 + $0x2c] sm:$0xf]
          %v1276 = vld [vmem:[%s5 + $0x30] sm:$0xf]
          %v1277 = vld [vmem:[%s5 + $0x34] sm:$0xf]
          %v1278 = vld [vmem:[%s5 + $0x38] sm:$0xf]
          %v1279 = vld [vmem:[%s5 + $0x3c] sm:$0xf]
          %v1312 = vunpack.c.l.b16 %v1232
          %v1313 = vunpack.c.l.b16 %v1233
          %v1314 = vunpack.c.l.b16 %v1234
          %v1315 = vunpack.c.l.b16 %v1235
          %v1316 = vunpack.c.l.b16 %v1236
          %v1317 = vunpack.c.l.b16 %v1237
          %v1318 = vunpack.c.l.b16 %v1238
          %v1319 = vunpack.c.l.b16 %v1239
          %v1320 = vunpack.c.l.b16 %v1240
          %v1321 = vunpack.c.l.b16 %v1241
          %v1322 = vunpack.c.l.b16 %v1242
          %v1323 = vunpack.c.l.b16 %v1243
          %v1324 = vunpack.c.l.b16 %v1244
          %v1325 = vunpack.c.l.b16 %v1245
          %v1326 = vunpack.c.l.b16 %v1246
          %v1327 = vunpack.c.l.b16 %v1247
          %v1328 = vunpack.c.l.b16 %v1248
          %v1329 = vunpack.c.l.b16 %v1249
          %v1330 = vunpack.c.l.b16 %v1250
          %v1331 = vunpack.c.l.b16 %v1251
          %v1332 = vunpack.c.l.b16 %v1252
          %v1333 = vunpack.c.l.b16 %v1253
          %v1334 = vunpack.c.l.b16 %v1254
          %v1335 = vunpack.c.l.b16 %v1255
          %v1336 = vunpack.c.l.b16 %v1256
          %v1337 = vunpack.c.l.b16 %v1257
          %v1338 = vunpack.c.l.b16 %v1258
          %v1339 = vunpack.c.l.b16 %v1259
          %v1340 = vunpack.c.l.b16 %v1260
          %v1341 = vunpack.c.l.b16 %v1261
          %v1342 = vunpack.c.l.b16 %v1262
          %v1343 = vunpack.c.l.b16 %v1263
          %v1344 = vpack.c.b16 %v1313, %v1312
          %v1345 = vpack.c.b16 %v1315, %v1314
          %v1346 = vpack.c.b16 %v1317, %v1316
          %v1347 = vpack.c.b16 %v1319, %v1318
          %v1348 = vpack.c.b16 %v1321, %v1320
          %v1349 = vpack.c.b16 %v1323, %v1322
          %v1350 = vpack.c.b16 %v1325, %v1324
          %v1351 = vpack.c.b16 %v1327, %v1326
          %v1352 = vpack.c.b16 %v1329, %v1328
          %v1353 = vpack.c.b16 %v1331, %v1330
          %v1354 = vpack.c.b16 %v1333, %v1332
          %v1355 = vpack.c.b16 %v1335, %v1334
          %v1356 = vpack.c.b16 %v1337, %v1336
          %v1357 = vpack.c.b16 %v1339, %v1338
          %v1358 = vpack.c.b16 %v1341, %v1340
          %v1359 = vpack.c.b16 %v1343, %v1342
          %v1392 = vunpack.c.l.b16 %v1264
          %v1393 = vunpack.c.l.b16 %v1265
          %v1394 = vunpack.c.l.b16 %v1266
          %v1395 = vunpack.c.l.b16 %v1267
          %v1396 = vunpack.c.l.b16 %v1268
          %v1397 = vunpack.c.l.b16 %v1269
          %v1398 = vunpack.c.l.b16 %v1270
          %v1399 = vunpack.c.l.b16 %v1271
          %v1400 = vunpack.c.l.b16 %v1272
          %v1401 = vunpack.c.l.b16 %v1273
          %v1402 = vunpack.c.l.b16 %v1274
          %v1403 = vunpack.c.l.b16 %v1275
          %v1404 = vunpack.c.l.b16 %v1276
          %v1405 = vunpack.c.l.b16 %v1277
          %v1406 = vunpack.c.l.b16 %v1278
          %v1407 = vunpack.c.l.b16 %v1279
          %v1408 = vpack.c.b16 %v1393, %v1392
          %v1409 = vpack.c.b16 %v1395, %v1394
          %v1410 = vpack.c.b16 %v1397, %v1396
          %v1411 = vpack.c.b16 %v1399, %v1398
          %v1412 = vpack.c.b16 %v1401, %v1400
          %v1413 = vpack.c.b16 %v1403, %v1402
          %v1414 = vpack.c.b16 %v1405, %v1404
          %v1415 = vpack.c.b16 %v1407, %v1406
          %1424 = vmatprep.subr.bf16.mxu0 0
          %1425 = vmatpush1.bf16.msra.mxu0 %v1415
          %1426 = vmatprep.subr.bf16.mxu0 0
          %1427 = vmatpush1.bf16.msra.mxu0 %v1414
          %1428 = vmatprep.subr.bf16.mxu0 0
          %1429 = vmatpush1.bf16.msra.mxu0 %v1413
          %1430 = vmatprep.subr.bf16.mxu0 0
          %1431 = vmatpush1.bf16.msra.mxu0 %v1412
          %1432 = vmatprep.subr.bf16.mxu0 0
          %1433 = vmatpush1.bf16.msra.mxu0 %v1411
          %1434 = vmatprep.subr.bf16.mxu0 0
          %1435 = vmatpush1.bf16.msra.mxu0 %v1410
          %1436 = vmatprep.subr.bf16.mxu0 0
          %1437 = vmatpush1.bf16.msra.mxu0 %v1409
          %1438 = vmatprep.subr.bf16.mxu0 0
          %1439 = vmatpush1.bf16.msra.mxu0 %v1408
          %1440 = vmatprep.subr.bf16.mxu0 0
          %1441 = vmatpush2.bf16.msra.mxu0 0
          %1442 = vmatprep.subr.bf16.mxu0 0
          %1443 = vmatpush2.bf16.msra.mxu0 0
          %1444 = vmatprep.subr.bf16.mxu0 0
          %1445 = vmatpush2.bf16.msra.mxu0 0
          %1446 = vmatprep.subr.bf16.mxu0 0
          %1447 = vmatpush2.bf16.msra.mxu0 0
          %1448 = vmatprep.subr.bf16.mxu0 0
          %1449 = vmatpush2.bf16.msra.mxu0 0
          %1450 = vmatprep.subr.bf16.mxu0 0
          %1451 = vmatpush2.bf16.msra.mxu0 0
          %1452 = vmatprep.subr.bf16.mxu0 0
          %1453 = vmatpush2.bf16.msra.mxu0 0
          %1454 = vmatprep.subr.bf16.mxu0 0
          %1455 = vmatpush2.bf16.msra.mxu0 0
          %1456 = vmatprep.mubr.bf16.mxu0 0
          %1457 = vmatmul.mubr.bf16.gmra.mxu0 %v1344
          %v1458 = vpop.f32.mrf.mxu0
          %v1459 = vadd.f32 0.0, %v1458
          %v1460 = vpop.f32.mrf.mxu0
          %v1461 = vpop.f32.mrf.mxu0
          %v1462 = vadd.f32 0.0, %v1461
          %v1463 = vpop.f32.mrf.mxu0
          %1464 = vmatprep.mubr.bf16.mxu0 0
          %1465 = vmatmul.mubr.bf16.gmra.mxu0 %v1345
          %v1466 = vpop.f32.mrf.mxu0
          %v1467 = vadd.f32 0.0, %v1466
          %v1468 = vpop.f32.mrf.mxu0
          %v1469 = vpop.f32.mrf.mxu0
          %v1470 = vadd.f32 0.0, %v1469
          %v1471 = vpop.f32.mrf.mxu0
          %1472 = vmatprep.mubr.bf16.mxu0 0
          %1473 = vmatmul.mubr.bf16.gmra.mxu0 %v1346
          %v1474 = vpop.f32.mrf.mxu0
          %v1475 = vadd.f32 0.0, %v1474
          %v1476 = vpop.f32.mrf.mxu0
          %v1477 = vpop.f32.mrf.mxu0
          %v1478 = vadd.f32 0.0, %v1477
          %v1479 = vpop.f32.mrf.mxu0
          %1480 = vmatprep.mubr.bf16.mxu0 0
          %1481 = vmatmul.mubr.bf16.gmra.mxu0 %v1347
          %v1482 = vpop.f32.mrf.mxu0
          %v1483 = vadd.f32 0.0, %v1482
          %v1484 = vpop.f32.mrf.mxu0
          %v1485 = vpop.f32.mrf.mxu0
          %v1486 = vadd.f32 0.0, %v1485
          %v1487 = vpop.f32.mrf.mxu0
          %1488 = vmatprep.mubr.bf16.mxu0 0
          %1489 = vmatmul.mubr.bf16.gmra.mxu0 %v1348
          %v1490 = vpop.f32.mrf.mxu0
          %v1491 = vadd.f32 0.0, %v1490
          %v1492 = vpop.f32.mrf.mxu0
          %v1493 = vpop.f32.mrf.mxu0
          %v1494 = vadd.f32 0.0, %v1493
          %v1495 = vpop.f32.mrf.mxu0
          %1496 = vmatprep.mubr.bf16.mxu0 0
          %1497 = vmatmul.mubr.bf16.gmra.mxu0 %v1349
          %v1498 = vpop.f32.mrf.mxu0
          %v1499 = vadd.f32 0.0, %v1498
          %v1500 = vpop.f32.mrf.mxu0
          %v1501 = vpop.f32.mrf.mxu0
          %v1502 = vadd.f32 0.0, %v1501
          %v1503 = vpop.f32.mrf.mxu0
          %1504 = vmatprep.mubr.bf16.mxu0 0
          %1505 = vmatmul.mubr.bf16.gmra.mxu0 %v1350
          %v1506 = vpop.f32.mrf.mxu0
          %v1507 = vadd.f32 0.0, %v1506
          %v1508 = vpop.f32.mrf.mxu0
          %v1509 = vpop.f32.mrf.mxu0
          %v1510 = vadd.f32 0.0, %v1509
          %v1511 = vpop.f32.mrf.mxu0
          %1512 = vmatprep.mubr.bf16.mxu0 0
          %1513 = vmatmul.mubr.bf16.gmra.mxu0 %v1351
          %v1514 = vpop.f32.mrf.mxu0
          %v1515 = vadd.f32 0.0, %v1514
          %v1516 = vpop.f32.mrf.mxu0
          %v1517 = vpop.f32.mrf.mxu0
          %v1518 = vadd.f32 0.0, %v1517
          %v1519 = vpop.f32.mrf.mxu0
          %1520 = vmatprep.mubr.bf16.mxu0 0
          %1521 = vmatmul.mubr.bf16.gmra.mxu0 %v1352
          %v1522 = vpop.f32.mrf.mxu0
          %v1523 = vadd.f32 0.0, %v1522
          %v1524 = vpop.f32.mrf.mxu0
          %v1525 = vpop.f32.mrf.mxu0
          %v1526 = vadd.f32 0.0, %v1525
          %v1527 = vpop.f32.mrf.mxu0
          %1528 = vmatprep.mubr.bf16.mxu0 0
          %1529 = vmatmul.mubr.bf16.gmra.mxu0 %v1353
          %v1530 = vpop.f32.mrf.mxu0
          %v1531 = vadd.f32 0.0, %v1530
          %v1532 = vpop.f32.mrf.mxu0
          %v1533 = vpop.f32.mrf.mxu0
          %v1534 = vadd.f32 0.0, %v1533
          %v1535 = vpop.f32.mrf.mxu0
          %1536 = vmatprep.mubr.bf16.mxu0 0
          %1537 = vmatmul.mubr.bf16.gmra.mxu0 %v1354
          %v1538 = vpop.f32.mrf.mxu0
          %v1539 = vadd.f32 0.0, %v1538
          %v1540 = vpop.f32.mrf.mxu0
          %v1541 = vpop.f32.mrf.mxu0
          %v1542 = vadd.f32 0.0, %v1541
          %v1543 = vpop.f32.mrf.mxu0
          %1544 = vmatprep.mubr.bf16.mxu0 0
          %1545 = vmatmul.mubr.bf16.gmra.mxu0 %v1355
          %v1546 = vpop.f32.mrf.mxu0
          %v1547 = vadd.f32 0.0, %v1546
          %v1548 = vpop.f32.mrf.mxu0
          %v1549 = vpop.f32.mrf.mxu0
          %v1550 = vadd.f32 0.0, %v1549
          %v1551 = vpop.f32.mrf.mxu0
          %1552 = vmatprep.mubr.bf16.mxu0 0
          %1553 = vmatmul.mubr.bf16.gmra.mxu0 %v1356
          %v1554 = vpop.f32.mrf.mxu0
          %v1555 = vadd.f32 0.0, %v1554
          %v1556 = vpop.f32.mrf.mxu0
          %v1557 = vpop.f32.mrf.mxu0
          %v1558 = vadd.f32 0.0, %v1557
          %v1559 = vpop.f32.mrf.mxu0
          %1560 = vmatprep.mubr.bf16.mxu0 0
          %1561 = vmatmul.mubr.bf16.gmra.mxu0 %v1357
          %v1562 = vpop.f32.mrf.mxu0
          %v1563 = vadd.f32 0.0, %v1562
          %v1564 = vpop.f32.mrf.mxu0
          %v1565 = vpop.f32.mrf.mxu0
          %v1566 = vadd.f32 0.0, %v1565
          %v1567 = vpop.f32.mrf.mxu0
          %1568 = vmatprep.mubr.bf16.mxu0 0
          %1569 = vmatmul.mubr.bf16.gmra.mxu0 %v1358
          %v1570 = vpop.f32.mrf.mxu0
          %v1571 = vadd.f32 0.0, %v1570
          %v1572 = vpop.f32.mrf.mxu0
          %v1573 = vpop.f32.mrf.mxu0
          %v1574 = vadd.f32 0.0, %v1573
          %v1575 = vpop.f32.mrf.mxu0
          %1576 = vmatprep.mubr.bf16.mxu0 0
          %1577 = vmatmul.mubr.bf16.gmra.mxu0 %v1359
          %v1578 = vpop.f32.mrf.mxu0
          %v1579 = vadd.f32 0.0, %v1578
          %v1580 = vpop.f32.mrf.mxu0
          %v1581 = vpop.f32.mrf.mxu0
          %v1582 = vadd.f32 0.0, %v1581
          %v1583 = vpop.f32.mrf.mxu0
          %1584 = vdwg.mxu0
          %v1585 = vld [vmem:[#allocation2] sm:$0xff]
          %v1586 = vld [vmem:[#allocation2 + $0x8] sm:$0xff]
          %v1587 = vld [vmem:[#allocation2 + $0x10] sm:$0xff]
          %v1588 = vld [vmem:[#allocation2 + $0x18] sm:$0xff]
          %v1589 = vld [vmem:[#allocation2 + $0x20] sm:$0xff]
          %v1590 = vld [vmem:[#allocation2 + $0x28] sm:$0xff]
          %v1591 = vld [vmem:[#allocation2 + $0x30] sm:$0xff]
          %v1592 = vld [vmem:[#allocation2 + $0x38] sm:$0xff]
          %v1593 = vld [vmem:[#allocation2 + $0x40] sm:$0xff]
          %v1594 = vld [vmem:[#allocation2 + $0x48] sm:$0xff]
          %v1595 = vld [vmem:[#allocation2 + $0x50] sm:$0xff]
          %v1596 = vld [vmem:[#allocation2 + $0x58] sm:$0xff]
          %v1597 = vld [vmem:[#allocation2 + $0x60] sm:$0xff]
          %v1598 = vld [vmem:[#allocation2 + $0x68] sm:$0xff]
          %v1599 = vld [vmem:[#allocation2 + $0x70] sm:$0xff]
          %v1600 = vld [vmem:[#allocation2 + $0x78] sm:$0xff]
          %v1601 = vld [vmem:[#allocation2 + $0x80] sm:$0xff]
          %v1602 = vld [vmem:[#allocation2 + $0x88] sm:$0xff]
          %v1603 = vld [vmem:[#allocation2 + $0x90] sm:$0xff]
          %v1604 = vld [vmem:[#allocation2 + $0x98] sm:$0xff]
          %v1605 = vld [vmem:[#allocation2 + $0xa0] sm:$0xff]
          %v1606 = vld [vmem:[#allocation2 + $0xa8] sm:$0xff]
          %v1607 = vld [vmem:[#allocation2 + $0xb0] sm:$0xff]
          %v1608 = vld [vmem:[#allocation2 + $0xb8] sm:$0xff]
          %v1609 = vld [vmem:[#allocation2 + $0xc0] sm:$0xff]
          %v1610 = vld [vmem:[#allocation2 + $0xc8] sm:$0xff]
          %v1611 = vld [vmem:[#allocation2 + $0xd0] sm:$0xff]
          %v1612 = vld [vmem:[#allocation2 + $0xd8] sm:$0xff]
          %v1613 = vld [vmem:[#allocation2 + $0xe0] sm:$0xff]
          %v1614 = vld [vmem:[#allocation2 + $0xe8] sm:$0xff]
          %v1615 = vld [vmem:[#allocation2 + $0xf0] sm:$0xff]
          %v1616 = vld [vmem:[#allocation2 + $0xf8] sm:$0xff]
          %v1617 = vld [vmem:[%s601] sm:$0xff]
          %v1618 = vld [vmem:[%s601 + $0x8] sm:$0xff]
          %v1619 = vld [vmem:[%s601 + $0x10] sm:$0xff]
          %v1620 = vld [vmem:[%s601 + $0x18] sm:$0xff]
          %v1621 = vld [vmem:[%s601 + $0x20] sm:$0xff]
          %v1622 = vld [vmem:[%s601 + $0x28] sm:$0xff]
          %v1623 = vld [vmem:[%s601 + $0x30] sm:$0xff]
          %v1624 = vld [vmem:[%s601 + $0x38] sm:$0xff]
          %v1625 = vld [vmem:[%s601 + $0x40] sm:$0xff]
          %v1626 = vld [vmem:[%s601 + $0x48] sm:$0xff]
          %v1627 = vld [vmem:[%s601 + $0x50] sm:$0xff]
          %v1628 = vld [vmem:[%s601 + $0x58] sm:$0xff]
          %v1629 = vld [vmem:[%s601 + $0x60] sm:$0xff]
          %v1630 = vld [vmem:[%s601 + $0x68] sm:$0xff]
          %v1631 = vld [vmem:[%s601 + $0x70] sm:$0xff]
          %v1632 = vld [vmem:[%s601 + $0x78] sm:$0xff]
          %v1633 = vld [vmem:[%s601 + $0x80] sm:$0xff]
          %v1634 = vld [vmem:[%s601 + $0x88] sm:$0xff]
          %v1635 = vld [vmem:[%s601 + $0x90] sm:$0xff]
          %v1636 = vld [vmem:[%s601 + $0x98] sm:$0xff]
          %v1637 = vld [vmem:[%s601 + $0xa0] sm:$0xff]
          %v1638 = vld [vmem:[%s601 + $0xa8] sm:$0xff]
          %v1639 = vld [vmem:[%s601 + $0xb0] sm:$0xff]
          %v1640 = vld [vmem:[%s601 + $0xb8] sm:$0xff]
          %v1641 = vld [vmem:[%s601 + $0xc0] sm:$0xff]
          %v1642 = vld [vmem:[%s601 + $0xc8] sm:$0xff]
          %v1643 = vld [vmem:[%s601 + $0xd0] sm:$0xff]
          %v1644 = vld [vmem:[%s601 + $0xd8] sm:$0xff]
          %v1645 = vld [vmem:[%s601 + $0xe0] sm:$0xff]
          %v1646 = vld [vmem:[%s601 + $0xe8] sm:$0xff]
          %v1647 = vld [vmem:[%s601 + $0xf0] sm:$0xff]
          %v1648 = vld [vmem:[%s601 + $0xf8] sm:$0xff]
          %1650 = vset.pattern.permute.xlu0 0
          %1651 = vperm.xlu0 %1650, %v1617
          %v1652 = vpop.permute.xlu0 %1651
          %1655 = vset.pattern.permute.xlu0 0
          %1656 = vperm.xlu0 %1655, %v1618
          %v1657 = vpop.permute.xlu0 %1656
          %1660 = vset.pattern.permute.xlu0 0
          %1661 = vperm.xlu0 %1660, %v1619
          %v1662 = vpop.permute.xlu0 %1661
          %1665 = vset.pattern.permute.xlu0 0
          %1666 = vperm.xlu0 %1665, %v1620
          %v1667 = vpop.permute.xlu0 %1666
          %1670 = vset.pattern.permute.xlu0 0
          %1671 = vperm.xlu0 %1670, %v1621
          %v1672 = vpop.permute.xlu0 %1671
          %1675 = vset.pattern.permute.xlu0 0
          %1676 = vperm.xlu0 %1675, %v1622
          %v1677 = vpop.permute.xlu0 %1676
          %1680 = vset.pattern.permute.xlu0 0
          %1681 = vperm.xlu0 %1680, %v1623
          %v1682 = vpop.permute.xlu0 %1681
          %1685 = vset.pattern.permute.xlu0 0
          %1686 = vperm.xlu0 %1685, %v1624
          %v1687 = vpop.permute.xlu0 %1686
          %1690 = vset.pattern.permute.xlu0 0
          %1691 = vperm.xlu0 %1690, %v1625
          %v1692 = vpop.permute.xlu0 %1691
          %1695 = vset.pattern.permute.xlu0 0
          %1696 = vperm.xlu0 %1695, %v1626
          %v1697 = vpop.permute.xlu0 %1696
          %1700 = vset.pattern.permute.xlu0 0
          %1701 = vperm.xlu0 %1700, %v1627
          %v1702 = vpop.permute.xlu0 %1701
          %1705 = vset.pattern.permute.xlu0 0
          %1706 = vperm.xlu0 %1705, %v1628
          %v1707 = vpop.permute.xlu0 %1706
          %1710 = vset.pattern.permute.xlu0 0
          %1711 = vperm.xlu0 %1710, %v1629
          %v1712 = vpop.permute.xlu0 %1711
          %1715 = vset.pattern.permute.xlu0 0
          %1716 = vperm.xlu0 %1715, %v1630
          %v1717 = vpop.permute.xlu0 %1716
          %1720 = vset.pattern.permute.xlu0 0
          %1721 = vperm.xlu0 %1720, %v1631
          %v1722 = vpop.permute.xlu0 %1721
          %1725 = vset.pattern.permute.xlu0 0
          %1726 = vperm.xlu0 %1725, %v1632
          %v1727 = vpop.permute.xlu0 %1726
          %1730 = vset.pattern.permute.xlu0 0
          %1731 = vperm.xlu0 %1730, %v1633
          %v1732 = vpop.permute.xlu0 %1731
          %1735 = vset.pattern.permute.xlu0 0
          %1736 = vperm.xlu0 %1735, %v1634
          %v1737 = vpop.permute.xlu0 %1736
          %1740 = vset.pattern.permute.xlu0 0
          %1741 = vperm.xlu0 %1740, %v1635
          %v1742 = vpop.permute.xlu0 %1741
          %1745 = vset.pattern.permute.xlu0 0
          %1746 = vperm.xlu0 %1745, %v1636
          %v1747 = vpop.permute.xlu0 %1746
          %1750 = vset.pattern.permute.xlu0 0
          %1751 = vperm.xlu0 %1750, %v1637
          %v1752 = vpop.permute.xlu0 %1751
          %1755 = vset.pattern.permute.xlu0 0
          %1756 = vperm.xlu0 %1755, %v1638
          %v1757 = vpop.permute.xlu0 %1756
          %1760 = vset.pattern.permute.xlu0 0
          %1761 = vperm.xlu0 %1760, %v1639
          %v1762 = vpop.permute.xlu0 %1761
          %1765 = vset.pattern.permute.xlu0 0
          %1766 = vperm.xlu0 %1765, %v1640
          %v1767 = vpop.permute.xlu0 %1766
          %1770 = vset.pattern.permute.xlu0 0
          %1771 = vperm.xlu0 %1770, %v1641
          %v1772 = vpop.permute.xlu0 %1771
          %1775 = vset.pattern.permute.xlu0 0
          %1776 = vperm.xlu0 %1775, %v1642
          %v1777 = vpop.permute.xlu0 %1776
          %1780 = vset.pattern.permute.xlu0 0
          %1781 = vperm.xlu0 %1780, %v1643
          %v1782 = vpop.permute.xlu0 %1781
          %1785 = vset.pattern.permute.xlu0 0
          %1786 = vperm.xlu0 %1785, %v1644
          %v1787 = vpop.permute.xlu0 %1786
          %1790 = vset.pattern.permute.xlu0 0
          %1791 = vperm.xlu0 %1790, %v1645
          %v1792 = vpop.permute.xlu0 %1791
          %1795 = vset.pattern.permute.xlu0 0
          %1796 = vperm.xlu0 %1795, %v1646
          %v1797 = vpop.permute.xlu0 %1796
          %1800 = vset.pattern.permute.xlu0 0
          %1801 = vperm.xlu0 %1800, %v1647
          %v1802 = vpop.permute.xlu0 %1801
          %1805 = vset.pattern.permute.xlu0 0
          %1806 = vperm.xlu0 %1805, %v1648
          %v1807 = vpop.permute.xlu0 %1806
          %v1809 = vmul.f32 %v1585, %v1652
          %v1810 = vmul.f32 %v1586, %v1657
          %v1811 = vmul.f32 %v1587, %v1662
          %v1812 = vmul.f32 %v1588, %v1667
          %v1813 = vmul.f32 %v1589, %v1672
          %v1814 = vmul.f32 %v1590, %v1677
          %v1815 = vmul.f32 %v1591, %v1682
          %v1816 = vmul.f32 %v1592, %v1687
          %v1817 = vmul.f32 %v1593, %v1692
          %v1818 = vmul.f32 %v1594, %v1697
          %v1819 = vmul.f32 %v1595, %v1702
          %v1820 = vmul.f32 %v1596, %v1707
          %v1821 = vmul.f32 %v1597, %v1712
          %v1822 = vmul.f32 %v1598, %v1717
          %v1823 = vmul.f32 %v1599, %v1722
          %v1824 = vmul.f32 %v1600, %v1727
          %v1825 = vmul.f32 %v1601, %v1732
          %v1826 = vmul.f32 %v1602, %v1737
          %v1827 = vmul.f32 %v1603, %v1742
          %v1828 = vmul.f32 %v1604, %v1747
          %v1829 = vmul.f32 %v1605, %v1752
          %v1830 = vmul.f32 %v1606, %v1757
          %v1831 = vmul.f32 %v1607, %v1762
          %v1832 = vmul.f32 %v1608, %v1767
          %v1833 = vmul.f32 %v1609, %v1772
          %v1834 = vmul.f32 %v1610, %v1777
          %v1835 = vmul.f32 %v1611, %v1782
          %v1836 = vmul.f32 %v1612, %v1787
          %v1837 = vmul.f32 %v1613, %v1792
          %v1838 = vmul.f32 %v1614, %v1797
          %v1839 = vmul.f32 %v1615, %v1802
          %v1840 = vmul.f32 %v1616, %v1807
          %v1841 = vadd.f32 %v1809, %v1459
          %v1842 = vadd.f32 %v1810, %v1462
          %v1843 = vadd.f32 %v1811, %v1467
          %v1844 = vadd.f32 %v1812, %v1470
          %v1845 = vadd.f32 %v1813, %v1475
          %v1846 = vadd.f32 %v1814, %v1478
          %v1847 = vadd.f32 %v1815, %v1483
          %v1848 = vadd.f32 %v1816, %v1486
          %v1849 = vadd.f32 %v1817, %v1491
          %v1850 = vadd.f32 %v1818, %v1494
          %v1851 = vadd.f32 %v1819, %v1499
          %v1852 = vadd.f32 %v1820, %v1502
          %v1853 = vadd.f32 %v1821, %v1507
          %v1854 = vadd.f32 %v1822, %v1510
          %v1855 = vadd.f32 %v1823, %v1515
          %v1856 = vadd.f32 %v1824, %v1518
          %v1857 = vadd.f32 %v1825, %v1523
          %v1858 = vadd.f32 %v1826, %v1526
          %v1859 = vadd.f32 %v1827, %v1531
          %v1860 = vadd.f32 %v1828, %v1534
          %v1861 = vadd.f32 %v1829, %v1539
          %v1862 = vadd.f32 %v1830, %v1542
          %v1863 = vadd.f32 %v1831, %v1547
          %v1864 = vadd.f32 %v1832, %v1550
          %v1865 = vadd.f32 %v1833, %v1555
          %v1866 = vadd.f32 %v1834, %v1558
          %v1867 = vadd.f32 %v1835, %v1563
          %v1868 = vadd.f32 %v1836, %v1566
          %v1869 = vadd.f32 %v1837, %v1571
          %v1870 = vadd.f32 %v1838, %v1574
          %v1871 = vadd.f32 %v1839, %v1579
          %v1872 = vadd.f32 %v1840, %v1582
          %v1873 = vld [vmem:[%s6] sm:$0x1]
          %v1875 = vlaneseq
          %v1876 = vshrl.u32 %v1875, 7
          %v1877 = vsub.s32 0, %v1876
          %v1878 = vrot.slane %v1873, %v1877
          %v1880 = vadd.f32 %v1841, %v1878
          %v1881 = vadd.f32 %v1842, %v1878
          %v1882 = vadd.f32 %v1843, %v1878
          %v1883 = vadd.f32 %v1844, %v1878
          %v1884 = vadd.f32 %v1845, %v1878
          %v1885 = vadd.f32 %v1846, %v1878
          %v1886 = vadd.f32 %v1847, %v1878
          %v1887 = vadd.f32 %v1848, %v1878
          %v1888 = vadd.f32 %v1849, %v1878
          %v1889 = vadd.f32 %v1850, %v1878
          %v1890 = vadd.f32 %v1851, %v1878
          %v1891 = vadd.f32 %v1852, %v1878
          %v1892 = vadd.f32 %v1853, %v1878
          %v1893 = vadd.f32 %v1854, %v1878
          %v1894 = vadd.f32 %v1855, %v1878
          %v1895 = vadd.f32 %v1856, %v1878
          %v1896 = vadd.f32 %v1857, %v1878
          %v1897 = vadd.f32 %v1858, %v1878
          %v1898 = vadd.f32 %v1859, %v1878
          %v1899 = vadd.f32 %v1860, %v1878
          %v1900 = vadd.f32 %v1861, %v1878
          %v1901 = vadd.f32 %v1862, %v1878
          %v1902 = vadd.f32 %v1863, %v1878
          %v1903 = vadd.f32 %v1864, %v1878
          %v1904 = vadd.f32 %v1865, %v1878
          %v1905 = vadd.f32 %v1866, %v1878
          %v1906 = vadd.f32 %v1867, %v1878
          %v1907 = vadd.f32 %v1868, %v1878
          %v1908 = vadd.f32 %v1869, %v1878
          %v1909 = vadd.f32 %v1870, %v1878
          %v1910 = vadd.f32 %v1871, %v1878
          %v1911 = vadd.f32 %v1872, %v1878
          %1912 = vst [vmem:[%s607] sm:$0xff] %v1880
          %1913 = vst [vmem:[%s607 + $0x8] sm:$0xff] %v1881
          %1914 = vst [vmem:[%s607 + $0x10] sm:$0xff] %v1882
          %1915 = vst [vmem:[%s607 + $0x18] sm:$0xff] %v1883
          %1916 = vst [vmem:[%s607 + $0x20] sm:$0xff] %v1884
          %1917 = vst [vmem:[%s607 + $0x28] sm:$0xff] %v1885
          %1918 = vst [vmem:[%s607 + $0x30] sm:$0xff] %v1886
          %1919 = vst [vmem:[%s607 + $0x38] sm:$0xff] %v1887
          %1920 = vst [vmem:[%s607 + $0x40] sm:$0xff] %v1888
          %1921 = vst [vmem:[%s607 + $0x48] sm:$0xff] %v1889
          %1922 = vst [vmem:[%s607 + $0x50] sm:$0xff] %v1890
          %1923 = vst [vmem:[%s607 + $0x58] sm:$0xff] %v1891
          %1924 = vst [vmem:[%s607 + $0x60] sm:$0xff] %v1892
          %1925 = vst [vmem:[%s607 + $0x68] sm:$0xff] %v1893
          %1926 = vst [vmem:[%s607 + $0x70] sm:$0xff] %v1894
          %1927 = vst [vmem:[%s607 + $0x78] sm:$0xff] %v1895
          %1928 = vst [vmem:[%s607 + $0x80] sm:$0xff] %v1896
          %1929 = vst [vmem:[%s607 + $0x88] sm:$0xff] %v1897
          %1930 = vst [vmem:[%s607 + $0x90] sm:$0xff] %v1898
          %1931 = vst [vmem:[%s607 + $0x98] sm:$0xff] %v1899
          %1932 = vst [vmem:[%s607 + $0xa0] sm:$0xff] %v1900
          %1933 = vst [vmem:[%s607 + $0xa8] sm:$0xff] %v1901
          %1934 = vst [vmem:[%s607 + $0xb0] sm:$0xff] %v1902
          %1935 = vst [vmem:[%s607 + $0xb8] sm:$0xff] %v1903
          %1936 = vst [vmem:[%s607 + $0xc0] sm:$0xff] %v1904
          %1937 = vst [vmem:[%s607 + $0xc8] sm:$0xff] %v1905
          %1938 = vst [vmem:[%s607 + $0xd0] sm:$0xff] %v1906
          %1939 = vst [vmem:[%s607 + $0xd8] sm:$0xff] %v1907
          %1940 = vst [vmem:[%s607 + $0xe0] sm:$0xff] %v1908
          %1941 = vst [vmem:[%s607 + $0xe8] sm:$0xff] %v1909
          %1942 = vst [vmem:[%s607 + $0xf0] sm:$0xff] %v1910
          %1943 = vst [vmem:[%s607 + $0xf8] sm:$0xff] %v1911
        $region94: #{sage_for_hetero_forward.11} parent=77 // pred_fallthru
          _
        %s1944 = smul.u32 32, %s33
        %p1945 = scmp.lt.s32.totalorder %s1944, 63
        %s1946 = scalar_select %p1945, %s1944, 63
        %s1947 = smul.addr %s1946, 8
        %s1948 = scalar_lea.vmem %s8, %s1947
        // Predicated region
        $region95: #{sage_for_hetero_forward.11} parent=77 // pred_check
          %p1949 = pneg %p243
        $region96: #{sage_for_hetero_forward.11} parent=77 // pred_check_branch
          %1951 = sbr.rel (%p1949) target = $region98
        $region97: #{sage_for_hetero_forward.11} parent=77 // pred_region
          %s1952 = smul.u32 32, %s33
        $region98: #{sage_for_hetero_forward.11} parent=77 // pred_fallthru
          _
      $region78: #{sage_for_hetero_forward.11} parent=5 // pred_fallthru
        _
      %p1953 = scmp.le.s32.totalorder 2, %s24
      // Predicated region
      $region99: #{sage_for_hetero_forward.11} parent=5 // pred_check
        %p1954 = pneg %p1953
      $region100: #{sage_for_hetero_forward.11} parent=5 // pred_check_branch
        %1956 = sbr.rel (%p1954) target = $region102
      $region101: #{sage_for_hetero_forward.11} parent=5 // pred_region
        %s1957 = ssub.s32 %s24, 2
        // Predicated region
        $region103: #{sage_for_hetero_forward.11} parent=101 // pred_check
          %p1958 = pneg %p249
        $region104: #{sage_for_hetero_forward.11} parent=101 // pred_check_branch
          %1960 = sbr.rel (%p1958) target = $region106
        $region105: #{sage_for_hetero_forward.11} parent=101 // pred_region
          %s1961 = smul.u32 32, %s35
          %p1962 = scmp.lt.s32.totalorder %s1961, 63
          %s1963 = scalar_select %p1962, %s1961, 63
          %s1964 = smul.addr %s1963, 8
          %s1965 = scalar_lea.vmem %s8, %s1964
        $region106: #{sage_for_hetero_forward.11} parent=101 // pred_fallthru
          _
      $region102: #{sage_for_hetero_forward.11} parent=5 // pred_fallthru
        _
    $region6: #{sage_for_hetero_forward.11} parent=1 // loop_footer
      %s28 = sadd.s32 1, %s24
    $region7: #{sage_for_hetero_forward.11} parent=1 // loop_footer_branch
      %23 = sbr.rel target = $region3
    $region8: #{sage_for_hetero_forward.11} parent=1 // loop_exit
      _

// kernel: sage_for_hetero_forward.7
$region0: #{sage_for_hetero_forward.7}
  #allocation0 [shape = 'u32[]', space=smem, size = 0x4, offset = 0x4, fixed_abs, tag = 'smem constant byte address 0x4 - core index']
  #allocation1 [shape = 'u32[144,128]{1,0:T(1,128)}', space=vmem, size = 0x12000, scoped, tag = 'internal scratch']
  #allocation2 [shape = 'f32[256,128]{1,0:T(8,128)}', space=vmem, size = 0x20000, scoped, tag = 'scratch operand']
  #allocation3 [shape = 's32[1]{0}', space=sflag, size = 0x4, scoped, tag = 'scoped memory for sage_for_hetero_forward.7']
  #allocation4 [shape = 'u8[512]{0}', space=smem, size = 0x200, scoped, tag = 'prefetched SMEM operand 0']
  #allocation5 [shape = 'u8[512]{0}', space=smem, size = 0x200, scoped, tag = 'prefetched SMEM operand 1']
  %s0 = inlined_call_operand.vmem [shape: s32[4], index: 0, kind: input, shape index: {}]
  %s1 = inlined_call_operand.vmem [shape: s32[2], index: 1, kind: input, shape index: {}]
  %s2 = inlined_call_operand.vmem [shape: bf16[512,512], index: 2, kind: input, shape index: {}]
  %s3 = inlined_call_operand.vmem [shape: bf16[512,128], index: 3, kind: input, shape index: {}]
  %s4 = inlined_call_operand.vmem [shape: bf16[512,128], index: 4, kind: input, shape index: {}]
  %s5 = inlined_call_operand.vmem [shape: bf16[128,128], index: 5, kind: input, shape index: {}]
  %s6 = inlined_call_operand.vmem [shape: f32[1,128], index: 6, kind: input, shape index: {}]
  %s7 = inlined_call_operand.vmem [shape: f32[512,1], index: 7, kind: input, shape index: {}]
  %s8 = inlined_call_operand.vmem [shape: bf16[512,128], index: 8, kind: output, shape index: {}]
  %s9 = sld [smem:[#allocation0]]
  $region107: #{sage_for_hetero_forward.7} parent=0
    _
  %s11 = ssub.s32 1, %s9
  %s12 = scalar_select 0, %s11, %s9
  %s13 = sshll.u32 %s0, 4
  %s14 = int_to_ptr.vmem [resolvable:$true] %s13
  %16 = dma.vmem_to_smem %s14, 16, [#allocation4], [#allocation3]
  %s17 = sshll.u32 %s1, 4
  %s18 = int_to_ptr.vmem [resolvable:$true] %s17
  %20 = dma.vmem_to_smem %s18, 16, [#allocation5], [#allocation3]
  %21 = dma.done [#allocation3], 32
  %22 = sfence
  $region1: #{sage_for_hetero_forward.7} parent=0
    #allocation6 [shape = 'u8[262144]{0}', space=vmem, size = 0x40000, scoped, tag = 'input window, operand 2']
    loop: start=0, step=1, limit=6
    $region2: #{sage_for_hetero_forward.7} parent=1 // loop_pre_header
      _
    $region3: #{sage_for_hetero_forward.7} parent=1 // loop_header
      %s24 = sphi 0, %s28
      %p25 = scmp.ge.s32.totalorder %s24, 6
      %s31 = sphi 0, %s43
      %s32 = sphi 0, %s39
      %s33 = sphi 0, %s31
      %s34 = sphi 0, %s32
      %s35 = sphi 0, %s33
      %s36 = sphi 0, %s34
      %s66 = sphi 0, %s68
      %s69 = sphi 0, %s66
      %s70 = sphi 0, %s69
      %s86 = sphi 0, %s70
      %s110 = sphi 0, %s112
      %s113 = sphi 0, %s110
      %s114 = sphi 0, %s113
      %s130 = sphi 0, %s114
      %s136 = sphi 0, %s138
      %s139 = sphi 0, %s136
      %s140 = sphi 0, %s139
      %s156 = sphi 0, %s140
      %s160 = sphi 0, %s160
      %s162 = sphi 0, %s160
      %s163 = sphi 0, %s162
      %s177 = sphi 0, %s163
      %s181 = sphi 0, %s181
      %s183 = sphi 0, %s181
      %s184 = sphi 0, %s183
      %s198 = sphi 0, %s184
      %s204 = sphi 0, %s206
      %s207 = sphi 0, %s204
      %s208 = sphi 0, %s207
      %s224 = sphi 0, %s208
      %s230 = sphi 0, %s232
      %s233 = sphi 0, %s230
      %s234 = sphi 0, %s233
      %s250 = sphi 0, %s234
    $region4: #{sage_for_hetero_forward.7} parent=1 // loop_header_branch
      %27 = sbr.rel (%p25) target = $region8
    $region5: #{sage_for_hetero_forward.7} parent=1 // loop_body
      %s29 = ssub.s32 %s24, 1
      %s30 = ssub.s32 %s24, 2
      %s37 = sadd.s32 1, %s32
      %p38 = scmp.ge.s32.totalorder %s37, 2
      %s39 = scalar_select %p38, 0, %s37
      %s40 = sadd.s32 1, %s31
      %s41 = scalar_select %p38, %s40, %s31
      %p42 = scmp.ge.s32.totalorder %s41, 2
      %s43 = scalar_select %p42, 0, %s41
      %s44 = sld [smem:[#allocation5 + %s31]]
      %s45 = ssub.s32 %s44, 1
      %p46 = scmp.gt.s32.totalorder %s45, 0
      %s47 = scalar_select %p46, %s45, 0
      %p48 = scmp.lt.s32.totalorder %s32, %s47
      %s49 = scalar_select %p48, %s32, %s47
      %s50 = smul.u32 %s31, 2
      %s51 = sadd.s32 %s50, %s49
      %s52 = sld [smem:[#allocation4 + %s51]]
      %s53 = sld [smem:[#allocation5 + %s43]]
      %s54 = ssub.s32 %s53, 1
      %p55 = scmp.gt.s32.totalorder %s54, 0
      %s56 = scalar_select %p55, %s54, 0
      %p57 = scmp.lt.s32.totalorder %s39, %s56
      %s58 = scalar_select %p57, %s39, %s56
      %s59 = smul.u32 %s43, 2
      %s60 = sadd.s32 %s59, %s58
      %s61 = sld [smem:[#allocation4 + %s60]]
      %s62 = ssub.s32 %s31, %s43
      %s63 = ssub.s32 %s52, %s61
      %s64 = sor.u32 %s62, %s63
      %p65 = scmp.eq.s32.totalorder %s64, 0
      %s67 = sadd.s32 %s66, 1
      %s68 = scalar_select %p65, %s66, %s67
      %p71 = pneg %p65
      %p72 = scmp.eq.s32.totalorder %s24, 3
      %p73 = por %p71, %p72
      %p74 = scmp.ne.s32.totalorder %s66, %s69
      %p75 = scmp.eq.s32.totalorder %s24, 0
      %p76 = por %p74, %p75
      %p77 = scmp.ne.s32.totalorder %s66, %s69
      %p78 = scmp.eq.s32.totalorder %s29, 3
      %p79 = por %p77, %p78
      %p80 = scmp.ne.s32.totalorder %s69, %s70
      %p81 = scmp.eq.s32.totalorder %s29, 0
      %p82 = por %p80, %p81
      %p83 = scmp.ne.s32.totalorder %s69, %s70
      %p84 = scmp.eq.s32.totalorder %s30, 3
      %p85 = por %p83, %p84
      %p87 = scmp.ne.s32.totalorder %s70, %s86
      %p88 = scmp.eq.s32.totalorder %s30, 0
      %p89 = por %p87, %p88
      %s90 = sld [smem:[#allocation5 + %s31]]
      %s91 = ssub.s32 %s90, 1
      %p92 = scmp.gt.s32.totalorder %s91, 0
      %s93 = scalar_select %p92, %s91, 0
      %p94 = scmp.lt.s32.totalorder %s32, %s93
      %s95 = scalar_select %p94, %s32, %s93
      %s96 = smul.u32 %s31, 2
      %s97 = sadd.s32 %s96, %s95
      %s98 = sld [smem:[#allocation4 + %s97]]
      %s99 = sld [smem:[#allocation5 + %s43]]
      %s100 = ssub.s32 %s99, 1
      %p101 = scmp.gt.s32.totalorder %s100, 0
      %s102 = scalar_select %p101, %s100, 0
      %p103 = scmp.lt.s32.totalorder %s39, %s102
      %s104 = scalar_select %p103, %s39, %s102
      %s105 = smul.u32 %s43, 2
      %s106 = sadd.s32 %s105, %s104
      %s107 = sld [smem:[#allocation4 + %s106]]
      %s108 = ssub.s32 %s98, %s107
      %p109 = scmp.eq.s32.totalorder %s108, 0
      %s111 = sadd.s32 %s110, 1
      %s112 = scalar_select %p109, %s110, %s111
      %p115 = pneg %p109
      %p116 = scmp.eq.s32.totalorder %s24, 3
      %p117 = por %p115, %p116
      %p118 = scmp.ne.s32.totalorder %s110, %s113
      %p119 = scmp.eq.s32.totalorder %s24, 0
      %p120 = por %p118, %p119
      %p121 = scmp.ne.s32.totalorder %s110, %s113
      %p122 = scmp.eq.s32.totalorder %s29, 3
      %p123 = por %p121, %p122
      %p124 = scmp.ne.s32.totalorder %s113, %s114
      %p125 = scmp.eq.s32.totalorder %s29, 0
      %p126 = por %p124, %p125
      %p127 = scmp.ne.s32.totalorder %s113, %s114
      %p128 = scmp.eq.s32.totalorder %s30, 3
      %p129 = por %p127, %p128
      %p131 = scmp.ne.s32.totalorder %s114, %s130
      %p132 = scmp.eq.s32.totalorder %s30, 0
      %p133 = por %p131, %p132
      %s134 = ssub.s32 %s31, %s43
      %p135 = scmp.eq.s32.totalorder %s134, 0
      %s137 = sadd.s32 %s136, 1
      %s138 = scalar_select %p135, %s136, %s137
      %p141 = pneg %p135
      %p142 = scmp.eq.s32.totalorder %s24, 3
      %p143 = por %p141, %p142
      %p144 = scmp.ne.s32.totalorder %s136, %s139
      %p145 = scmp.eq.s32.totalorder %s24, 0
      %p146 = por %p144, %p145
      %p147 = scmp.ne.s32.totalorder %s136, %s139
      %p148 = scmp.eq.s32.totalorder %s29, 3
      %p149 = por %p147, %p148
      %p150 = scmp.ne.s32.totalorder %s139, %s140
      %p151 = scmp.eq.s32.totalorder %s29, 0
      %p152 = por %p150, %p151
      %p153 = scmp.ne.s32.totalorder %s139, %s140
      %p154 = scmp.eq.s32.totalorder %s30, 3
      %p155 = por %p153, %p154
      %p157 = scmp.ne.s32.totalorder %s140, %s156
      %p158 = scmp.eq.s32.totalorder %s30, 0
      %p159 = por %p157, %p158
      %s161 = sadd.s32 %s160, 1
      %p164 = scmp.eq.s32.totalorder %s24, 3
      %p165 = scmp.ne.s32.totalorder %s160, %s162
      %p166 = scmp.eq.s32.totalorder %s24, 0
      %p167 = por %p165, %p166
      %p168 = scmp.ne.s32.totalorder %s160, %s162
      %p169 = scmp.eq.s32.totalorder %s29, 3
      %p170 = por %p168, %p169
      %p171 = scmp.ne.s32.totalorder %s162, %s163
      %p172 = scmp.eq.s32.totalorder %s29, 0
      %p173 = por %p171, %p172
      %p174 = scmp.ne.s32.totalorder %s162, %s163
      %p175 = scmp.eq.s32.totalorder %s30, 3
      %p176 = por %p174, %p175
      %p178 = scmp.ne.s32.totalorder %s163, %s177
      %p179 = scmp.eq.s32.totalorder %s30, 0
      %p180 = por %p178, %p179
      %s182 = sadd.s32 %s181, 1
      %p185 = scmp.eq.s32.totalorder %s24, 3
      %p186 = scmp.ne.s32.totalorder %s181, %s183
      %p187 = scmp.eq.s32.totalorder %s24, 0
      %p188 = por %p186, %p187
      %p189 = scmp.ne.s32.totalorder %s181, %s183
      %p190 = scmp.eq.s32.totalorder %s29, 3
      %p191 = por %p189, %p190
      %p192 = scmp.ne.s32.totalorder %s183, %s184
      %p193 = scmp.eq.s32.totalorder %s29, 0
      %p194 = por %p192, %p193
      %p195 = scmp.ne.s32.totalorder %s183, %s184
      %p196 = scmp.eq.s32.totalorder %s30, 3
      %p197 = por %p195, %p196
      %p199 = scmp.ne.s32.totalorder %s184, %s198
      %p200 = scmp.eq.s32.totalorder %s30, 0
      %p201 = por %p199, %p200
      %s202 = ssub.s32 %s31, %s43
      %p203 = scmp.eq.s32.totalorder %s202, 0
      %s205 = sadd.s32 %s204, 1
      %s206 = scalar_select %p203, %s204, %s205
      %p209 = pneg %p203
      %p210 = scmp.eq.s32.totalorder %s24, 3
      %p211 = por %p209, %p210
      %p212 = scmp.ne.s32.totalorder %s204, %s207
      %p213 = scmp.eq.s32.totalorder %s24, 0
      %p214 = por %p212, %p213
      %p215 = scmp.ne.s32.totalorder %s204, %s207
      %p216 = scmp.eq.s32.totalorder %s29, 3
      %p217 = por %p215, %p216
      %p218 = scmp.ne.s32.totalorder %s207, %s208
      %p219 = scmp.eq.s32.totalorder %s29, 0
      %p220 = por %p218, %p219
      %p221 = scmp.ne.s32.totalorder %s207, %s208
      %p222 = scmp.eq.s32.totalorder %s30, 3
      %p223 = por %p221, %p222
      %p225 = scmp.ne.s32.totalorder %s208, %s224
      %p226 = scmp.eq.s32.totalorder %s30, 0
      %p227 = por %p225, %p226
      %s228 = ssub.s32 %s31, %s43
      %p229 = scmp.eq.s32.totalorder %s228, 0
      %s231 = sadd.s32 %s230, 1
      %s232 = scalar_select %p229, %s230, %s231
      %p235 = pneg %p229
      %p236 = scmp.eq.s32.totalorder %s24, 3
      %p237 = por %p235, %p236
      %p238 = scmp.ne.s32.totalorder %s230, %s233
      %p239 = scmp.eq.s32.totalorder %s24, 0
      %p240 = por %p238, %p239
      %p241 = scmp.ne.s32.totalorder %s230, %s233
      %p242 = scmp.eq.s32.totalorder %s29, 3
      %p243 = por %p241, %p242
      %p244 = scmp.ne.s32.totalorder %s233, %s234
      %p245 = scmp.eq.s32.totalorder %s29, 0
      %p246 = por %p244, %p245
      %p247 = scmp.ne.s32.totalorder %s233, %s234
      %p248 = scmp.eq.s32.totalorder %s30, 3
      %p249 = por %p247, %p248
      %p251 = scmp.ne.s32.totalorder %s234, %s250
      %p252 = scmp.eq.s32.totalorder %s30, 0
      %p253 = por %p251, %p252
      %p254 = scmp.le.s32.totalorder 1, %s24
      %p255 = scmp.lt.s32.totalorder %s24, 5
      %p256 = pnand %p254, %p255
      %p257 = pneg %p256
      // Predicated region
      $region9: #{sage_for_hetero_forward.7} parent=5 // pred_check
        _
      $region10: #{sage_for_hetero_forward.7} parent=5 // pred_check_branch
        %259 = sbr.rel (%p256) target = $region12
      $region11: #{sage_for_hetero_forward.7} parent=5 // pred_region
        %s260 = ssub.s32 %s24, 1
        // Predicated region
        $region13: #{sage_for_hetero_forward.7} parent=11 // pred_check
          %p261 = pneg %p173
        $region14: #{sage_for_hetero_forward.7} parent=11 // pred_check_branch
          %263 = sbr.rel (%p261) target = $region16
        $region15: #{sage_for_hetero_forward.7} parent=11 // pred_region
          _
        $region16: #{sage_for_hetero_forward.7} parent=11 // pred_fallthru
          _
        // Predicated region
        $region17: #{sage_for_hetero_forward.7} parent=11 // pred_check
          %p264 = pneg %p194
        $region18: #{sage_for_hetero_forward.7} parent=11 // pred_check_branch
          %266 = sbr.rel (%p264) target = $region20
        $region19: #{sage_for_hetero_forward.7} parent=11 // pred_region
          _
        $region20: #{sage_for_hetero_forward.7} parent=11 // pred_fallthru
          _
      $region12: #{sage_for_hetero_forward.7} parent=5 // pred_fallthru
        _
      %p267 = scmp.lt.s32.totalorder %s24, 4
      // Predicated region
      $region21: #{sage_for_hetero_forward.7} parent=5 // pred_check
        %p268 = pneg %p267
      $region22: #{sage_for_hetero_forward.7} parent=5 // pred_check_branch
        %270 = sbr.rel (%p268) target = $region24
      $region23: #{sage_for_hetero_forward.7} parent=5 // pred_region
        // Predicated region
        $region25: #{sage_for_hetero_forward.7} parent=23 // pred_check
          %p271 = pneg %p76
        $region26: #{sage_for_hetero_forward.7} parent=23 // pred_check_branch
          %273 = sbr.rel (%p271) target = $region28
        $region27: #{sage_for_hetero_forward.7} parent=23 // pred_region
          %s274 = sand.u32 %s66, 1
          %s275 = sand.u32 %s66, 1
          %s276 = smul.addr %s275, 256
          %s277 = scalar_lea.vmem [#allocation6], %s276
          %s278 = sld [smem:[#allocation5 + %s31]]
          %s279 = ssub.s32 %s278, 1
          %p280 = scmp.gt.s32.totalorder %s279, 0
          %s281 = scalar_select %p280, %s279, 0
          %p282 = scmp.lt.s32.totalorder %s32, %s281
          %s283 = scalar_select %p282, %s32, %s281
          %s284 = smul.u32 %s31, 2
          %s285 = sadd.s32 %s284, %s283
          %s286 = sld [smem:[#allocation4 + %s285]]
          %s287 = smul.u32 32, %s31
          %s288 = smul.u32 2, %s286
          %s289 = smul.addr %s287, 4
          %s290 = sadd.s32 %s288, %s289
          %s291 = smul.addr %s290, 4
          %s292 = scalar_lea.vmem %s2, %s291
          // Predicated region
          $region29: #{sage_for_hetero_forward.7} parent=27 // pred_check
            _
          $region30: #{sage_for_hetero_forward.7} parent=27 // pred_check_branch
            %294 = sbr.rel (0) target = $region32
          $region31: #{sage_for_hetero_forward.7} parent=27 // pred_region
            // Predicated region
            $region33: #{sage_for_hetero_forward.7} parent=31 // pred_check
              _
            $region34: #{sage_for_hetero_forward.7} parent=31 // pred_check_branch
              %296 = sbr.rel (0) target = $region36
            $region35: #{sage_for_hetero_forward.7} parent=31 // pred_region
              // Predicated region
              $region48: #{sage_for_hetero_forward.7} parent=35 // pred_check
                _
              $region49: #{sage_for_hetero_forward.7} parent=35 // pred_check_branch
                %374 = sbr.rel (0) target = $region51
              $region50: #{sage_for_hetero_forward.7} parent=35 // pred_region
                loop: start=0, step=1, limit=1
                $region52: #{sage_for_hetero_forward.7} parent=50 // loop_pre_header
                  _
                $region53: #{sage_for_hetero_forward.7} parent=50 // loop_header
                  %s376 = sphi 0, %s380
                  %p377 = scmp.ge.s32.totalorder %s376, 1
                  %s381 = sphi %s292, %s292
                  %s382 = sphi %s277, %s277
                $region54: #{sage_for_hetero_forward.7} parent=50 // loop_header_branch
                  %379 = sbr.rel (%p377) target = $region58
                $region55: #{sage_for_hetero_forward.7} parent=50 // loop_body
                  %v383 = vld [vmem:[%s381] sm:$0xff]
                  %384 = vst [vmem:[%s382] sm:$0xff] %v383
                  %v385 = vld [vmem:[%s381 + $0x10] sm:$0xff]
                  %386 = vst [vmem:[%s382 + $0x8] sm:$0xff] %v385
                  %v387 = vld [vmem:[%s381 + $0x20] sm:$0xff]
                  %388 = vst [vmem:[%s382 + $0x10] sm:$0xff] %v387
                  %v389 = vld [vmem:[%s381 + $0x30] sm:$0xff]
                  %390 = vst [vmem:[%s382 + $0x18] sm:$0xff] %v389
                  %v391 = vld [vmem:[%s381 + $0x40] sm:$0xff]
                  %392 = vst [vmem:[%s382 + $0x20] sm:$0xff] %v391
                  %v393 = vld [vmem:[%s381 + $0x50] sm:$0xff]
                  %394 = vst [vmem:[%s382 + $0x28] sm:$0xff] %v393
                  %v395 = vld [vmem:[%s381 + $0x60] sm:$0xff]
                  %396 = vst [vmem:[%s382 + $0x30] sm:$0xff] %v395
                  %v397 = vld [vmem:[%s381 + $0x70] sm:$0xff]
                  %398 = vst [vmem:[%s382 + $0x38] sm:$0xff] %v397
                  %v399 = vld [vmem:[%s381 + $0x80] sm:$0xff]
                  %400 = vst [vmem:[%s382 + $0x40] sm:$0xff] %v399
                  %v401 = vld [vmem:[%s381 + $0x90] sm:$0xff]
                  %402 = vst [vmem:[%s382 + $0x48] sm:$0xff] %v401
                  %v403 = vld [vmem:[%s381 + $0xa0] sm:$0xff]
                  %404 = vst [vmem:[%s382 + $0x50] sm:$0xff] %v403
                  %v405 = vld [vmem:[%s381 + $0xb0] sm:$0xff]
                  %406 = vst [vmem:[%s382 + $0x58] sm:$0xff] %v405
                  %v407 = vld [vmem:[%s381 + $0xc0] sm:$0xff]
                  %408 = vst [vmem:[%s382 + $0x60] sm:$0xff] %v407
                  %v409 = vld [vmem:[%s381 + $0xd0] sm:$0xff]
                  %410 = vst [vmem:[%s382 + $0x68] sm:$0xff] %v409
                  %v411 = vld [vmem:[%s381 + $0xe0] sm:$0xff]
                  %412 = vst [vmem:[%s382 + $0x70] sm:$0xff] %v411
                  %v413 = vld [vmem:[%s381 + $0xf0] sm:$0xff]
                  %414 = vst [vmem:[%s382 + $0x78] sm:$0xff] %v413
                  %v415 = vld [vmem:[%s381 + $0x100] sm:$0xff]
                  %416 = vst [vmem:[%s382 + $0x80] sm:$0xff] %v415
                  %v417 = vld [vmem:[%s381 + $0x110] sm:$0xff]
                  %418 = vst [vmem:[%s382 + $0x88] sm:$0xff] %v417
                  %v419 = vld [vmem:[%s381 + $0x120] sm:$0xff]
                  %420 = vst [vmem:[%s382 + $0x90] sm:$0xff] %v419
                  %v421 = vld [vmem:[%s381 + $0x130] sm:$0xff]
                  %422 = vst [vmem:[%s382 + $0x98] sm:$0xff] %v421
                  %v423 = vld [vmem:[%s381 + $0x140] sm:$0xff]
                  %424 = vst [vmem:[%s382 + $0xa0] sm:$0xff] %v423
                  %v425 = vld [vmem:[%s381 + $0x150] sm:$0xff]
                  %426 = vst [vmem:[%s382 + $0xa8] sm:$0xff] %v425
                  %v427 = vld [vmem:[%s381 + $0x160] sm:$0xff]
                  %428 = vst [vmem:[%s382 + $0xb0] sm:$0xff] %v427
                  %v429 = vld [vmem:[%s381 + $0x170] sm:$0xff]
                  %430 = vst [vmem:[%s382 + $0xb8] sm:$0xff] %v429
                  %v431 = vld [vmem:[%s381 + $0x180] sm:$0xff]
                  %432 = vst [vmem:[%s382 + $0xc0] sm:$0xff] %v431
                  %v433 = vld [vmem:[%s381 + $0x190] sm:$0xff]
                  %434 = vst [vmem:[%s382 + $0xc8] sm:$0xff] %v433
                  %v435 = vld [vmem:[%s381 + $0x1a0] sm:$0xff]
                  %436 = vst [vmem:[%s382 + $0xd0] sm:$0xff] %v435
                  %v437 = vld [vmem:[%s381 + $0x1b0] sm:$0xff]
                  %438 = vst [vmem:[%s382 + $0xd8] sm:$0xff] %v437
                  %v439 = vld [vmem:[%s381 + $0x1c0] sm:$0xff]
                  %440 = vst [vmem:[%s382 + $0xe0] sm:$0xff] %v439
                  %v441 = vld [vmem:[%s381 + $0x1d0] sm:$0xff]
                  %442 = vst [vmem:[%s382 + $0xe8] sm:$0xff] %v441
                  %v443 = vld [vmem:[%s381 + $0x1e0] sm:$0xff]
                  %444 = vst [vmem:[%s382 + $0xf0] sm:$0xff] %v443
                  %v445 = vld [vmem:[%s381 + $0x1f0] sm:$0xff]
                  %446 = vst [vmem:[%s382 + $0xf8] sm:$0xff] %v445
                $region56: #{sage_for_hetero_forward.7} parent=50 // loop_footer
                  %s380 = sadd.s32 1, %s376
                $region57: #{sage_for_hetero_forward.7} parent=50 // loop_footer_branch
                  %375 = sbr.rel target = $region53
                $region58: #{sage_for_hetero_forward.7} parent=50 // loop_exit
                  _
              $region51: #{sage_for_hetero_forward.7} parent=35 // pred_fallthru
                _
              // Predicated region
              $region59: #{sage_for_hetero_forward.7} parent=35 // pred_check
                _
              $region60: #{sage_for_hetero_forward.7} parent=35 // pred_check_branch
                %448 = sbr.rel target = $region62
              $region61: #{sage_for_hetero_forward.7} parent=35 // pred_region
                _
              $region62: #{sage_for_hetero_forward.7} parent=35 // pred_fallthru
                _
            $region36: #{sage_for_hetero_forward.7} parent=31 // pred_fallthru
              _
            // Predicated region
            $region37: #{sage_for_hetero_forward.7} parent=31 // pred_check
              _
            $region38: #{sage_for_hetero_forward.7} parent=31 // pred_check_branch
              %298 = sbr.rel target = $region40
            $region39: #{sage_for_hetero_forward.7} parent=31 // pred_region
              %s300 = ssub.s32 256, 1
              loop: start=0, step=1, limit=1
              $region41: #{sage_for_hetero_forward.7} parent=39 // loop_pre_header
                _
              $region42: #{sage_for_hetero_forward.7} parent=39 // loop_header
                %s302 = sphi 0, %s306
                %p303 = scmp.ge.s32.totalorder %s302, 1
                %s307 = sphi %s292, %s292
                %s308 = sphi %s277, %s277
              $region43: #{sage_for_hetero_forward.7} parent=39 // loop_header_branch
                %305 = sbr.rel (%p303) target = $region47
              $region44: #{sage_for_hetero_forward.7} parent=39 // loop_body
                %v309 = vld [vmem:[%s307] sm:%s300]
                %310 = vst [vmem:[%s308] sm:%s300] %v309
                %v311 = vld [vmem:[%s307 + $0x10] sm:%s300]
                %312 = vst [vmem:[%s308 + $0x8] sm:%s300] %v311
                %v313 = vld [vmem:[%s307 + $0x20] sm:%s300]
                %314 = vst [vmem:[%s308 + $0x10] sm:%s300] %v313
                %v315 = vld [vmem:[%s307 + $0x30] sm:%s300]
                %316 = vst [vmem:[%s308 + $0x18] sm:%s300] %v315
                %v317 = vld [vmem:[%s307 + $0x40] sm:%s300]
                %318 = vst [vmem:[%s308 + $0x20] sm:%s300] %v317
                %v319 = vld [vmem:[%s307 + $0x50] sm:%s300]
                %320 = vst [vmem:[%s308 + $0x28] sm:%s300] %v319
                %v321 = vld [vmem:[%s307 + $0x60] sm:%s300]
                %322 = vst [vmem:[%s308 + $0x30] sm:%s300] %v321
                %v323 = vld [vmem:[%s307 + $0x70] sm:%s300]
                %324 = vst [vmem:[%s308 + $0x38] sm:%s300] %v323
                %v325 = vld [vmem:[%s307 + $0x80] sm:%s300]
                %326 = vst [vmem:[%s308 + $0x40] sm:%s300] %v325
                %v327 = vld [vmem:[%s307 + $0x90] sm:%s300]
                %328 = vst [vmem:[%s308 + $0x48] sm:%s300] %v327
                %v329 = vld [vmem:[%s307 + $0xa0] sm:%s300]
                %330 = vst [vmem:[%s308 + $0x50] sm:%s300] %v329
                %v331 = vld [vmem:[%s307 + $0xb0] sm:%s300]
                %332 = vst [vmem:[%s308 + $0x58] sm:%s300] %v331
                %v333 = vld [vmem:[%s307 + $0xc0] sm:%s300]
                %334 = vst [vmem:[%s308 + $0x60] sm:%s300] %v333
                %v335 = vld [vmem:[%s307 + $0xd0] sm:%s300]
                %336 = vst [vmem:[%s308 + $0x68] sm:%s300] %v335
                %v337 = vld [vmem:[%s307 + $0xe0] sm:%s300]
                %338 = vst [vmem:[%s308 + $0x70] sm:%s300] %v337
                %v339 = vld [vmem:[%s307 + $0xf0] sm:%s300]
                %340 = vst [vmem:[%s308 + $0x78] sm:%s300] %v339
                %v341 = vld [vmem:[%s307 + $0x100] sm:%s300]
                %342 = vst [vmem:[%s308 + $0x80] sm:%s300] %v341
                %v343 = vld [vmem:[%s307 + $0x110] sm:%s300]
                %344 = vst [vmem:[%s308 + $0x88] sm:%s300] %v343
                %v345 = vld [vmem:[%s307 + $0x120] sm:%s300]
                %346 = vst [vmem:[%s308 + $0x90] sm:%s300] %v345
                %v347 = vld [vmem:[%s307 + $0x130] sm:%s300]
                %348 = vst [vmem:[%s308 + $0x98] sm:%s300] %v347
                %v349 = vld [vmem:[%s307 + $0x140] sm:%s300]
                %350 = vst [vmem:[%s308 + $0xa0] sm:%s300] %v349
                %v351 = vld [vmem:[%s307 + $0x150] sm:%s300]
                %352 = vst [vmem:[%s308 + $0xa8] sm:%s300] %v351
                %v353 = vld [vmem:[%s307 + $0x160] sm:%s300]
                %354 = vst [vmem:[%s308 + $0xb0] sm:%s300] %v353
                %v355 = vld [vmem:[%s307 + $0x170] sm:%s300]
                %356 = vst [vmem:[%s308 + $0xb8] sm:%s300] %v355
                %v357 = vld [vmem:[%s307 + $0x180] sm:%s300]
                %358 = vst [vmem:[%s308 + $0xc0] sm:%s300] %v357
                %v359 = vld [vmem:[%s307 + $0x190] sm:%s300]
                %360 = vst [vmem:[%s308 + $0xc8] sm:%s300] %v359
                %v361 = vld [vmem:[%s307 + $0x1a0] sm:%s300]
                %362 = vst [vmem:[%s308 + $0xd0] sm:%s300] %v361
                %v363 = vld [vmem:[%s307 + $0x1b0] sm:%s300]
                %364 = vst [vmem:[%s308 + $0xd8] sm:%s300] %v363
                %v365 = vld [vmem:[%s307 + $0x1c0] sm:%s300]
                %366 = vst [vmem:[%s308 + $0xe0] sm:%s300] %v365
                %v367 = vld [vmem:[%s307 + $0x1d0] sm:%s300]
                %368 = vst [vmem:[%s308 + $0xe8] sm:%s300] %v367
                %v369 = vld [vmem:[%s307 + $0x1e0] sm:%s300]
                %370 = vst [vmem:[%s308 + $0xf0] sm:%s300] %v369
                %v371 = vld [vmem:[%s307 + $0x1f0] sm:%s300]
                %372 = vst [vmem:[%s308 + $0xf8] sm:%s300] %v371
              $region45: #{sage_for_hetero_forward.7} parent=39 // loop_footer
                %s306 = sadd.s32 1, %s302
              $region46: #{sage_for_hetero_forward.7} parent=39 // loop_footer_branch
                %301 = sbr.rel target = $region42
              $region47: #{sage_for_hetero_forward.7} parent=39 // loop_exit
                _
            $region40: #{sage_for_hetero_forward.7} parent=31 // pred_fallthru
              _
          $region32: #{sage_for_hetero_forward.7} parent=27 // pred_fallthru
            _
          %449 = vnop
        $region28: #{sage_for_hetero_forward.7} parent=23 // pred_fallthru
          _
        // Predicated region
        $region63: #{sage_for_hetero_forward.7} parent=23 // pred_check
          %p450 = pneg %p120
        $region64: #{sage_for_hetero_forward.7} parent=23 // pred_check_branch
          %452 = sbr.rel (%p450) target = $region66
        $region65: #{sage_for_hetero_forward.7} parent=23 // pred_region
          %s453 = sld [smem:[#allocation5 + %s31]]
          %s454 = ssub.s32 %s453, 1
          %p455 = scmp.gt.s32.totalorder %s454, 0
          %s456 = scalar_select %p455, %s454, 0
          %p457 = scmp.lt.s32.totalorder %s32, %s456
          %s458 = scalar_select %p457, %s32, %s456
          %s459 = smul.u32 %s31, 2
          %s460 = sadd.s32 %s459, %s458
          %s461 = sld [smem:[#allocation4 + %s460]]
          %s462 = smul.u32 32, %s461
          %p463 = scmp.lt.s32.totalorder %s462, 63
          %s464 = scalar_select %p463, %s462, 63
          %s465 = smul.addr %s464, 4
          %s466 = scalar_lea.vmem %s3, %s465
          %s467 = sld [smem:[#allocation5 + %s31]]
          %s468 = ssub.s32 %s467, 1
          %p469 = scmp.gt.s32.totalorder %s468, 0
          %s470 = scalar_select %p469, %s468, 0
          %p471 = scmp.lt.s32.totalorder %s32, %s470
          %s472 = scalar_select %p471, %s32, %s470
          %s473 = smul.u32 %s31, 2
          %s474 = sadd.s32 %s473, %s472
          %s475 = sld [smem:[#allocation4 + %s474]]
          %s476 = smul.u32 32, %s475
        $region66: #{sage_for_hetero_forward.7} parent=23 // pred_fallthru
          _
        // Predicated region
        $region67: #{sage_for_hetero_forward.7} parent=23 // pred_check
          %p477 = pneg %p146
        $region68: #{sage_for_hetero_forward.7} parent=23 // pred_check_branch
          %479 = sbr.rel (%p477) target = $region70
        $region69: #{sage_for_hetero_forward.7} parent=23 // pred_region
          %s480 = smul.u32 32, %s31
          %p481 = scmp.lt.s32.totalorder %s480, 63
          %s482 = scalar_select %p481, %s480, 63
          %s483 = smul.addr %s482, 4
          %s484 = scalar_lea.vmem %s4, %s483
          %s485 = smul.u32 32, %s31
        $region70: #{sage_for_hetero_forward.7} parent=23 // pred_fallthru
          _
        // Predicated region
        $region71: #{sage_for_hetero_forward.7} parent=23 // pred_check
          %p486 = pneg %p214
        $region72: #{sage_for_hetero_forward.7} parent=23 // pred_check_branch
          %488 = sbr.rel (%p486) target = $region74
        $region73: #{sage_for_hetero_forward.7} parent=23 // pred_region
          %s489 = smul.u32 32, %s31
          %p490 = scmp.lt.s32.totalorder %s489, 63
          %s491 = scalar_select %p490, %s489, 63
          %s492 = smul.addr %s491, 8
          %s493 = scalar_lea.vmem %s7, %s492
          %s494 = smul.u32 32, %s31
        $region74: #{sage_for_hetero_forward.7} parent=23 // pred_fallthru
          _
      $region24: #{sage_for_hetero_forward.7} parent=5 // pred_fallthru
        _
      %p495 = scmp.le.s32.totalorder 1, %s24
      %p496 = scmp.lt.s32.totalorder %s24, 5
      %p497 = pnand %p495, %p496
      %p498 = pneg %p497
      // Predicated region
      $region75: #{sage_for_hetero_forward.7} parent=5 // pred_check
        _
      $region76: #{sage_for_hetero_forward.7} parent=5 // pred_check_branch
        %500 = sbr.rel (%p497) target = $region78
      $region77: #{sage_for_hetero_forward.7} parent=5 // pred_region
        %s501 = ssub.s32 %s24, 1
        %s502 = sand.u32 %s69, 1
        %s503 = sand.u32 %s69, 1
        %s504 = smul.addr %s503, 256
        %s505 = scalar_lea.vmem [#allocation6], %s504
        // Predicated region
        $region79: #{sage_for_hetero_forward.7} parent=77 // pred_check
          %p506 = pneg %p82
        $region80: #{sage_for_hetero_forward.7} parent=77 // pred_check_branch
          %508 = sbr.rel (%p506) target = $region82
        $region81: #{sage_for_hetero_forward.7} parent=77 // pred_region
          _
        $region82: #{sage_for_hetero_forward.7} parent=77 // pred_fallthru
          _
        %s509 = sand.u32 %s69, 1
        %s510 = sand.u32 %s69, 1
        %s511 = smul.addr %s510, 256
        %s512 = scalar_lea.vmem [#allocation6], %s511
        %p513 = pneg %p82
        %p514 = pneg %p79
        %s515 = sld [smem:[#allocation5 + %s33]]
        %s516 = ssub.s32 %s515, 1
        %p517 = scmp.gt.s32.totalorder %s516, 0
        %s518 = scalar_select %p517, %s516, 0
        %p519 = scmp.lt.s32.totalorder %s34, %s518
        %s520 = scalar_select %p519, %s34, %s518
        %s521 = smul.u32 %s33, 2
        %s522 = sadd.s32 %s521, %s520
        %s523 = sld [smem:[#allocation4 + %s522]]
        %s524 = smul.u32 32, %s523
        %p525 = scmp.lt.s32.totalorder %s524, 63
        %s526 = scalar_select %p525, %s524, 63
        %s527 = smul.addr %s526, 4
        %s528 = scalar_lea.vmem %s3, %s527
        %p529 = pneg %p126
        %p530 = pneg %p123
        %s531 = smul.u32 32, %s33
        %p532 = scmp.lt.s32.totalorder %s531, 63
        %s533 = scalar_select %p532, %s531, 63
        %s534 = smul.addr %s533, 4
        %s535 = scalar_lea.vmem %s4, %s534
        %p536 = pneg %p152
        %p537 = pneg %p149
        %p538 = pneg %p173
        %p539 = pneg %p170
        %p540 = pneg %p194
        %p541 = pneg %p191
        %s542 = smul.u32 32, %s33
        %p543 = scmp.lt.s32.totalorder %s542, 63
        %s544 = scalar_select %p543, %s542, 63
        %s545 = smul.addr %s544, 8
        %s546 = scalar_lea.vmem %s7, %s545
        %p547 = pneg %p220
        %p548 = pneg %p217
        %p549 = pneg %p246
        %p550 = pneg %p243
        %s551 = smul.u32 32, %s33
        %p552 = scmp.lt.s32.totalorder %s551, 63
        %s553 = scalar_select %p552, %s551, 63
        %s554 = smul.addr %s553, 4
        %s555 = scalar_lea.vmem %s8, %s554
        %s556 = sld [smem:[#allocation5 + %s33]]
        %s557 = ssub.s32 %s556, 1
        %p558 = scmp.gt.s32.totalorder %s557, 0
        %s559 = scalar_select %p558, %s557, 0
        %p560 = scmp.lt.s32.totalorder %s34, %s559
        %s561 = scalar_select %p560, %s34, %s559
        %s562 = smul.u32 %s33, 2
        %s563 = sadd.s32 %s562, %s561
        %s564 = sld [smem:[#allocation4 + %s563]]
        %s565 = smul.u32 32, %s33
        %s566 = smul.u32 2, %s564
        %s567 = sld [smem:[#allocation5 + %s33]]
        %s568 = ssub.s32 %s567, 1
        %p569 = scmp.gt.s32.totalorder %s568, 0
        %s570 = scalar_select %p569, %s568, 0
        %p571 = scmp.lt.s32.totalorder %s34, %s570
        %s572 = scalar_select %p571, %s34, %s570
        %s573 = smul.u32 %s33, 2
        %s574 = sadd.s32 %s573, %s572
        %s575 = sld [smem:[#allocation4 + %s574]]
        %s576 = smul.u32 32, %s575
        %p577 = scmp.lt.s32.totalorder %s576, 63
        %s578 = scalar_select %p577, %s576, 63
        %s579 = smul.addr %s578, 4
        %s580 = scalar_lea.vmem %s3, %s579
        %s581 = sld [smem:[#allocation5 + %s33]]
        %s582 = ssub.s32 %s581, 1
        %p583 = scmp.gt.s32.totalorder %s582, 0
        %s584 = scalar_select %p583, %s582, 0
        %p585 = scmp.lt.s32.totalorder %s34, %s584
        %s586 = scalar_select %p585, %s34, %s584
        %s587 = smul.u32 %s33, 2
        %s588 = sadd.s32 %s587, %s586
        %s589 = sld [smem:[#allocation4 + %s588]]
        %s590 = smul.u32 32, %s589
        %s591 = smul.u32 32, %s33
        %p592 = scmp.lt.s32.totalorder %s591, 63
        %s593 = scalar_select %p592, %s591, 63
        %s594 = smul.addr %s593, 4
        %s595 = scalar_lea.vmem %s4, %s594
        %s596 = smul.u32 32, %s33
        %s597 = smul.u32 32, %s33
        %p598 = scmp.lt.s32.totalorder %s597, 63
        %s599 = scalar_select %p598, %s597, 63
        %s600 = smul.addr %s599, 8
        %s601 = scalar_lea.vmem %s7, %s600
        %s602 = smul.u32 32, %s33
        %s603 = smul.u32 32, %s33
        %p604 = scmp.lt.s32.totalorder %s603, 63
        %s605 = scalar_select %p604, %s603, 63
        %s606 = smul.addr %s605, 4
        %s607 = scalar_lea.vmem %s8, %s606
        %s608 = smul.u32 32, %s33
        %p610 = scmp.eq.s32.totalorder %s34, 0
        // Predicated region
        $region83: #{sage_for_hetero_forward.7} parent=77 // pred_check
          %p611 = pneg %p610
        $region84: #{sage_for_hetero_forward.7} parent=77 // pred_check_branch
          %613 = sbr.rel (%p611) target = $region86
        $region85: #{sage_for_hetero_forward.7} parent=77 // pred_region
          %614 = vst [vmem:[#allocation2] sm:$0xff] 0.0
          %615 = vst [vmem:[#allocation2 + $0x8] sm:$0xff] 0.0
          %616 = vst [vmem:[#allocation2 + $0x10] sm:$0xff] 0.0
          %617 = vst [vmem:[#allocation2 + $0x18] sm:$0xff] 0.0
          %618 = vst [vmem:[#allocation2 + $0x20] sm:$0xff] 0.0
          %619 = vst [vmem:[#allocation2 + $0x28] sm:$0xff] 0.0
          %620 = vst [vmem:[#allocation2 + $0x30] sm:$0xff] 0.0
          %621 = vst [vmem:[#allocation2 + $0x38] sm:$0xff] 0.0
          %622 = vst [vmem:[#allocation2 + $0x40] sm:$0xff] 0.0
          %623 = vst [vmem:[#allocation2 + $0x48] sm:$0xff] 0.0
          %624 = vst [vmem:[#allocation2 + $0x50] sm:$0xff] 0.0
          %625 = vst [vmem:[#allocation2 + $0x58] sm:$0xff] 0.0
          %626 = vst [vmem:[#allocation2 + $0x60] sm:$0xff] 0.0
          %627 = vst [vmem:[#allocation2 + $0x68] sm:$0xff] 0.0
          %628 = vst [vmem:[#allocation2 + $0x70] sm:$0xff] 0.0
          %629 = vst [vmem:[#allocation2 + $0x78] sm:$0xff] 0.0
          %630 = vst [vmem:[#allocation2 + $0x80] sm:$0xff] 0.0
          %631 = vst [vmem:[#allocation2 + $0x88] sm:$0xff] 0.0
          %632 = vst [vmem:[#allocation2 + $0x90] sm:$0xff] 0.0
          %633 = vst [vmem:[#allocation2 + $0x98] sm:$0xff] 0.0
          %634 = vst [vmem:[#allocation2 + $0xa0] sm:$0xff] 0.0
          %635 = vst [vmem:[#allocation2 + $0xa8] sm:$0xff] 0.0
          %636 = vst [vmem:[#allocation2 + $0xb0] sm:$0xff] 0.0
          %637 = vst [vmem:[#allocation2 + $0xb8] sm:$0xff] 0.0
          %638 = vst [vmem:[#allocation2 + $0xc0] sm:$0xff] 0.0
          %639 = vst [vmem:[#allocation2 + $0xc8] sm:$0xff] 0.0
          %640 = vst [vmem:[#allocation2 + $0xd0] sm:$0xff] 0.0
          %641 = vst [vmem:[#allocation2 + $0xd8] sm:$0xff] 0.0
          %642 = vst [vmem:[#allocation2 + $0xe0] sm:$0xff] 0.0
          %643 = vst [vmem:[#allocation2 + $0xe8] sm:$0xff] 0.0
          %644 = vst [vmem:[#allocation2 + $0xf0] sm:$0xff] 0.0
          %645 = vst [vmem:[#allocation2 + $0xf8] sm:$0xff] 0.0
        $region86: #{sage_for_hetero_forward.7} parent=77 // pred_fallthru
          _
        %s646 = sld [smem:[#allocation5 + %s33]]
        %p647 = scmp.lt.s32.totalorder %s34, %s646
        // Predicated region
        $region87: #{sage_for_hetero_forward.7} parent=77 // pred_check
          %p648 = pneg %p647
        $region88: #{sage_for_hetero_forward.7} parent=77 // pred_check_branch
          %650 = sbr.rel (%p648) target = $region90
        $region89: #{sage_for_hetero_forward.7} parent=77 // pred_region
          %v651 = vld [vmem:[#allocation2] sm:$0xff]
          %v652 = vld [vmem:[#allocation2 + $0x8] sm:$0xff]
          %v653 = vld [vmem:[#allocation2 + $0x10] sm:$0xff]
          %v654 = vld [vmem:[#allocation2 + $0x18] sm:$0xff]
          %v655 = vld [vmem:[#allocation2 + $0x20] sm:$0xff]
          %v656 = vld [vmem:[#allocation2 + $0x28] sm:$0xff]
          %v657 = vld [vmem:[#allocation2 + $0x30] sm:$0xff]
          %v658 = vld [vmem:[#allocation2 + $0x38] sm:$0xff]
          %v659 = vld [vmem:[#allocation2 + $0x40] sm:$0xff]
          %v660 = vld [vmem:[#allocation2 + $0x48] sm:$0xff]
          %v661 = vld [vmem:[#allocation2 + $0x50] sm:$0xff]
          %v662 = vld [vmem:[#allocation2 + $0x58] sm:$0xff]
          %v663 = vld [vmem:[#allocation2 + $0x60] sm:$0xff]
          %v664 = vld [vmem:[#allocation2 + $0x68] sm:$0xff]
          %v665 = vld [vmem:[#allocation2 + $0x70] sm:$0xff]
          %v666 = vld [vmem:[#allocation2 + $0x78] sm:$0xff]
          %v667 = vld [vmem:[#allocation2 + $0x80] sm:$0xff]
          %v668 = vld [vmem:[#allocation2 + $0x88] sm:$0xff]
          %v669 = vld [vmem:[#allocation2 + $0x90] sm:$0xff]
          %v670 = vld [vmem:[#allocation2 + $0x98] sm:$0xff]
          %v671 = vld [vmem:[#allocation2 + $0xa0] sm:$0xff]
          %v672 = vld [vmem:[#allocation2 + $0xa8] sm:$0xff]
          %v673 = vld [vmem:[#allocation2 + $0xb0] sm:$0xff]
          %v674 = vld [vmem:[#allocation2 + $0xb8] sm:$0xff]
          %v675 = vld [vmem:[#allocation2 + $0xc0] sm:$0xff]
          %v676 = vld [vmem:[#allocation2 + $0xc8] sm:$0xff]
          %v677 = vld [vmem:[#allocation2 + $0xd0] sm:$0xff]
          %v678 = vld [vmem:[#allocation2 + $0xd8] sm:$0xff]
          %v679 = vld [vmem:[#allocation2 + $0xe0] sm:$0xff]
          %v680 = vld [vmem:[#allocation2 + $0xe8] sm:$0xff]
          %v681 = vld [vmem:[#allocation2 + $0xf0] sm:$0xff]
          %v682 = vld [vmem:[#allocation2 + $0xf8] sm:$0xff]
          %v683 = vld [vmem:[%s505] sm:$0xff]
          %v684 = vld [vmem:[%s505 + $0x8] sm:$0xff]
          %v685 = vld [vmem:[%s505 + $0x10] sm:$0xff]
          %v686 = vld [vmem:[%s505 + $0x18] sm:$0xff]
          %v687 = vld [vmem:[%s505 + $0x20] sm:$0xff]
          %v688 = vld [vmem:[%s505 + $0x28] sm:$0xff]
          %v689 = vld [vmem:[%s505 + $0x30] sm:$0xff]
          %v690 = vld [vmem:[%s505 + $0x38] sm:$0xff]
          %v691 = vld [vmem:[%s505 + $0x40] sm:$0xff]
          %v692 = vld [vmem:[%s505 + $0x48] sm:$0xff]
          %v693 = vld [vmem:[%s505 + $0x50] sm:$0xff]
          %v694 = vld [vmem:[%s505 + $0x58] sm:$0xff]
          %v695 = vld [vmem:[%s505 + $0x60] sm:$0xff]
          %v696 = vld [vmem:[%s505 + $0x68] sm:$0xff]
          %v697 = vld [vmem:[%s505 + $0x70] sm:$0xff]
          %v698 = vld [vmem:[%s505 + $0x78] sm:$0xff]
          %v699 = vld [vmem:[%s505 + $0x80] sm:$0xff]
          %v700 = vld [vmem:[%s505 + $0x88] sm:$0xff]
          %v701 = vld [vmem:[%s505 + $0x90] sm:$0xff]
          %v702 = vld [vmem:[%s505 + $0x98] sm:$0xff]
          %v703 = vld [vmem:[%s505 + $0xa0] sm:$0xff]
          %v704 = vld [vmem:[%s505 + $0xa8] sm:$0xff]
          %v705 = vld [vmem:[%s505 + $0xb0] sm:$0xff]
          %v706 = vld [vmem:[%s505 + $0xb8] sm:$0xff]
          %v707 = vld [vmem:[%s505 + $0xc0] sm:$0xff]
          %v708 = vld [vmem:[%s505 + $0xc8] sm:$0xff]
          %v709 = vld [vmem:[%s505 + $0xd0] sm:$0xff]
          %v710 = vld [vmem:[%s505 + $0xd8] sm:$0xff]
          %v711 = vld [vmem:[%s505 + $0xe0] sm:$0xff]
          %v712 = vld [vmem:[%s505 + $0xe8] sm:$0xff]
          %v713 = vld [vmem:[%s505 + $0xf0] sm:$0xff]
          %v714 = vld [vmem:[%s505 + $0xf8] sm:$0xff]
          %v715 = vld [vmem:[%s580] sm:$0xf]
          %v716 = vld [vmem:[%s580 + $0x4] sm:$0xf]
          %v717 = vld [vmem:[%s580 + $0x8] sm:$0xf]
          %v718 = vld [vmem:[%s580 + $0xc] sm:$0xf]
          %v719 = vld [vmem:[%s580 + $0x10] sm:$0xf]
          %v720 = vld [vmem:[%s580 + $0x14] sm:$0xf]
          %v721 = vld [vmem:[%s580 + $0x18] sm:$0xf]
          %v722 = vld [vmem:[%s580 + $0x1c] sm:$0xf]
          %v723 = vld [vmem:[%s580 + $0x20] sm:$0xf]
          %v724 = vld [vmem:[%s580 + $0x24] sm:$0xf]
          %v725 = vld [vmem:[%s580 + $0x28] sm:$0xf]
          %v726 = vld [vmem:[%s580 + $0x2c] sm:$0xf]
          %v727 = vld [vmem:[%s580 + $0x30] sm:$0xf]
          %v728 = vld [vmem:[%s580 + $0x34] sm:$0xf]
          %v729 = vld [vmem:[%s580 + $0x38] sm:$0xf]
          %v730 = vld [vmem:[%s580 + $0x3c] sm:$0xf]
          %v731 = vld [vmem:[%s580 + $0x40] sm:$0xf]
          %v732 = vld [vmem:[%s580 + $0x44] sm:$0xf]
          %v733 = vld [vmem:[%s580 + $0x48] sm:$0xf]
          %v734 = vld [vmem:[%s580 + $0x4c] sm:$0xf]
          %v735 = vld [vmem:[%s580 + $0x50] sm:$0xf]
          %v736 = vld [vmem:[%s580 + $0x54] sm:$0xf]
          %v737 = vld [vmem:[%s580 + $0x58] sm:$0xf]
          %v738 = vld [vmem:[%s580 + $0x5c] sm:$0xf]
          %v739 = vld [vmem:[%s580 + $0x60] sm:$0xf]
          %v740 = vld [vmem:[%s580 + $0x64] sm:$0xf]
          %v741 = vld [vmem:[%s580 + $0x68] sm:$0xf]
          %v742 = vld [vmem:[%s580 + $0x6c] sm:$0xf]
          %v743 = vld [vmem:[%s580 + $0x70] sm:$0xf]
          %v744 = vld [vmem:[%s580 + $0x74] sm:$0xf]
          %v745 = vld [vmem:[%s580 + $0x78] sm:$0xf]
          %v746 = vld [vmem:[%s580 + $0x7c] sm:$0xf]
          %v779 = vunpack.c.l.b16 %v683
          %v780 = vunpack.c.h.b16 %v683
          %v781 = vunpack.c.l.b16 %v684
          %v782 = vunpack.c.h.b16 %v684
          %v783 = vunpack.c.l.b16 %v685
          %v784 = vunpack.c.h.b16 %v685
          %v785 = vunpack.c.l.b16 %v686
          %v786 = vunpack.c.h.b16 %v686
          %v787 = vunpack.c.l.b16 %v687
          %v788 = vunpack.c.h.b16 %v687
          %v789 = vunpack.c.l.b16 %v688
          %v790 = vunpack.c.h.b16 %v688
          %v791 = vunpack.c.l.b16 %v689
          %v792 = vunpack.c.h.b16 %v689
          %v793 = vunpack.c.l.b16 %v690
          %v794 = vunpack.c.h.b16 %v690
          %v795 = vunpack.c.l.b16 %v691
          %v796 = vunpack.c.h.b16 %v691
          %v797 = vunpack.c.l.b16 %v692
          %v798 = vunpack.c.h.b16 %v692
          %v799 = vunpack.c.l.b16 %v693
          %v800 = vunpack.c.h.b16 %v693
          %v801 = vunpack.c.l.b16 %v694
          %v802 = vunpack.c.h.b16 %v694
          %v803 = vunpack.c.l.b16 %v695
          %v804 = vunpack.c.h.b16 %v695
          %v805 = vunpack.c.l.b16 %v696
          %v806 = vunpack.c.h.b16 %v696
          %v807 = vunpack.c.l.b16 %v697
          %v808 = vunpack.c.h.b16 %v697
          %v809 = vunpack.c.l.b16 %v698
          %v810 = vunpack.c.h.b16 %v698
          %v811 = vunpack.c.l.b16 %v699
          %v812 = vunpack.c.h.b16 %v699
          %v813 = vunpack.c.l.b16 %v700
          %v814 = vunpack.c.h.b16 %v700
          %v815 = vunpack.c.l.b16 %v701
          %v816 = vunpack.c.h.b16 %v701
          %v817 = vunpack.c.l.b16 %v702
          %v818 = vunpack.c.h.b16 %v702
          %v819 = vunpack.c.l.b16 %v703
          %v820 = vunpack.c.h.b16 %v703
          %v821 = vunpack.c.l.b16 %v704
          %v822 = vunpack.c.h.b16 %v704
          %v823 = vunpack.c.l.b16 %v705
          %v824 = vunpack.c.h.b16 %v705
          %v825 = vunpack.c.l.b16 %v706
          %v826 = vunpack.c.h.b16 %v706
          %v827 = vunpack.c.l.b16 %v707
          %v828 = vunpack.c.h.b16 %v707
          %v829 = vunpack.c.l.b16 %v708
          %v830 = vunpack.c.h.b16 %v708
          %v831 = vunpack.c.l.b16 %v709
          %v832 = vunpack.c.h.b16 %v709
          %v833 = vunpack.c.l.b16 %v710
          %v834 = vunpack.c.h.b16 %v710
          %v835 = vunpack.c.l.b16 %v711
          %v836 = vunpack.c.h.b16 %v711
          %v837 = vunpack.c.l.b16 %v712
          %v838 = vunpack.c.h.b16 %v712
          %v839 = vunpack.c.l.b16 %v713
          %v840 = vunpack.c.h.b16 %v713
          %v841 = vunpack.c.l.b16 %v714
          %v842 = vunpack.c.h.b16 %v714
          %v843 = vpack.c.b16 %v781, %v779
          %v844 = vpack.c.b16 %v782, %v780
          %v845 = vpack.c.b16 %v785, %v783
          %v846 = vpack.c.b16 %v786, %v784
          %v847 = vpack.c.b16 %v789, %v787
          %v848 = vpack.c.b16 %v790, %v788
          %v849 = vpack.c.b16 %v793, %v791
          %v850 = vpack.c.b16 %v794, %v792
          %v851 = vpack.c.b16 %v797, %v795
          %v852 = vpack.c.b16 %v798, %v796
          %v853 = vpack.c.b16 %v801, %v799
          %v854 = vpack.c.b16 %v802, %v800
          %v855 = vpack.c.b16 %v805, %v803
          %v856 = vpack.c.b16 %v806, %v804
          %v857 = vpack.c.b16 %v809, %v807
          %v858 = vpack.c.b16 %v810, %v808
          %v859 = vpack.c.b16 %v813, %v811
          %v860 = vpack.c.b16 %v814, %v812
          %v861 = vpack.c.b16 %v817, %v815
          %v862 = vpack.c.b16 %v818, %v816
          %v863 = vpack.c.b16 %v821, %v819
          %v864 = vpack.c.b16 %v822, %v820
          %v865 = vpack.c.b16 %v825, %v823
          %v866 = vpack.c.b16 %v826, %v824
          %v867 = vpack.c.b16 %v829, %v827
          %v868 = vpack.c.b16 %v830, %v828
          %v869 = vpack.c.b16 %v833, %v831
          %v870 = vpack.c.b16 %v834, %v832
          %v871 = vpack.c.b16 %v837, %v835
          %v872 = vpack.c.b16 %v838, %v836
          %v873 = vpack.c.b16 %v841, %v839
          %v874 = vpack.c.b16 %v842, %v840
          %v939 = vunpack.c.l.b16 %v715
          %v940 = vunpack.c.l.b16 %v716
          %v941 = vunpack.c.l.b16 %v717
          %v942 = vunpack.c.l.b16 %v718
          %v943 = vunpack.c.l.b16 %v719
          %v944 = vunpack.c.l.b16 %v720
          %v945 = vunpack.c.l.b16 %v721
          %v946 = vunpack.c.l.b16 %v722
          %v947 = vunpack.c.l.b16 %v723
          %v948 = vunpack.c.l.b16 %v724
          %v949 = vunpack.c.l.b16 %v725
          %v950 = vunpack.c.l.b16 %v726
          %v951 = vunpack.c.l.b16 %v727
          %v952 = vunpack.c.l.b16 %v728
          %v953 = vunpack.c.l.b16 %v729
          %v954 = vunpack.c.l.b16 %v730
          %v955 = vunpack.c.l.b16 %v731
          %v956 = vunpack.c.l.b16 %v732
          %v957 = vunpack.c.l.b16 %v733
          %v958 = vunpack.c.l.b16 %v734
          %v959 = vunpack.c.l.b16 %v735
          %v960 = vunpack.c.l.b16 %v736
          %v961 = vunpack.c.l.b16 %v737
          %v962 = vunpack.c.l.b16 %v738
          %v963 = vunpack.c.l.b16 %v739
          %v964 = vunpack.c.l.b16 %v740
          %v965 = vunpack.c.l.b16 %v741
          %v966 = vunpack.c.l.b16 %v742
          %v967 = vunpack.c.l.b16 %v743
          %v968 = vunpack.c.l.b16 %v744
          %v969 = vunpack.c.l.b16 %v745
          %v970 = vunpack.c.l.b16 %v746
          %v971 = vpack.c.b16 %v940, %v939
          %v972 = vpack.c.b16 %v942, %v941
          %v973 = vpack.c.b16 %v944, %v943
          %v974 = vpack.c.b16 %v946, %v945
          %v975 = vpack.c.b16 %v948, %v947
          %v976 = vpack.c.b16 %v950, %v949
          %v977 = vpack.c.b16 %v952, %v951
          %v978 = vpack.c.b16 %v954, %v953
          %v979 = vpack.c.b16 %v956, %v955
          %v980 = vpack.c.b16 %v958, %v957
          %v981 = vpack.c.b16 %v960, %v959
          %v982 = vpack.c.b16 %v962, %v961
          %v983 = vpack.c.b16 %v964, %v963
          %v984 = vpack.c.b16 %v966, %v965
          %v985 = vpack.c.b16 %v968, %v967
          %v986 = vpack.c.b16 %v970, %v969
          %1003 = vmatprep.subr.bf16.mxu0 0
          %1004 = vmatpush1.bf16.msra.mxu0 %v978
          %1005 = vmatprep.subr.bf16.mxu0 0
          %1006 = vmatpush1.bf16.msra.mxu0 %v977
          %1007 = vmatprep.subr.bf16.mxu0 0
          %1008 = vmatpush1.bf16.msra.mxu0 %v976
          %1009 = vmatprep.subr.bf16.mxu0 0
          %1010 = vmatpush1.bf16.msra.mxu0 %v975
          %1011 = vmatprep.subr.bf16.mxu0 0
          %1012 = vmatpush1.bf16.msra.mxu0 %v974
          %1013 = vmatprep.subr.bf16.mxu0 0
          %1014 = vmatpush1.bf16.msra.mxu0 %v973
          %1015 = vmatprep.subr.bf16.mxu0 0
          %1016 = vmatpush1.bf16.msra.mxu0 %v972
          %1017 = vmatprep.subr.bf16.mxu0 0
          %1018 = vmatpush1.bf16.msra.mxu0 %v971
          %1019 = vmatprep.subr.bf16.mxu0 0
          %1020 = vmatpush2.bf16.msra.mxu0 %v986
          %1021 = vmatprep.subr.bf16.mxu0 0
          %1022 = vmatpush2.bf16.msra.mxu0 %v985
          %1023 = vmatprep.subr.bf16.mxu0 0
          %1024 = vmatpush2.bf16.msra.mxu0 %v984
          %1025 = vmatprep.subr.bf16.mxu0 0
          %1026 = vmatpush2.bf16.msra.mxu0 %v983
          %1027 = vmatprep.subr.bf16.mxu0 0
          %1028 = vmatpush2.bf16.msra.mxu0 %v982
          %1029 = vmatprep.subr.bf16.mxu0 0
          %1030 = vmatpush2.bf16.msra.mxu0 %v981
          %1031 = vmatprep.subr.bf16.mxu0 0
          %1032 = vmatpush2.bf16.msra.mxu0 %v980
          %1033 = vmatprep.subr.bf16.mxu0 0
          %1034 = vmatpush2.bf16.msra.mxu0 %v979
          %1035 = vmatprep.mubr.bf16.mxu0 %v844
          %1036 = vmatmul.mubr.bf16.gmra.mxu0 %v843
          %v1037 = vpop.f32.mrf.mxu0
          %v1038 = vadd.f32 0.0, %v1037
          %v1039 = vpop.f32.mrf.mxu0
          %v1040 = vpop.f32.mrf.mxu0
          %v1041 = vadd.f32 0.0, %v1040
          %v1042 = vpop.f32.mrf.mxu0
          %1043 = vmatprep.mubr.bf16.mxu0 %v846
          %1044 = vmatmul.mubr.bf16.gmra.mxu0 %v845
          %v1045 = vpop.f32.mrf.mxu0
          %v1046 = vadd.f32 0.0, %v1045
          %v1047 = vpop.f32.mrf.mxu0
          %v1048 = vpop.f32.mrf.mxu0
          %v1049 = vadd.f32 0.0, %v1048
          %v1050 = vpop.f32.mrf.mxu0
          %1051 = vmatprep.mubr.bf16.mxu0 %v848
          %1052 = vmatmul.mubr.bf16.gmra.mxu0 %v847
          %v1053 = vpop.f32.mrf.mxu0
          %v1054 = vadd.f32 0.0, %v1053
          %v1055 = vpop.f32.mrf.mxu0
          %v1056 = vpop.f32.mrf.mxu0
          %v1057 = vadd.f32 0.0, %v1056
          %v1058 = vpop.f32.mrf.mxu0
          %1059 = vmatprep.mubr.bf16.mxu0 %v850
          %1060 = vmatmul.mubr.bf16.gmra.mxu0 %v849
          %v1061 = vpop.f32.mrf.mxu0
          %v1062 = vadd.f32 0.0, %v1061
          %v1063 = vpop.f32.mrf.mxu0
          %v1064 = vpop.f32.mrf.mxu0
          %v1065 = vadd.f32 0.0, %v1064
          %v1066 = vpop.f32.mrf.mxu0
          %1067 = vmatprep.mubr.bf16.mxu0 %v852
          %1068 = vmatmul.mubr.bf16.gmra.mxu0 %v851
          %v1069 = vpop.f32.mrf.mxu0
          %v1070 = vadd.f32 0.0, %v1069
          %v1071 = vpop.f32.mrf.mxu0
          %v1072 = vpop.f32.mrf.mxu0
          %v1073 = vadd.f32 0.0, %v1072
          %v1074 = vpop.f32.mrf.mxu0
          %1075 = vmatprep.mubr.bf16.mxu0 %v854
          %1076 = vmatmul.mubr.bf16.gmra.mxu0 %v853
          %v1077 = vpop.f32.mrf.mxu0
          %v1078 = vadd.f32 0.0, %v1077
          %v1079 = vpop.f32.mrf.mxu0
          %v1080 = vpop.f32.mrf.mxu0
          %v1081 = vadd.f32 0.0, %v1080
          %v1082 = vpop.f32.mrf.mxu0
          %1083 = vmatprep.mubr.bf16.mxu0 %v856
          %1084 = vmatmul.mubr.bf16.gmra.mxu0 %v855
          %v1085 = vpop.f32.mrf.mxu0
          %v1086 = vadd.f32 0.0, %v1085
          %v1087 = vpop.f32.mrf.mxu0
          %v1088 = vpop.f32.mrf.mxu0
          %v1089 = vadd.f32 0.0, %v1088
          %v1090 = vpop.f32.mrf.mxu0
          %1091 = vmatprep.mubr.bf16.mxu0 %v858
          %1092 = vmatmul.mubr.bf16.gmra.mxu0 %v857
          %v1093 = vpop.f32.mrf.mxu0
          %v1094 = vadd.f32 0.0, %v1093
          %v1095 = vpop.f32.mrf.mxu0
          %v1096 = vpop.f32.mrf.mxu0
          %v1097 = vadd.f32 0.0, %v1096
          %v1098 = vpop.f32.mrf.mxu0
          %1099 = vmatprep.mubr.bf16.mxu0 %v860
          %1100 = vmatmul.mubr.bf16.gmra.mxu0 %v859
          %v1101 = vpop.f32.mrf.mxu0
          %v1102 = vadd.f32 0.0, %v1101
          %v1103 = vpop.f32.mrf.mxu0
          %v1104 = vpop.f32.mrf.mxu0
          %v1105 = vadd.f32 0.0, %v1104
          %v1106 = vpop.f32.mrf.mxu0
          %1107 = vmatprep.mubr.bf16.mxu0 %v862
          %1108 = vmatmul.mubr.bf16.gmra.mxu0 %v861
          %v1109 = vpop.f32.mrf.mxu0
          %v1110 = vadd.f32 0.0, %v1109
          %v1111 = vpop.f32.mrf.mxu0
          %v1112 = vpop.f32.mrf.mxu0
          %v1113 = vadd.f32 0.0, %v1112
          %v1114 = vpop.f32.mrf.mxu0
          %1115 = vmatprep.mubr.bf16.mxu0 %v864
          %1116 = vmatmul.mubr.bf16.gmra.mxu0 %v863
          %v1117 = vpop.f32.mrf.mxu0
          %v1118 = vadd.f32 0.0, %v1117
          %v1119 = vpop.f32.mrf.mxu0
          %v1120 = vpop.f32.mrf.mxu0
          %v1121 = vadd.f32 0.0, %v1120
          %v1122 = vpop.f32.mrf.mxu0
          %1123 = vmatprep.mubr.bf16.mxu0 %v866
          %1124 = vmatmul.mubr.bf16.gmra.mxu0 %v865
          %v1125 = vpop.f32.mrf.mxu0
          %v1126 = vadd.f32 0.0, %v1125
          %v1127 = vpop.f32.mrf.mxu0
          %v1128 = vpop.f32.mrf.mxu0
          %v1129 = vadd.f32 0.0, %v1128
          %v1130 = vpop.f32.mrf.mxu0
          %1131 = vmatprep.mubr.bf16.mxu0 %v868
          %1132 = vmatmul.mubr.bf16.gmra.mxu0 %v867
          %v1133 = vpop.f32.mrf.mxu0
          %v1134 = vadd.f32 0.0, %v1133
          %v1135 = vpop.f32.mrf.mxu0
          %v1136 = vpop.f32.mrf.mxu0
          %v1137 = vadd.f32 0.0, %v1136
          %v1138 = vpop.f32.mrf.mxu0
          %1139 = vmatprep.mubr.bf16.mxu0 %v870
          %1140 = vmatmul.mubr.bf16.gmra.mxu0 %v869
          %v1141 = vpop.f32.mrf.mxu0
          %v1142 = vadd.f32 0.0, %v1141
          %v1143 = vpop.f32.mrf.mxu0
          %v1144 = vpop.f32.mrf.mxu0
          %v1145 = vadd.f32 0.0, %v1144
          %v1146 = vpop.f32.mrf.mxu0
          %1147 = vmatprep.mubr.bf16.mxu0 %v872
          %1148 = vmatmul.mubr.bf16.gmra.mxu0 %v871
          %v1149 = vpop.f32.mrf.mxu0
          %v1150 = vadd.f32 0.0, %v1149
          %v1151 = vpop.f32.mrf.mxu0
          %v1152 = vpop.f32.mrf.mxu0
          %v1153 = vadd.f32 0.0, %v1152
          %v1154 = vpop.f32.mrf.mxu0
          %1155 = vmatprep.mubr.bf16.mxu0 %v874
          %1156 = vmatmul.mubr.bf16.gmra.mxu0 %v873
          %v1157 = vpop.f32.mrf.mxu0
          %v1158 = vadd.f32 0.0, %v1157
          %v1159 = vpop.f32.mrf.mxu0
          %v1160 = vpop.f32.mrf.mxu0
          %v1161 = vadd.f32 0.0, %v1160
          %v1162 = vpop.f32.mrf.mxu0
          %1163 = vdwg.mxu0
          %v1164 = vadd.f32 %v651, %v1038
          %v1165 = vadd.f32 %v652, %v1041
          %v1166 = vadd.f32 %v653, %v1046
          %v1167 = vadd.f32 %v654, %v1049
          %v1168 = vadd.f32 %v655, %v1054
          %v1169 = vadd.f32 %v656, %v1057
          %v1170 = vadd.f32 %v657, %v1062
          %v1171 = vadd.f32 %v658, %v1065
          %v1172 = vadd.f32 %v659, %v1070
          %v1173 = vadd.f32 %v660, %v1073
          %v1174 = vadd.f32 %v661, %v1078
          %v1175 = vadd.f32 %v662, %v1081
          %v1176 = vadd.f32 %v663, %v1086
          %v1177 = vadd.f32 %v664, %v1089
          %v1178 = vadd.f32 %v665, %v1094
          %v1179 = vadd.f32 %v666, %v1097
          %v1180 = vadd.f32 %v667, %v1102
          %v1181 = vadd.f32 %v668, %v1105
          %v1182 = vadd.f32 %v669, %v1110
          %v1183 = vadd.f32 %v670, %v1113
          %v1184 = vadd.f32 %v671, %v1118
          %v1185 = vadd.f32 %v672, %v1121
          %v1186 = vadd.f32 %v673, %v1126
          %v1187 = vadd.f32 %v674, %v1129
          %v1188 = vadd.f32 %v675, %v1134
          %v1189 = vadd.f32 %v676, %v1137
          %v1190 = vadd.f32 %v677, %v1142
          %v1191 = vadd.f32 %v678, %v1145
          %v1192 = vadd.f32 %v679, %v1150
          %v1193 = vadd.f32 %v680, %v1153
          %v1194 = vadd.f32 %v681, %v1158
          %v1195 = vadd.f32 %v682, %v1161
          %1196 = vst [vmem:[#allocation2] sm:$0xff] %v1164
          %1197 = vst [vmem:[#allocation2 + $0x8] sm:$0xff] %v1165
          %1198 = vst [vmem:[#allocation2 + $0x10] sm:$0xff] %v1166
          %1199 = vst [vmem:[#allocation2 + $0x18] sm:$0xff] %v1167
          %1200 = vst [vmem:[#allocation2 + $0x20] sm:$0xff] %v1168
          %1201 = vst [vmem:[#allocation2 + $0x28] sm:$0xff] %v1169
          %1202 = vst [vmem:[#allocation2 + $0x30] sm:$0xff] %v1170
          %1203 = vst [vmem:[#allocation2 + $0x38] sm:$0xff] %v1171
          %1204 = vst [vmem:[#allocation2 + $0x40] sm:$0xff] %v1172
          %1205 = vst [vmem:[#allocation2 + $0x48] sm:$0xff] %v1173
          %1206 = vst [vmem:[#allocation2 + $0x50] sm:$0xff] %v1174
          %1207 = vst [vmem:[#allocation2 + $0x58] sm:$0xff] %v1175
          %1208 = vst [vmem:[#allocation2 + $0x60] sm:$0xff] %v1176
          %1209 = vst [vmem:[#allocation2 + $0x68] sm:$0xff] %v1177
          %1210 = vst [vmem:[#allocation2 + $0x70] sm:$0xff] %v1178
          %1211 = vst [vmem:[#allocation2 + $0x78] sm:$0xff] %v1179
          %1212 = vst [vmem:[#allocation2 + $0x80] sm:$0xff] %v1180
          %1213 = vst [vmem:[#allocation2 + $0x88] sm:$0xff] %v1181
          %1214 = vst [vmem:[#allocation2 + $0x90] sm:$0xff] %v1182
          %1215 = vst [vmem:[#allocation2 + $0x98] sm:$0xff] %v1183
          %1216 = vst [vmem:[#allocation2 + $0xa0] sm:$0xff] %v1184
          %1217 = vst [vmem:[#allocation2 + $0xa8] sm:$0xff] %v1185
          %1218 = vst [vmem:[#allocation2 + $0xb0] sm:$0xff] %v1186
          %1219 = vst [vmem:[#allocation2 + $0xb8] sm:$0xff] %v1187
          %1220 = vst [vmem:[#allocation2 + $0xc0] sm:$0xff] %v1188
          %1221 = vst [vmem:[#allocation2 + $0xc8] sm:$0xff] %v1189
          %1222 = vst [vmem:[#allocation2 + $0xd0] sm:$0xff] %v1190
          %1223 = vst [vmem:[#allocation2 + $0xd8] sm:$0xff] %v1191
          %1224 = vst [vmem:[#allocation2 + $0xe0] sm:$0xff] %v1192
          %1225 = vst [vmem:[#allocation2 + $0xe8] sm:$0xff] %v1193
          %1226 = vst [vmem:[#allocation2 + $0xf0] sm:$0xff] %v1194
          %1227 = vst [vmem:[#allocation2 + $0xf8] sm:$0xff] %v1195
        $region90: #{sage_for_hetero_forward.7} parent=77 // pred_fallthru
          _
        %p1228 = scmp.eq.s32.totalorder %s34, 1
        // Predicated region
        $region91: #{sage_for_hetero_forward.7} parent=77 // pred_check
          %p1229 = pneg %p1228
        $region92: #{sage_for_hetero_forward.7} parent=77 // pred_check_branch
          %1231 = sbr.rel (%p1229) target = $region94
        $region93: #{sage_for_hetero_forward.7} parent=77 // pred_region
          %v1232 = vld [vmem:[%s595] sm:$0xf]
          %v1233 = vld [vmem:[%s595 + $0x4] sm:$0xf]
          %v1234 = vld [vmem:[%s595 + $0x8] sm:$0xf]
          %v1235 = vld [vmem:[%s595 + $0xc] sm:$0xf]
          %v1236 = vld [vmem:[%s595 + $0x10] sm:$0xf]
          %v1237 = vld [vmem:[%s595 + $0x14] sm:$0xf]
          %v1238 = vld [vmem:[%s595 + $0x18] sm:$0xf]
          %v1239 = vld [vmem:[%s595 + $0x1c] sm:$0xf]
          %v1240 = vld [vmem:[%s595 + $0x20] sm:$0xf]
          %v1241 = vld [vmem:[%s595 + $0x24] sm:$0xf]
          %v1242 = vld [vmem:[%s595 + $0x28] sm:$0xf]
          %v1243 = vld [vmem:[%s595 + $0x2c] sm:$0xf]
          %v1244 = vld [vmem:[%s595 + $0x30] sm:$0xf]
          %v1245 = vld [vmem:[%s595 + $0x34] sm:$0xf]
          %v1246 = vld [vmem:[%s595 + $0x38] sm:$0xf]
          %v1247 = vld [vmem:[%s595 + $0x3c] sm:$0xf]
          %v1248 = vld [vmem:[%s595 + $0x40] sm:$0xf]
          %v1249 = vld [vmem:[%s595 + $0x44] sm:$0xf]
          %v1250 = vld [vmem:[%s595 + $0x48] sm:$0xf]
          %v1251 = vld [vmem:[%s595 + $0x4c] sm:$0xf]
          %v1252 = vld [vmem:[%s595 + $0x50] sm:$0xf]
          %v1253 = vld [vmem:[%s595 + $0x54] sm:$0xf]
          %v1254 = vld [vmem:[%s595 + $0x58] sm:$0xf]
          %v1255 = vld [vmem:[%s595 + $0x5c] sm:$0xf]
          %v1256 = vld [vmem:[%s595 + $0x60] sm:$0xf]
          %v1257 = vld [vmem:[%s595 + $0x64] sm:$0xf]
          %v1258 = vld [vmem:[%s595 + $0x68] sm:$0xf]
          %v1259 = vld [vmem:[%s595 + $0x6c] sm:$0xf]
          %v1260 = vld [vmem:[%s595 + $0x70] sm:$0xf]
          %v1261 = vld [vmem:[%s595 + $0x74] sm:$0xf]
          %v1262 = vld [vmem:[%s595 + $0x78] sm:$0xf]
          %v1263 = vld [vmem:[%s595 + $0x7c] sm:$0xf]
          %v1264 = vld [vmem:[%s5] sm:$0xf]
          %v1265 = vld [vmem:[%s5 + $0x4] sm:$0xf]
          %v1266 = vld [vmem:[%s5 + $0x8] sm:$0xf]
          %v1267 = vld [vmem:[%s5 + $0xc] sm:$0xf]
          %v1268 = vld [vmem:[%s5 + $0x10] sm:$0xf]
          %v1269 = vld [vmem:[%s5 + $0x14] sm:$0xf]
          %v1270 = vld [vmem:[%s5 + $0x18] sm:$0xf]
          %v1271 = vld [vmem:[%s5 + $0x1c] sm:$0xf]
          %v1272 = vld [vmem:[%s5 + $0x20] sm:$0xf]
          %v1273 = vld [vmem:[%s5 + $0x24] sm:$0xf]
          %v1274 = vld [vmem:[%s5 + $0x28] sm:$0xf]
          %v1275 = vld [vmem:[%s5 + $0x2c] sm:$0xf]
          %v1276 = vld [vmem:[%s5 + $0x30] sm:$0xf]
          %v1277 = vld [vmem:[%s5 + $0x34] sm:$0xf]
          %v1278 = vld [vmem:[%s5 + $0x38] sm:$0xf]
          %v1279 = vld [vmem:[%s5 + $0x3c] sm:$0xf]
          %v1312 = vunpack.c.l.b16 %v1232
          %v1313 = vunpack.c.l.b16 %v1233
          %v1314 = vunpack.c.l.b16 %v1234
          %v1315 = vunpack.c.l.b16 %v1235
          %v1316 = vunpack.c.l.b16 %v1236
          %v1317 = vunpack.c.l.b16 %v1237
          %v1318 = vunpack.c.l.b16 %v1238
          %v1319 = vunpack.c.l.b16 %v1239
          %v1320 = vunpack.c.l.b16 %v1240
          %v1321 = vunpack.c.l.b16 %v1241
          %v1322 = vunpack.c.l.b16 %v1242
          %v1323 = vunpack.c.l.b16 %v1243
          %v1324 = vunpack.c.l.b16 %v1244
          %v1325 = vunpack.c.l.b16 %v1245
          %v1326 = vunpack.c.l.b16 %v1246
          %v1327 = vunpack.c.l.b16 %v1247
          %v1328 = vunpack.c.l.b16 %v1248
          %v1329 = vunpack.c.l.b16 %v1249
          %v1330 = vunpack.c.l.b16 %v1250
          %v1331 = vunpack.c.l.b16 %v1251
          %v1332 = vunpack.c.l.b16 %v1252
          %v1333 = vunpack.c.l.b16 %v1253
          %v1334 = vunpack.c.l.b16 %v1254
          %v1335 = vunpack.c.l.b16 %v1255
          %v1336 = vunpack.c.l.b16 %v1256
          %v1337 = vunpack.c.l.b16 %v1257
          %v1338 = vunpack.c.l.b16 %v1258
          %v1339 = vunpack.c.l.b16 %v1259
          %v1340 = vunpack.c.l.b16 %v1260
          %v1341 = vunpack.c.l.b16 %v1261
          %v1342 = vunpack.c.l.b16 %v1262
          %v1343 = vunpack.c.l.b16 %v1263
          %v1344 = vpack.c.b16 %v1313, %v1312
          %v1345 = vpack.c.b16 %v1315, %v1314
          %v1346 = vpack.c.b16 %v1317, %v1316
          %v1347 = vpack.c.b16 %v1319, %v1318
          %v1348 = vpack.c.b16 %v1321, %v1320
          %v1349 = vpack.c.b16 %v1323, %v1322
          %v1350 = vpack.c.b16 %v1325, %v1324
          %v1351 = vpack.c.b16 %v1327, %v1326
          %v1352 = vpack.c.b16 %v1329, %v1328
          %v1353 = vpack.c.b16 %v1331, %v1330
          %v1354 = vpack.c.b16 %v1333, %v1332
          %v1355 = vpack.c.b16 %v1335, %v1334
          %v1356 = vpack.c.b16 %v1337, %v1336
          %v1357 = vpack.c.b16 %v1339, %v1338
          %v1358 = vpack.c.b16 %v1341, %v1340
          %v1359 = vpack.c.b16 %v1343, %v1342
          %v1392 = vunpack.c.l.b16 %v1264
          %v1393 = vunpack.c.l.b16 %v1265
          %v1394 = vunpack.c.l.b16 %v1266
          %v1395 = vunpack.c.l.b16 %v1267
          %v1396 = vunpack.c.l.b16 %v1268
          %v1397 = vunpack.c.l.b16 %v1269
          %v1398 = vunpack.c.l.b16 %v1270
          %v1399 = vunpack.c.l.b16 %v1271
          %v1400 = vunpack.c.l.b16 %v1272
          %v1401 = vunpack.c.l.b16 %v1273
          %v1402 = vunpack.c.l.b16 %v1274
          %v1403 = vunpack.c.l.b16 %v1275
          %v1404 = vunpack.c.l.b16 %v1276
          %v1405 = vunpack.c.l.b16 %v1277
          %v1406 = vunpack.c.l.b16 %v1278
          %v1407 = vunpack.c.l.b16 %v1279
          %v1408 = vpack.c.b16 %v1393, %v1392
          %v1409 = vpack.c.b16 %v1395, %v1394
          %v1410 = vpack.c.b16 %v1397, %v1396
          %v1411 = vpack.c.b16 %v1399, %v1398
          %v1412 = vpack.c.b16 %v1401, %v1400
          %v1413 = vpack.c.b16 %v1403, %v1402
          %v1414 = vpack.c.b16 %v1405, %v1404
          %v1415 = vpack.c.b16 %v1407, %v1406
          %1424 = vmatprep.subr.bf16.mxu0 0
          %1425 = vmatpush1.bf16.msra.mxu0 %v1415
          %1426 = vmatprep.subr.bf16.mxu0 0
          %1427 = vmatpush1.bf16.msra.mxu0 %v1414
          %1428 = vmatprep.subr.bf16.mxu0 0
          %1429 = vmatpush1.bf16.msra.mxu0 %v1413
          %1430 = vmatprep.subr.bf16.mxu0 0
          %1431 = vmatpush1.bf16.msra.mxu0 %v1412
          %1432 = vmatprep.subr.bf16.mxu0 0
          %1433 = vmatpush1.bf16.msra.mxu0 %v1411
          %1434 = vmatprep.subr.bf16.mxu0 0
          %1435 = vmatpush1.bf16.msra.mxu0 %v1410
          %1436 = vmatprep.subr.bf16.mxu0 0
          %1437 = vmatpush1.bf16.msra.mxu0 %v1409
          %1438 = vmatprep.subr.bf16.mxu0 0
          %1439 = vmatpush1.bf16.msra.mxu0 %v1408
          %1440 = vmatprep.subr.bf16.mxu0 0
          %1441 = vmatpush2.bf16.msra.mxu0 0
          %1442 = vmatprep.subr.bf16.mxu0 0
          %1443 = vmatpush2.bf16.msra.mxu0 0
          %1444 = vmatprep.subr.bf16.mxu0 0
          %1445 = vmatpush2.bf16.msra.mxu0 0
          %1446 = vmatprep.subr.bf16.mxu0 0
          %1447 = vmatpush2.bf16.msra.mxu0 0
          %1448 = vmatprep.subr.bf16.mxu0 0
          %1449 = vmatpush2.bf16.msra.mxu0 0
          %1450 = vmatprep.subr.bf16.mxu0 0
          %1451 = vmatpush2.bf16.msra.mxu0 0
          %1452 = vmatprep.subr.bf16.mxu0 0
          %1453 = vmatpush2.bf16.msra.mxu0 0
          %1454 = vmatprep.subr.bf16.mxu0 0
          %1455 = vmatpush2.bf16.msra.mxu0 0
          %1456 = vmatprep.mubr.bf16.mxu0 0
          %1457 = vmatmul.mubr.bf16.gmra.mxu0 %v1344
          %v1458 = vpop.f32.mrf.mxu0
          %v1459 = vadd.f32 0.0, %v1458
          %v1460 = vpop.f32.mrf.mxu0
          %v1461 = vpop.f32.mrf.mxu0
          %v1462 = vadd.f32 0.0, %v1461
          %v1463 = vpop.f32.mrf.mxu0
          %1464 = vmatprep.mubr.bf16.mxu0 0
          %1465 = vmatmul.mubr.bf16.gmra.mxu0 %v1345
          %v1466 = vpop.f32.mrf.mxu0
          %v1467 = vadd.f32 0.0, %v1466
          %v1468 = vpop.f32.mrf.mxu0
          %v1469 = vpop.f32.mrf.mxu0
          %v1470 = vadd.f32 0.0, %v1469
          %v1471 = vpop.f32.mrf.mxu0
          %1472 = vmatprep.mubr.bf16.mxu0 0
          %1473 = vmatmul.mubr.bf16.gmra.mxu0 %v1346
          %v1474 = vpop.f32.mrf.mxu0
          %v1475 = vadd.f32 0.0, %v1474
          %v1476 = vpop.f32.mrf.mxu0
          %v1477 = vpop.f32.mrf.mxu0
          %v1478 = vadd.f32 0.0, %v1477
          %v1479 = vpop.f32.mrf.mxu0
          %1480 = vmatprep.mubr.bf16.mxu0 0
          %1481 = vmatmul.mubr.bf16.gmra.mxu0 %v1347
          %v1482 = vpop.f32.mrf.mxu0
          %v1483 = vadd.f32 0.0, %v1482
          %v1484 = vpop.f32.mrf.mxu0
          %v1485 = vpop.f32.mrf.mxu0
          %v1486 = vadd.f32 0.0, %v1485
          %v1487 = vpop.f32.mrf.mxu0
          %1488 = vmatprep.mubr.bf16.mxu0 0
          %1489 = vmatmul.mubr.bf16.gmra.mxu0 %v1348
          %v1490 = vpop.f32.mrf.mxu0
          %v1491 = vadd.f32 0.0, %v1490
          %v1492 = vpop.f32.mrf.mxu0
          %v1493 = vpop.f32.mrf.mxu0
          %v1494 = vadd.f32 0.0, %v1493
          %v1495 = vpop.f32.mrf.mxu0
          %1496 = vmatprep.mubr.bf16.mxu0 0
          %1497 = vmatmul.mubr.bf16.gmra.mxu0 %v1349
          %v1498 = vpop.f32.mrf.mxu0
          %v1499 = vadd.f32 0.0, %v1498
          %v1500 = vpop.f32.mrf.mxu0
          %v1501 = vpop.f32.mrf.mxu0
          %v1502 = vadd.f32 0.0, %v1501
          %v1503 = vpop.f32.mrf.mxu0
          %1504 = vmatprep.mubr.bf16.mxu0 0
          %1505 = vmatmul.mubr.bf16.gmra.mxu0 %v1350
          %v1506 = vpop.f32.mrf.mxu0
          %v1507 = vadd.f32 0.0, %v1506
          %v1508 = vpop.f32.mrf.mxu0
          %v1509 = vpop.f32.mrf.mxu0
          %v1510 = vadd.f32 0.0, %v1509
          %v1511 = vpop.f32.mrf.mxu0
          %1512 = vmatprep.mubr.bf16.mxu0 0
          %1513 = vmatmul.mubr.bf16.gmra.mxu0 %v1351
          %v1514 = vpop.f32.mrf.mxu0
          %v1515 = vadd.f32 0.0, %v1514
          %v1516 = vpop.f32.mrf.mxu0
          %v1517 = vpop.f32.mrf.mxu0
          %v1518 = vadd.f32 0.0, %v1517
          %v1519 = vpop.f32.mrf.mxu0
          %1520 = vmatprep.mubr.bf16.mxu0 0
          %1521 = vmatmul.mubr.bf16.gmra.mxu0 %v1352
          %v1522 = vpop.f32.mrf.mxu0
          %v1523 = vadd.f32 0.0, %v1522
          %v1524 = vpop.f32.mrf.mxu0
          %v1525 = vpop.f32.mrf.mxu0
          %v1526 = vadd.f32 0.0, %v1525
          %v1527 = vpop.f32.mrf.mxu0
          %1528 = vmatprep.mubr.bf16.mxu0 0
          %1529 = vmatmul.mubr.bf16.gmra.mxu0 %v1353
          %v1530 = vpop.f32.mrf.mxu0
          %v1531 = vadd.f32 0.0, %v1530
          %v1532 = vpop.f32.mrf.mxu0
          %v1533 = vpop.f32.mrf.mxu0
          %v1534 = vadd.f32 0.0, %v1533
          %v1535 = vpop.f32.mrf.mxu0
          %1536 = vmatprep.mubr.bf16.mxu0 0
          %1537 = vmatmul.mubr.bf16.gmra.mxu0 %v1354
          %v1538 = vpop.f32.mrf.mxu0
          %v1539 = vadd.f32 0.0, %v1538
          %v1540 = vpop.f32.mrf.mxu0
          %v1541 = vpop.f32.mrf.mxu0
          %v1542 = vadd.f32 0.0, %v1541
          %v1543 = vpop.f32.mrf.mxu0
          %1544 = vmatprep.mubr.bf16.mxu0 0
          %1545 = vmatmul.mubr.bf16.gmra.mxu0 %v1355
          %v1546 = vpop.f32.mrf.mxu0
          %v1547 = vadd.f32 0.0, %v1546
          %v1548 = vpop.f32.mrf.mxu0
          %v1549 = vpop.f32.mrf.mxu0
          %v1550 = vadd.f32 0.0, %v1549
          %v1551 = vpop.f32.mrf.mxu0
          %1552 = vmatprep.mubr.bf16.mxu0 0
          %1553 = vmatmul.mubr.bf16.gmra.mxu0 %v1356
          %v1554 = vpop.f32.mrf.mxu0
          %v1555 = vadd.f32 0.0, %v1554
          %v1556 = vpop.f32.mrf.mxu0
          %v1557 = vpop.f32.mrf.mxu0
          %v1558 = vadd.f32 0.0, %v1557
          %v1559 = vpop.f32.mrf.mxu0
          %1560 = vmatprep.mubr.bf16.mxu0 0
          %1561 = vmatmul.mubr.bf16.gmra.mxu0 %v1357
          %v1562 = vpop.f32.mrf.mxu0
          %v1563 = vadd.f32 0.0, %v1562
          %v1564 = vpop.f32.mrf.mxu0
          %v1565 = vpop.f32.mrf.mxu0
          %v1566 = vadd.f32 0.0, %v1565
          %v1567 = vpop.f32.mrf.mxu0
          %1568 = vmatprep.mubr.bf16.mxu0 0
          %1569 = vmatmul.mubr.bf16.gmra.mxu0 %v1358
          %v1570 = vpop.f32.mrf.mxu0
          %v1571 = vadd.f32 0.0, %v1570
          %v1572 = vpop.f32.mrf.mxu0
          %v1573 = vpop.f32.mrf.mxu0
          %v1574 = vadd.f32 0.0, %v1573
          %v1575 = vpop.f32.mrf.mxu0
          %1576 = vmatprep.mubr.bf16.mxu0 0
          %1577 = vmatmul.mubr.bf16.gmra.mxu0 %v1359
          %v1578 = vpop.f32.mrf.mxu0
          %v1579 = vadd.f32 0.0, %v1578
          %v1580 = vpop.f32.mrf.mxu0
          %v1581 = vpop.f32.mrf.mxu0
          %v1582 = vadd.f32 0.0, %v1581
          %v1583 = vpop.f32.mrf.mxu0
          %1584 = vdwg.mxu0
          %v1585 = vld [vmem:[#allocation2] sm:$0xff]
          %v1586 = vld [vmem:[#allocation2 + $0x8] sm:$0xff]
          %v1587 = vld [vmem:[#allocation2 + $0x10] sm:$0xff]
          %v1588 = vld [vmem:[#allocation2 + $0x18] sm:$0xff]
          %v1589 = vld [vmem:[#allocation2 + $0x20] sm:$0xff]
          %v1590 = vld [vmem:[#allocation2 + $0x28] sm:$0xff]
          %v1591 = vld [vmem:[#allocation2 + $0x30] sm:$0xff]
          %v1592 = vld [vmem:[#allocation2 + $0x38] sm:$0xff]
          %v1593 = vld [vmem:[#allocation2 + $0x40] sm:$0xff]
          %v1594 = vld [vmem:[#allocation2 + $0x48] sm:$0xff]
          %v1595 = vld [vmem:[#allocation2 + $0x50] sm:$0xff]
          %v1596 = vld [vmem:[#allocation2 + $0x58] sm:$0xff]
          %v1597 = vld [vmem:[#allocation2 + $0x60] sm:$0xff]
          %v1598 = vld [vmem:[#allocation2 + $0x68] sm:$0xff]
          %v1599 = vld [vmem:[#allocation2 + $0x70] sm:$0xff]
          %v1600 = vld [vmem:[#allocation2 + $0x78] sm:$0xff]
          %v1601 = vld [vmem:[#allocation2 + $0x80] sm:$0xff]
          %v1602 = vld [vmem:[#allocation2 + $0x88] sm:$0xff]
          %v1603 = vld [vmem:[#allocation2 + $0x90] sm:$0xff]
          %v1604 = vld [vmem:[#allocation2 + $0x98] sm:$0xff]
          %v1605 = vld [vmem:[#allocation2 + $0xa0] sm:$0xff]
          %v1606 = vld [vmem:[#allocation2 + $0xa8] sm:$0xff]
          %v1607 = vld [vmem:[#allocation2 + $0xb0] sm:$0xff]
          %v1608 = vld [vmem:[#allocation2 + $0xb8] sm:$0xff]
          %v1609 = vld [vmem:[#allocation2 + $0xc0] sm:$0xff]
          %v1610 = vld [vmem:[#allocation2 + $0xc8] sm:$0xff]
          %v1611 = vld [vmem:[#allocation2 + $0xd0] sm:$0xff]
          %v1612 = vld [vmem:[#allocation2 + $0xd8] sm:$0xff]
          %v1613 = vld [vmem:[#allocation2 + $0xe0] sm:$0xff]
          %v1614 = vld [vmem:[#allocation2 + $0xe8] sm:$0xff]
          %v1615 = vld [vmem:[#allocation2 + $0xf0] sm:$0xff]
          %v1616 = vld [vmem:[#allocation2 + $0xf8] sm:$0xff]
          %v1617 = vld [vmem:[%s601] sm:$0xff]
          %v1618 = vld [vmem:[%s601 + $0x8] sm:$0xff]
          %v1619 = vld [vmem:[%s601 + $0x10] sm:$0xff]
          %v1620 = vld [vmem:[%s601 + $0x18] sm:$0xff]
          %v1621 = vld [vmem:[%s601 + $0x20] sm:$0xff]
          %v1622 = vld [vmem:[%s601 + $0x28] sm:$0xff]
          %v1623 = vld [vmem:[%s601 + $0x30] sm:$0xff]
          %v1624 = vld [vmem:[%s601 + $0x38] sm:$0xff]
          %v1625 = vld [vmem:[%s601 + $0x40] sm:$0xff]
          %v1626 = vld [vmem:[%s601 + $0x48] sm:$0xff]
          %v1627 = vld [vmem:[%s601 + $0x50] sm:$0xff]
          %v1628 = vld [vmem:[%s601 + $0x58] sm:$0xff]
          %v1629 = vld [vmem:[%s601 + $0x60] sm:$0xff]
          %v1630 = vld [vmem:[%s601 + $0x68] sm:$0xff]
          %v1631 = vld [vmem:[%s601 + $0x70] sm:$0xff]
          %v1632 = vld [vmem:[%s601 + $0x78] sm:$0xff]
          %v1633 = vld [vmem:[%s601 + $0x80] sm:$0xff]
          %v1634 = vld [vmem:[%s601 + $0x88] sm:$0xff]
          %v1635 = vld [vmem:[%s601 + $0x90] sm:$0xff]
          %v1636 = vld [vmem:[%s601 + $0x98] sm:$0xff]
          %v1637 = vld [vmem:[%s601 + $0xa0] sm:$0xff]
          %v1638 = vld [vmem:[%s601 + $0xa8] sm:$0xff]
          %v1639 = vld [vmem:[%s601 + $0xb0] sm:$0xff]
          %v1640 = vld [vmem:[%s601 + $0xb8] sm:$0xff]
          %v1641 = vld [vmem:[%s601 + $0xc0] sm:$0xff]
          %v1642 = vld [vmem:[%s601 + $0xc8] sm:$0xff]
          %v1643 = vld [vmem:[%s601 + $0xd0] sm:$0xff]
          %v1644 = vld [vmem:[%s601 + $0xd8] sm:$0xff]
          %v1645 = vld [vmem:[%s601 + $0xe0] sm:$0xff]
          %v1646 = vld [vmem:[%s601 + $0xe8] sm:$0xff]
          %v1647 = vld [vmem:[%s601 + $0xf0] sm:$0xff]
          %v1648 = vld [vmem:[%s601 + $0xf8] sm:$0xff]
          %1650 = vset.pattern.permute.xlu0 0
          %1651 = vperm.xlu0 %1650, %v1617
          %v1652 = vpop.permute.xlu0 %1651
          %1655 = vset.pattern.permute.xlu0 0
          %1656 = vperm.xlu0 %1655, %v1618
          %v1657 = vpop.permute.xlu0 %1656
          %1660 = vset.pattern.permute.xlu0 0
          %1661 = vperm.xlu0 %1660, %v1619
          %v1662 = vpop.permute.xlu0 %1661
          %1665 = vset.pattern.permute.xlu0 0
          %1666 = vperm.xlu0 %1665, %v1620
          %v1667 = vpop.permute.xlu0 %1666
          %1670 = vset.pattern.permute.xlu0 0
          %1671 = vperm.xlu0 %1670, %v1621
          %v1672 = vpop.permute.xlu0 %1671
          %1675 = vset.pattern.permute.xlu0 0
          %1676 = vperm.xlu0 %1675, %v1622
          %v1677 = vpop.permute.xlu0 %1676
          %1680 = vset.pattern.permute.xlu0 0
          %1681 = vperm.xlu0 %1680, %v1623
          %v1682 = vpop.permute.xlu0 %1681
          %1685 = vset.pattern.permute.xlu0 0
          %1686 = vperm.xlu0 %1685, %v1624
          %v1687 = vpop.permute.xlu0 %1686
          %1690 = vset.pattern.permute.xlu0 0
          %1691 = vperm.xlu0 %1690, %v1625
          %v1692 = vpop.permute.xlu0 %1691
          %1695 = vset.pattern.permute.xlu0 0
          %1696 = vperm.xlu0 %1695, %v1626
          %v1697 = vpop.permute.xlu0 %1696
          %1700 = vset.pattern.permute.xlu0 0
          %1701 = vperm.xlu0 %1700, %v1627
          %v1702 = vpop.permute.xlu0 %1701
          %1705 = vset.pattern.permute.xlu0 0
          %1706 = vperm.xlu0 %1705, %v1628
          %v1707 = vpop.permute.xlu0 %1706
          %1710 = vset.pattern.permute.xlu0 0
          %1711 = vperm.xlu0 %1710, %v1629
          %v1712 = vpop.permute.xlu0 %1711
          %1715 = vset.pattern.permute.xlu0 0
          %1716 = vperm.xlu0 %1715, %v1630
          %v1717 = vpop.permute.xlu0 %1716
          %1720 = vset.pattern.permute.xlu0 0
          %1721 = vperm.xlu0 %1720, %v1631
          %v1722 = vpop.permute.xlu0 %1721
          %1725 = vset.pattern.permute.xlu0 0
          %1726 = vperm.xlu0 %1725, %v1632
          %v1727 = vpop.permute.xlu0 %1726
          %1730 = vset.pattern.permute.xlu0 0
          %1731 = vperm.xlu0 %1730, %v1633
          %v1732 = vpop.permute.xlu0 %1731
          %1735 = vset.pattern.permute.xlu0 0
          %1736 = vperm.xlu0 %1735, %v1634
          %v1737 = vpop.permute.xlu0 %1736
          %1740 = vset.pattern.permute.xlu0 0
          %1741 = vperm.xlu0 %1740, %v1635
          %v1742 = vpop.permute.xlu0 %1741
          %1745 = vset.pattern.permute.xlu0 0
          %1746 = vperm.xlu0 %1745, %v1636
          %v1747 = vpop.permute.xlu0 %1746
          %1750 = vset.pattern.permute.xlu0 0
          %1751 = vperm.xlu0 %1750, %v1637
          %v1752 = vpop.permute.xlu0 %1751
          %1755 = vset.pattern.permute.xlu0 0
          %1756 = vperm.xlu0 %1755, %v1638
          %v1757 = vpop.permute.xlu0 %1756
          %1760 = vset.pattern.permute.xlu0 0
          %1761 = vperm.xlu0 %1760, %v1639
          %v1762 = vpop.permute.xlu0 %1761
          %1765 = vset.pattern.permute.xlu0 0
          %1766 = vperm.xlu0 %1765, %v1640
          %v1767 = vpop.permute.xlu0 %1766
          %1770 = vset.pattern.permute.xlu0 0
          %1771 = vperm.xlu0 %1770, %v1641
          %v1772 = vpop.permute.xlu0 %1771
          %1775 = vset.pattern.permute.xlu0 0
          %1776 = vperm.xlu0 %1775, %v1642
          %v1777 = vpop.permute.xlu0 %1776
          %1780 = vset.pattern.permute.xlu0 0
          %1781 = vperm.xlu0 %1780, %v1643
          %v1782 = vpop.permute.xlu0 %1781
          %1785 = vset.pattern.permute.xlu0 0
          %1786 = vperm.xlu0 %1785, %v1644
          %v1787 = vpop.permute.xlu0 %1786
          %1790 = vset.pattern.permute.xlu0 0
          %1791 = vperm.xlu0 %1790, %v1645
          %v1792 = vpop.permute.xlu0 %1791
          %1795 = vset.pattern.permute.xlu0 0
          %1796 = vperm.xlu0 %1795, %v1646
          %v1797 = vpop.permute.xlu0 %1796
          %1800 = vset.pattern.permute.xlu0 0
          %1801 = vperm.xlu0 %1800, %v1647
          %v1802 = vpop.permute.xlu0 %1801
          %1805 = vset.pattern.permute.xlu0 0
          %1806 = vperm.xlu0 %1805, %v1648
          %v1807 = vpop.permute.xlu0 %1806
          %v1809 = vmul.f32 %v1585, %v1652
          %v1810 = vmul.f32 %v1586, %v1657
          %v1811 = vmul.f32 %v1587, %v1662
          %v1812 = vmul.f32 %v1588, %v1667
          %v1813 = vmul.f32 %v1589, %v1672
          %v1814 = vmul.f32 %v1590, %v1677
          %v1815 = vmul.f32 %v1591, %v1682
          %v1816 = vmul.f32 %v1592, %v1687
          %v1817 = vmul.f32 %v1593, %v1692
          %v1818 = vmul.f32 %v1594, %v1697
          %v1819 = vmul.f32 %v1595, %v1702
          %v1820 = vmul.f32 %v1596, %v1707
          %v1821 = vmul.f32 %v1597, %v1712
          %v1822 = vmul.f32 %v1598, %v1717
          %v1823 = vmul.f32 %v1599, %v1722
          %v1824 = vmul.f32 %v1600, %v1727
          %v1825 = vmul.f32 %v1601, %v1732
          %v1826 = vmul.f32 %v1602, %v1737
          %v1827 = vmul.f32 %v1603, %v1742
          %v1828 = vmul.f32 %v1604, %v1747
          %v1829 = vmul.f32 %v1605, %v1752
          %v1830 = vmul.f32 %v1606, %v1757
          %v1831 = vmul.f32 %v1607, %v1762
          %v1832 = vmul.f32 %v1608, %v1767
          %v1833 = vmul.f32 %v1609, %v1772
          %v1834 = vmul.f32 %v1610, %v1777
          %v1835 = vmul.f32 %v1611, %v1782
          %v1836 = vmul.f32 %v1612, %v1787
          %v1837 = vmul.f32 %v1613, %v1792
          %v1838 = vmul.f32 %v1614, %v1797
          %v1839 = vmul.f32 %v1615, %v1802
          %v1840 = vmul.f32 %v1616, %v1807
          %v1841 = vadd.f32 %v1809, %v1459
          %v1842 = vadd.f32 %v1810, %v1462
          %v1843 = vadd.f32 %v1811, %v1467
          %v1844 = vadd.f32 %v1812, %v1470
          %v1845 = vadd.f32 %v1813, %v1475
          %v1846 = vadd.f32 %v1814, %v1478
          %v1847 = vadd.f32 %v1815, %v1483
          %v1848 = vadd.f32 %v1816, %v1486
          %v1849 = vadd.f32 %v1817, %v1491
          %v1850 = vadd.f32 %v1818, %v1494
          %v1851 = vadd.f32 %v1819, %v1499
          %v1852 = vadd.f32 %v1820, %v1502
          %v1853 = vadd.f32 %v1821, %v1507
          %v1854 = vadd.f32 %v1822, %v1510
          %v1855 = vadd.f32 %v1823, %v1515
          %v1856 = vadd.f32 %v1824, %v1518
          %v1857 = vadd.f32 %v1825, %v1523
          %v1858 = vadd.f32 %v1826, %v1526
          %v1859 = vadd.f32 %v1827, %v1531
          %v1860 = vadd.f32 %v1828, %v1534
          %v1861 = vadd.f32 %v1829, %v1539
          %v1862 = vadd.f32 %v1830, %v1542
          %v1863 = vadd.f32 %v1831, %v1547
          %v1864 = vadd.f32 %v1832, %v1550
          %v1865 = vadd.f32 %v1833, %v1555
          %v1866 = vadd.f32 %v1834, %v1558
          %v1867 = vadd.f32 %v1835, %v1563
          %v1868 = vadd.f32 %v1836, %v1566
          %v1869 = vadd.f32 %v1837, %v1571
          %v1870 = vadd.f32 %v1838, %v1574
          %v1871 = vadd.f32 %v1839, %v1579
          %v1872 = vadd.f32 %v1840, %v1582
          %v1873 = vld [vmem:[%s6] sm:$0x1]
          %v1875 = vlaneseq
          %v1876 = vshrl.u32 %v1875, 7
          %v1877 = vsub.s32 0, %v1876
          %v1878 = vrot.slane %v1873, %v1877
          %v1880 = vadd.f32 %v1841, %v1878
          %v1881 = vadd.f32 %v1842, %v1878
          %v1882 = vadd.f32 %v1843, %v1878
          %v1883 = vadd.f32 %v1844, %v1878
          %v1884 = vadd.f32 %v1845, %v1878
          %v1885 = vadd.f32 %v1846, %v1878
          %v1886 = vadd.f32 %v1847, %v1878
          %v1887 = vadd.f32 %v1848, %v1878
          %v1888 = vadd.f32 %v1849, %v1878
          %v1889 = vadd.f32 %v1850, %v1878
          %v1890 = vadd.f32 %v1851, %v1878
          %v1891 = vadd.f32 %v1852, %v1878
          %v1892 = vadd.f32 %v1853, %v1878
          %v1893 = vadd.f32 %v1854, %v1878
          %v1894 = vadd.f32 %v1855, %v1878
          %v1895 = vadd.f32 %v1856, %v1878
          %v1896 = vadd.f32 %v1857, %v1878
          %v1897 = vadd.f32 %v1858, %v1878
          %v1898 = vadd.f32 %v1859, %v1878
          %v1899 = vadd.f32 %v1860, %v1878
          %v1900 = vadd.f32 %v1861, %v1878
          %v1901 = vadd.f32 %v1862, %v1878
          %v1902 = vadd.f32 %v1863, %v1878
          %v1903 = vadd.f32 %v1864, %v1878
          %v1904 = vadd.f32 %v1865, %v1878
          %v1905 = vadd.f32 %v1866, %v1878
          %v1906 = vadd.f32 %v1867, %v1878
          %v1907 = vadd.f32 %v1868, %v1878
          %v1908 = vadd.f32 %v1869, %v1878
          %v1909 = vadd.f32 %v1870, %v1878
          %v1910 = vadd.f32 %v1871, %v1878
          %v1911 = vadd.f32 %v1872, %v1878
          %v1912 = vmax.f32 %v1880, 0.0
          %v1913 = vmax.f32 %v1881, 0.0
          %v1914 = vmax.f32 %v1882, 0.0
          %v1915 = vmax.f32 %v1883, 0.0
          %v1916 = vmax.f32 %v1884, 0.0
          %v1917 = vmax.f32 %v1885, 0.0
          %v1918 = vmax.f32 %v1886, 0.0
          %v1919 = vmax.f32 %v1887, 0.0
          %v1920 = vmax.f32 %v1888, 0.0
          %v1921 = vmax.f32 %v1889, 0.0
          %v1922 = vmax.f32 %v1890, 0.0
          %v1923 = vmax.f32 %v1891, 0.0
          %v1924 = vmax.f32 %v1892, 0.0
          %v1925 = vmax.f32 %v1893, 0.0
          %v1926 = vmax.f32 %v1894, 0.0
          %v1927 = vmax.f32 %v1895, 0.0
          %v1928 = vmax.f32 %v1896, 0.0
          %v1929 = vmax.f32 %v1897, 0.0
          %v1930 = vmax.f32 %v1898, 0.0
          %v1931 = vmax.f32 %v1899, 0.0
          %v1932 = vmax.f32 %v1900, 0.0
          %v1933 = vmax.f32 %v1901, 0.0
          %v1934 = vmax.f32 %v1902, 0.0
          %v1935 = vmax.f32 %v1903, 0.0
          %v1936 = vmax.f32 %v1904, 0.0
          %v1937 = vmax.f32 %v1905, 0.0
          %v1938 = vmax.f32 %v1906, 0.0
          %v1939 = vmax.f32 %v1907, 0.0
          %v1940 = vmax.f32 %v1908, 0.0
          %v1941 = vmax.f32 %v1909, 0.0
          %v1942 = vmax.f32 %v1910, 0.0
          %v1943 = vmax.f32 %v1911, 0.0
          %v1944 = vpack.c.bf16 %v1913, %v1912
          %v1945 = vpack.c.bf16 %v1915, %v1914
          %v1946 = vpack.c.bf16 %v1917, %v1916
          %v1947 = vpack.c.bf16 %v1919, %v1918
          %v1948 = vpack.c.bf16 %v1921, %v1920
          %v1949 = vpack.c.bf16 %v1923, %v1922
          %v1950 = vpack.c.bf16 %v1925, %v1924
          %v1951 = vpack.c.bf16 %v1927, %v1926
          %v1952 = vpack.c.bf16 %v1929, %v1928
          %v1953 = vpack.c.bf16 %v1931, %v1930
          %v1954 = vpack.c.bf16 %v1933, %v1932
          %v1955 = vpack.c.bf16 %v1935, %v1934
          %v1956 = vpack.c.bf16 %v1937, %v1936
          %v1957 = vpack.c.bf16 %v1939, %v1938
          %v1958 = vpack.c.bf16 %v1941, %v1940
          %v1959 = vpack.c.bf16 %v1943, %v1942
          %v1976 = vunpack.c.l.b16 %v1944
          %v1977 = vunpack.c.h.b16 %v1944
          %v1978 = vunpack.c.l.b16 %v1945
          %v1979 = vunpack.c.h.b16 %v1945
          %v1980 = vunpack.c.l.b16 %v1946
          %v1981 = vunpack.c.h.b16 %v1946
          %v1982 = vunpack.c.l.b16 %v1947
          %v1983 = vunpack.c.h.b16 %v1947
          %v1984 = vunpack.c.l.b16 %v1948
          %v1985 = vunpack.c.h.b16 %v1948
          %v1986 = vunpack.c.l.b16 %v1949
          %v1987 = vunpack.c.h.b16 %v1949
          %v1988 = vunpack.c.l.b16 %v1950
          %v1989 = vunpack.c.h.b16 %v1950
          %v1990 = vunpack.c.l.b16 %v1951
          %v1991 = vunpack.c.h.b16 %v1951
          %v1992 = vunpack.c.l.b16 %v1952
          %v1993 = vunpack.c.h.b16 %v1952
          %v1994 = vunpack.c.l.b16 %v1953
          %v1995 = vunpack.c.h.b16 %v1953
          %v1996 = vunpack.c.l.b16 %v1954
          %v1997 = vunpack.c.h.b16 %v1954
          %v1998 = vunpack.c.l.b16 %v1955
          %v1999 = vunpack.c.h.b16 %v1955
          %v2000 = vunpack.c.l.b16 %v1956
          %v2001 = vunpack.c.h.b16 %v1956
          %v2002 = vunpack.c.l.b16 %v1957
          %v2003 = vunpack.c.h.b16 %v1957
          %v2004 = vunpack.c.l.b16 %v1958
          %v2005 = vunpack.c.h.b16 %v1958
          %v2006 = vunpack.c.l.b16 %v1959
          %v2007 = vunpack.c.h.b16 %v1959
          %v2008 = vpack.c.b16 %v1976, %v1976
          %v2009 = vpack.c.b16 %v1977, %v1977
          %v2010 = vpack.c.b16 %v1978, %v1978
          %v2011 = vpack.c.b16 %v1979, %v1979
          %v2012 = vpack.c.b16 %v1980, %v1980
          %v2013 = vpack.c.b16 %v1981, %v1981
          %v2014 = vpack.c.b16 %v1982, %v1982
          %v2015 = vpack.c.b16 %v1983, %v1983
          %v2016 = vpack.c.b16 %v1984, %v1984
          %v2017 = vpack.c.b16 %v1985, %v1985
          %v2018 = vpack.c.b16 %v1986, %v1986
          %v2019 = vpack.c.b16 %v1987, %v1987
          %v2020 = vpack.c.b16 %v1988, %v1988
          %v2021 = vpack.c.b16 %v1989, %v1989
          %v2022 = vpack.c.b16 %v1990, %v1990
          %v2023 = vpack.c.b16 %v1991, %v1991
          %v2024 = vpack.c.b16 %v1992, %v1992
          %v2025 = vpack.c.b16 %v1993, %v1993
          %v2026 = vpack.c.b16 %v1994, %v1994
          %v2027 = vpack.c.b16 %v1995, %v1995
          %v2028 = vpack.c.b16 %v1996, %v1996
          %v2029 = vpack.c.b16 %v1997, %v1997
          %v2030 = vpack.c.b16 %v1998, %v1998
          %v2031 = vpack.c.b16 %v1999, %v1999
          %v2032 = vpack.c.b16 %v2000, %v2000
          %v2033 = vpack.c.b16 %v2001, %v2001
          %v2034 = vpack.c.b16 %v2002, %v2002
          %v2035 = vpack.c.b16 %v2003, %v2003
          %v2036 = vpack.c.b16 %v2004, %v2004
          %v2037 = vpack.c.b16 %v2005, %v2005
          %v2038 = vpack.c.b16 %v2006, %v2006
          %v2039 = vpack.c.b16 %v2007, %v2007
          %2072 = vst [vmem:[%s607] sm:$0xf] %v2008
          %2073 = vst [vmem:[%s607 + $0x4] sm:$0xf] %v2009
          %2074 = vst [vmem:[%s607 + $0x8] sm:$0xf] %v2010
          %2075 = vst [vmem:[%s607 + $0xc] sm:$0xf] %v2011
          %2076 = vst [vmem:[%s607 + $0x10] sm:$0xf] %v2012
          %2077 = vst [vmem:[%s607 + $0x14] sm:$0xf] %v2013
          %2078 = vst [vmem:[%s607 + $0x18] sm:$0xf] %v2014
          %2079 = vst [vmem:[%s607 + $0x1c] sm:$0xf] %v2015
          %2080 = vst [vmem:[%s607 + $0x20] sm:$0xf] %v2016
          %2081 = vst [vmem:[%s607 + $0x24] sm:$0xf] %v2017
          %2082 = vst [vmem:[%s607 + $0x28] sm:$0xf] %v2018
          %2083 = vst [vmem:[%s607 + $0x2c] sm:$0xf] %v2019
          %2084 = vst [vmem:[%s607 + $0x30] sm:$0xf] %v2020
          %2085 = vst [vmem:[%s607 + $0x34] sm:$0xf] %v2021
          %2086 = vst [vmem:[%s607 + $0x38] sm:$0xf] %v2022
          %2087 = vst [vmem:[%s607 + $0x3c] sm:$0xf] %v2023
          %2088 = vst [vmem:[%s607 + $0x40] sm:$0xf] %v2024
          %2089 = vst [vmem:[%s607 + $0x44] sm:$0xf] %v2025
          %2090 = vst [vmem:[%s607 + $0x48] sm:$0xf] %v2026
          %2091 = vst [vmem:[%s607 + $0x4c] sm:$0xf] %v2027
          %2092 = vst [vmem:[%s607 + $0x50] sm:$0xf] %v2028
          %2093 = vst [vmem:[%s607 + $0x54] sm:$0xf] %v2029
          %2094 = vst [vmem:[%s607 + $0x58] sm:$0xf] %v2030
          %2095 = vst [vmem:[%s607 + $0x5c] sm:$0xf] %v2031
          %2096 = vst [vmem:[%s607 + $0x60] sm:$0xf] %v2032
          %2097 = vst [vmem:[%s607 + $0x64] sm:$0xf] %v2033
          %2098 = vst [vmem:[%s607 + $0x68] sm:$0xf] %v2034
          %2099 = vst [vmem:[%s607 + $0x6c] sm:$0xf] %v2035
          %2100 = vst [vmem:[%s607 + $0x70] sm:$0xf] %v2036
          %2101 = vst [vmem:[%s607 + $0x74] sm:$0xf] %v2037
          %2102 = vst [vmem:[%s607 + $0x78] sm:$0xf] %v2038
          %2103 = vst [vmem:[%s607 + $0x7c] sm:$0xf] %v2039
        $region94: #{sage_for_hetero_forward.7} parent=77 // pred_fallthru
          _
        %s2104 = smul.u32 32, %s33
        %p2105 = scmp.lt.s32.totalorder %s2104, 63
        %s2106 = scalar_select %p2105, %s2104, 63
        %s2107 = smul.addr %s2106, 4
        %s2108 = scalar_lea.vmem %s8, %s2107
        // Predicated region
        $region95: #{sage_for_hetero_forward.7} parent=77 // pred_check
          %p2109 = pneg %p243
        $region96: #{sage_for_hetero_forward.7} parent=77 // pred_check_branch
          %2111 = sbr.rel (%p2109) target = $region98
        $region97: #{sage_for_hetero_forward.7} parent=77 // pred_region
          %s2112 = smul.u32 32, %s33
        $region98: #{sage_for_hetero_forward.7} parent=77 // pred_fallthru
          _
      $region78: #{sage_for_hetero_forward.7} parent=5 // pred_fallthru
        _
      %p2113 = scmp.le.s32.totalorder 2, %s24
      // Predicated region
      $region99: #{sage_for_hetero_forward.7} parent=5 // pred_check
        %p2114 = pneg %p2113
      $region100: #{sage_for_hetero_forward.7} parent=5 // pred_check_branch
        %2116 = sbr.rel (%p2114) target = $region102
      $region101: #{sage_for_hetero_forward.7} parent=5 // pred_region
        %s2117 = ssub.s32 %s24, 2
        // Predicated region
        $region103: #{sage_for_hetero_forward.7} parent=101 // pred_check
          %p2118 = pneg %p249
        $region104: #{sage_for_hetero_forward.7} parent=101 // pred_check_branch
          %2120 = sbr.rel (%p2118) target = $region106
        $region105: #{sage_for_hetero_forward.7} parent=101 // pred_region
          %s2121 = smul.u32 32, %s35
          %p2122 = scmp.lt.s32.totalorder %s2121, 63
          %s2123 = scalar_select %p2122, %s2121, 63
          %s2124 = smul.addr %s2123, 4
          %s2125 = scalar_lea.vmem %s8, %s2124
        $region106: #{sage_for_hetero_forward.7} parent=101 // pred_fallthru
          _
      $region102: #{sage_for_hetero_forward.7} parent=5 // pred_fallthru
        _
    $region6: #{sage_for_hetero_forward.7} parent=1 // loop_footer
      %s28 = sadd.s32 1, %s24
    $region7: #{sage_for_hetero_forward.7} parent=1 // loop_footer_branch
      %23 = sbr.rel target = $region3
    $region8: #{sage_for_hetero_forward.7} parent=1 // loop_exit
      _

</llo_original>
